<compile_context>
chip_gen: v6e
topology: v6e:2x2x1
jax: 0.10.0
libtpu: 0.0.40
codegen_flags: <defaults>
</compile_context>

<pallas_src>
import contextlib

import jax
import jax.numpy as jnp
from jax.experimental import pallas as pl
from jax.experimental.pallas import tpu as pltpu


# ----------------------------------------------------------------------------- #
# Cache context (host-side Python, mirrors the torch reference exactly)
# ----------------------------------------------------------------------------- #
class CacheContext:
    def __init__(self):
        self.buffers = {}

    def get_buffer(self, name):
        return self.buffers.get(name, None)

    def set_buffer(self, name, buffer):
        self.buffers[name] = buffer


_current_cache_context = None


@contextlib.contextmanager
def cache_context(ctx):
    global _current_cache_context
    old = _current_cache_context
    _current_cache_context = ctx
    try:
        yield
    finally:
        _current_cache_context = old


def get_current_cache_context():
    return _current_cache_context


def get_buffer(name):
    ctx = get_current_cache_context()
    assert ctx is not None, "cache_context must be set before"
    return ctx.get_buffer(name)


def set_buffer(name, buffer):
    ctx = get_current_cache_context()
    assert ctx is not None, "cache_context must be set before"
    ctx.set_buffer(name, buffer)


# ----------------------------------------------------------------------------- #
# Fused layer-stack kernel (grid over layers, activations resident in VMEM)
# ----------------------------------------------------------------------------- #
def _sana_layers_kernel(x_ref, enc_ref,
                        wqkv_ref, wo_ref, wcq_ref, wckv_ref, wco_ref,
                        w1_ref, w2_ref,
                        o_ref, res_ref):
    """Runs layer `l = program_id(0)` of a SANA-style block stack.

    o_ref is the resident accumulator (constant block index across the layer axis):
    initialized from x_ref at l==0, updated every layer, written back to HBM once.
    res_ref (= out - in) is produced only at the last layer.
    """
    l = pl.program_id(0)
    n_layers = pl.num_programs(0)

    @pl.when(l == 0)
    def _():
        o_ref[...] = x_ref[...]

    B, S, D = o_ref.shape
    Se = enc_ref.shape[1]

    x = o_ref[...].astype(jnp.float32)          # (B, S, D)
    enc = enc_ref[...].astype(jnp.float32)      # (B, Se, D)

    def ln(z):
        mu = jnp.mean(z, axis=-1, keepdims=True)
        var = jnp.mean(jnp.square(z - mu), axis=-1, keepdims=True)
        return (z - mu) * jax.lax.rsqrt(var + 1e-6)

    def softmax(s):
        s = s - jnp.max(s, axis=-1, keepdims=True)
        p = jnp.exp(s)
        return p * pl.reciprocal(jnp.sum(p, axis=-1, keepdims=True), approx=True)

    def mm(a2d, w_ref):  # (M, K) @ (K, N): bf16 operands on the MXU, f32 accumulation
        return jnp.dot(a2d.astype(jnp.bfloat16), w_ref[...],
                       preferred_element_type=jnp.float32)

    def attend(q, k, v):  # (B, Sq, D), (B, Sk, D), (B, Sk, D) -> (B, Sq, D)
        s = jnp.einsum("bqd,bkd->bqk",
                       q.astype(jnp.bfloat16), k.astype(jnp.bfloat16),
                       preferred_element_type=jnp.float32) * inv_sqrt_d
        p = softmax(s)
        return jnp.einsum("bqk,bkd->bqd",
                          p.astype(jnp.bfloat16), v.astype(jnp.bfloat16),
                          preferred_element_type=jnp.float32)

    inv_sqrt_d = jax.lax.rsqrt(jnp.float32(D))

    # --- self-attention (single head); batch folded into M for the projections ---
    h = ln(x).reshape(B * S, D)
    qkv = mm(h, wqkv_ref).reshape(B, S, 3 * D)
    a = attend(qkv[..., :D], qkv[..., D:2 * D], qkv[..., 2 * D:])
    x = x + mm(a.reshape(B * S, D), wo_ref).reshape(B, S, D)

    # --- cross-attention with the encoder hidden states ---
    h = ln(x).reshape(B * S, D)
    q = mm(h, wcq_ref).reshape(B, S, D)
    kv = mm(enc.reshape(B * Se, D), wckv_ref).reshape(B, Se, 2 * D)
    a = attend(q, kv[..., :D], kv[..., D:])
    x = x + mm(a.reshape(B * S, D), wco_ref).reshape(B, S, D)

    # --- GELU MLP ---
    h = ln(x).reshape(B * S, D)
    f = jax.nn.gelu(mm(h, w1_ref))
    x = x + mm(f, w2_ref).reshape(B, S, D)

    o_ref[...] = x.astype(o_ref.dtype)

    @pl.when(l == n_layers - 1)
    def _():
        res_ref[...] = (x - x_ref[...].astype(jnp.float32)).astype(res_ref.dtype)


def _vmem_limit_bytes(B, S, Se, D, H):
    """Rough VMEM budget with headroom (never below the 32 MiB scoped default)."""
    act_f32 = 4 * (4 * B * S * D + B * Se * D + B * S * max(S, Se) + B * S * H)
    w_bf16 = 2 * 2 * (3 * D * D + 4 * D * D + 2 * D * D + 2 * D * H)  # double-buffered
    need = 2 * act_f32 + w_bf16 + (4 << 20)
    return max(need, 32 * 1024 * 1024)


def run_layers(hidden_states, encoder_hidden_states, stacked, start, end):
    """Run layers [start, end) in ONE pallas_call. Returns (out, out - in)."""
    if end <= start:
        return hidden_states, jnp.zeros_like(hidden_states)

    B, S, D = hidden_states.shape
    _, Se, _ = encoder_hidden_states.shape
    H = stacked["w1"].shape[-1]
    L = end - start

    def wspec(din, dout):
        return pl.BlockSpec((None, din, dout), lambda l: (l, 0, 0))

    def full_spec(s1, s2):
        return pl.BlockSpec((B, s1, s2), lambda l: (0, 0, 0))

    out, residual = pl.pallas_call(
        _sana_layers_kernel,
        grid=(L,),
        in_specs=[
            full_spec(S, D),            # hidden_states (resident across layers)
            full_spec(Se, D),           # encoder hidden states (resident)
            wspec(D, 3 * D),            # wqkv
            wspec(D, D),                # wo
            wspec(D, D),                # wcq
            wspec(D, 2 * D),            # wckv
            wspec(D, D),                # wco
            wspec(D, H),                # w1
            wspec(H, D),                # w2
        ],
        out_specs=(
            full_spec(S, D),            # output (resident accumulator)
            full_spec(S, D),            # residual (out - in), written at last layer
        ),
        out_shape=(
            jax.ShapeDtypeStruct((B, S, D), hidden_states.dtype),
            jax.ShapeDtypeStruct((B, S, D), hidden_states.dtype),
        ),
        compiler_params=pltpu.CompilerParams(
            dimension_semantics=("arbitrary",),
            vmem_limit_bytes=_vmem_limit_bytes(B, S, Se, D, H),
        ),
        # TODO(synk): for v7x (2 TCs) add a "parallel" query-tile / batch grid axis;
        # at these shapes batch is folded into the matmul M dimension instead.
    )(hidden_states, encoder_hidden_states,
      stacked["wqkv"][start:end], stacked["wo"][start:end],
      stacked["wcq"][start:end], stacked["wckv"][start:end],
      stacked["wco"][start:end],
      stacked["w1"][start:end], stacked["w2"][start:end])
    return out, residual


# ----------------------------------------------------------------------------- #
# Gridded elementwise / reduction kernels for the cache bookkeeping
# ----------------------------------------------------------------------------- #
def _row_tile(rows, max_tile=512):
    if rows <= max_tile:
        return rows
    t = max_tile - (max_tile % 8)
    while t >= 8:
        if rows % t == 0:
            return t
        t -= 8
    return rows


def _add_kernel(a_ref, b_ref, o_ref):
    o_ref[...] = a_ref[...] + b_ref[...]


def pallas_add(a, b):
    shape = a.shape
    a2 = a.reshape(-1, shape[-1])
    b2 = b.reshape(-1, shape[-1])
    R, D = a2.shape
    tile = _row_tile(R)
    out = pl.pallas_call(
        _add_kernel,
        grid=(R // tile,),
        in_specs=[pl.BlockSpec((tile, D), lambda i: (i, 0)),
                  pl.BlockSpec((tile, D), lambda i: (i, 0))],
        out_specs=pl.BlockSpec((tile, D), lambda i: (i, 0)),
        out_shape=jax.ShapeDtypeStruct((R, D), a.dtype),
        compiler_params=pltpu.CompilerParams(dimension_semantics=("parallel",)),
    )(a2, b2)
    return out.reshape(shape)


def _abs_sums_kernel(prev_ref, cur_ref, sums_ref):
    i = pl.program_id(0)

    @pl.when(i == 0)
    def _():
        sums_ref[0] = jnp.float32(0.0)
        sums_ref[1] = jnp.float32(0.0)

    prev = prev_ref[...].astype(jnp.float32)
    cur = cur_ref[...].astype(jnp.float32)
    sums_ref[0] = sums_ref[0] + jnp.sum(jnp.abs(prev - cur))
    sums_ref[1] = sums_ref[1] + jnp.sum(jnp.abs(prev))


def pallas_similarity_sums(prev, cur):
    """Returns [sum|prev - cur|, sum|prev|] as a (2,) f32 array (SMEM accumulator)."""
    p2 = prev.reshape(-1, prev.shape[-1])
    c2 = cur.reshape(-1, cur.shape[-1])
    R, D = p2.shape
    tile = _row_tile(R)
    return pl.pallas_call(
        _abs_sums_kernel,
        grid=(R // tile,),
        in_specs=[pl.BlockSpec((tile, D), lambda i: (i, 0)),
                  pl.BlockSpec((tile, D), lambda i: (i, 0))],
        out_specs=pl.BlockSpec((2,), lambda i: (0,),
                               memory_space=pltpu.MemorySpace.SMEM),
        out_shape=jax.ShapeDtypeStruct((2,), jnp.float32),
        compiler_params=pltpu.CompilerParams(dimension_semantics=("arbitrary",)),
    )(p2, c2)


# ----------------------------------------------------------------------------- #
# Cache helpers (semantics identical to the torch reference)
# ----------------------------------------------------------------------------- #
def are_two_tensors_similar(t1, t2, *, threshold, parallelized=False):
    # Single host readback per forward (equivalent of torch's .item()).
    sums = jax.device_get(pallas_similarity_sums(t1, t2))
    n = float(t1.size)
    mean_diff = float(sums[0]) / n
    mean_t1 = float(sums[1]) / n
    diff = mean_diff / mean_t1 if mean_t1 > 0.0 else float("inf")
    return (diff < threshold, diff)


def get_can_use_cache(first_hidden_states_residual, threshold, parallelized=False,
                      mode="multi"):
    if mode == "multi":
        buffer_name = "first_multi_hidden_states_residual"
    elif mode == "single":
        buffer_name = "first_single_hidden_states_residual"
    else:
        raise ValueError(f"Unknown mode {mode}; expected 'multi' or 'single'")
    prev_res = get_buffer(buffer_name)
    if prev_res is None:
        return (False, threshold)
    return are_two_tensors_similar(prev_res, first_hidden_states_residual,
                                   threshold=threshold, parallelized=parallelized)


def apply_prev_hidden_states_residual(hidden_states, encoder_hidden_states=None,
                                      mode="multi"):
    if mode == "multi":
        hidden_states_residual = get_buffer("multi_hidden_states_residual")
        assert hidden_states_residual is not None, \
            "multi_hidden_states_residual must be set before"
        hidden_states = pallas_add(hidden_states, hidden_states_residual)
        if encoder_hidden_states is not None:
            enc_res = get_buffer("multi_encoder_hidden_states_residual")
            assert enc_res is not None, \
                "multi_encoder_hidden_states_residual must be set before"
            encoder_hidden_states = pallas_add(encoder_hidden_states, enc_res)
        return (hidden_states, encoder_hidden_states)
    elif mode == "single":
        single_residual = get_buffer("single_hidden_states_residual")
        assert single_residual is not None, \
            "single_hidden_states_residual must be set before"
        return pallas_add(hidden_states, single_residual)
    else:
        raise ValueError(f"Unknown mode {mode}; expected 'multi' or 'single'")


# ----------------------------------------------------------------------------- #
# Module
# ----------------------------------------------------------------------------- #
class SanaCachedTransformerBlocks:
    def __init__(self, *, params, num_layers, residual_diff_threshold, verbose=False):
        self.params = params                   # stacked per-layer weights (L, ...)
        self.num_layers = num_layers
        self.residual_diff_threshold = residual_diff_threshold
        self.verbose = verbose
        self._is_parallelized = False

    def forward(self, hidden_states, attention_mask, encoder_hidden_states,
                encoder_attention_mask=None, timestep=None,
                post_patch_height=None, post_patch_width=None):
        # TODO(synk): attention_mask / encoder_attention_mask and adaLN timestep
        # modulation of the real SANA block are not applied (passed as None here).
        num_layers = self.num_layers
        batch_size = hidden_states.shape[0]

        if self.residual_diff_threshold <= 0.0 or batch_size > 2:
            if batch_size > 2:
                print("Batch size > 2 (for SANA CFG) currently not supported")
            out, _ = run_layers(hidden_states, encoder_hidden_states,
                                self.params, 0, num_layers)
            return out

        # forward_layer_at(0, ...): run only layer 0; residual (out - in) comes
        # straight out of the kernel epilogue (no extra subtraction pass).
        hidden_states, first_hidden_states_residual = run_layers(
            hidden_states, encoder_hidden_states, self.params, 0, 1)

        can_use_cache, _diff = get_can_use_cache(
            first_hidden_states_residual,
            threshold=self.residual_diff_threshold,
            parallelized=self._is_parallelized,
        )

        if can_use_cache:
            del first_hidden_states_residual
            if self.verbose:
                print("Cache hit!!!")
            hidden_states, _ = apply_prev_hidden_states_residual(hidden_states, None)
        else:
            if self.verbose:
                print("Cache miss!!!")
            set_buffer("first_hidden_states_residual", first_hidden_states_residual)
            del first_hidden_states_residual
            hidden_states, hidden_states_residual = \
                self.call_remaining_transformer_blocks(
                    hidden_states=hidden_states,
                    attention_mask=attention_mask,
                    encoder_hidden_states=encoder_hidden_states,
                    encoder_attention_mask=encoder_attention_mask,
                    timestep=timestep,
                    post_patch_height=post_patch_height,
                    post_patch_width=post_patch_width,
                )
            set_buffer("hidden_states_residual", hidden_states_residual)
        return hidden_states

    def call_remaining_transformer_blocks(self, hidden_states, attention_mask,
                                          encoder_hidden_states,
                                          encoder_attention_mask=None, timestep=None,
                                          post_patch_height=None,
                                          post_patch_width=None):
        # skip_first_layer=True: run layers 1..L-1; residual produced in-kernel.
        hidden_states, hidden_states_residual = run_layers(
            hidden_states, encoder_hidden_states, self.params, 1, self.num_layers)
        return (hidden_states, hidden_states_residual)


# ----------------------------------------------------------------------------- #
# Deterministic synthetic parameters (stacked over layers, bf16 for the MXU)
# ----------------------------------------------------------------------------- #
def init_params(key, num_layers, D, H):
    def mk(k, shape):
        return (0.02 * jax.random.normal(k, shape, jnp.float32)).astype(jnp.bfloat16)

    ks = jax.random.split(key, 7)
    return {
        "wqkv": mk(ks[0], (num_layers, D, 3 * D)),   # fused Q/K/V projection
        "wo":   mk(ks[1], (num_layers, D, D)),
        "wcq":  mk(ks[2], (num_layers, D, D)),
        "wckv": mk(ks[3], (num_layers, D, 2 * D)),   # fused cross K/V projection
        "wco":  mk(ks[4], (num_layers, D, D)),
        "w1":   mk(ks[5], (num_layers, D, H)),
        "w2":   mk(ks[6], (num_layers, H, D)),
    }


# ----------------------------------------------------------------------------- #
# Main
# ----------------------------------------------------------------------------- #
if __name__ == "__main__":
    B, S, Se, D, H, L = 2, 64, 32, 128, 256, 3

    key = jax.random.PRNGKey(0)
    k_hs, k_enc, k_w = jax.random.split(key, 3)
    hidden_states = jax.random.normal(k_hs, (B, S, D), jnp.float32)
    encoder_hidden_states = jax.random.normal(k_enc, (B, Se, D), jnp.float32)

    params = init_params(k_w, L, D, H)
    model = SanaCachedTransformerBlocks(params=params, num_layers=L,
                                        residual_diff_threshold=0.12,
                                        verbose=False)

    ctx = CacheContext()
    with cache_context(ctx):
        # First pass: cache miss -> layer 0, similarity check, remaining layers.
        out1 = model.forward(hidden_states, None, encoder_hidden_states)
        jax.block_until_ready(out1)

        # Simulate the enclosing pipeline promoting the stored residuals to the
        # "multi" buffer names (as the surrounding SANA model does), so the second
        # pass exercises the cache-hit path (similarity + residual-add kernels).
        ctx.set_buffer("first_multi_hidden_states_residual",
                       ctx.get_buffer("first_hidden_states_residual"))
        ctx.set_buffer("multi_hidden_states_residual",
                       ctx.get_buffer("hidden_states_residual"))

        out2 = model.forward(hidden_states, None, encoder_hidden_states)
        jax.block_until_ready(out2)

        # Threshold <= 0 path: run every layer unconditionally.
        model_nocache = SanaCachedTransformerBlocks(params=params, num_layers=L,
                                                    residual_diff_threshold=0.0)
        out3 = model_nocache.forward(hidden_states, None, encoder_hidden_states)
        jax.block_until_ready(out3)

    print("KERNEL_OK")
</pallas_src>

<mosaic_0001>
module attributes {stable_mosaic.version = 11 : i64} {
  func.func @_sana_layers_kernel(%arg0: i32, %arg1: memref<2x64x128xf32, #tpu.memory_space<vmem>>, %arg2: memref<2x32x128xf32, #tpu.memory_space<vmem>>, %arg3: memref<1x128x384xbf16, #tpu.memory_space<vmem>>, %arg4: memref<1x128x128xbf16, #tpu.memory_space<vmem>>, %arg5: memref<1x128x128xbf16, #tpu.memory_space<vmem>>, %arg6: memref<1x128x256xbf16, #tpu.memory_space<vmem>>, %arg7: memref<1x128x128xbf16, #tpu.memory_space<vmem>>, %arg8: memref<1x128x256xbf16, #tpu.memory_space<vmem>>, %arg9: memref<1x256x128xbf16, #tpu.memory_space<vmem>>, %arg10: memref<2x64x128xf32, #tpu.memory_space<vmem>>, %arg11: memref<2x64x128xf32, #tpu.memory_space<vmem>>) attributes {dimension_semantics = [#tpu.dimension_semantics<arbitrary>], iteration_bounds = array<i64: 1>, scalar_prefetch = 0 : i64, scratch_operands = 0 : i64, tpu.core_type = #tpu.core_type<tc>, window_params = [{pipeline_mode = #tpu.pipeline_mode<synchronous>, transform_indices = @transform_0, window_bounds = array<i64: 2, 64, 128>}, {pipeline_mode = #tpu.pipeline_mode<synchronous>, transform_indices = @transform_1, window_bounds = array<i64: 2, 32, 128>}, {transform_indices = @transform_2, window_bounds = array<i64: 1, 128, 384>}, {transform_indices = @transform_3, window_bounds = array<i64: 1, 128, 128>}, {transform_indices = @transform_4, window_bounds = array<i64: 1, 128, 128>}, {transform_indices = @transform_5, window_bounds = array<i64: 1, 128, 256>}, {transform_indices = @transform_6, window_bounds = array<i64: 1, 128, 128>}, {transform_indices = @transform_7, window_bounds = array<i64: 1, 128, 256>}, {transform_indices = @transform_8, window_bounds = array<i64: 1, 256, 128>}, {pipeline_mode = #tpu.pipeline_mode<synchronous>, transform_indices = @transform_9, window_bounds = array<i64: 2, 64, 128>}, {pipeline_mode = #tpu.pipeline_mode<synchronous>, transform_indices = @transform_10, window_bounds = array<i64: 2, 64, 128>}]} {
    %c0_i32 = arith.constant 0 : i32
    %0 = arith.cmpi eq, %arg0, %c0_i32 : i32
    %1 = arith.extui %0 : i1 to i32
    %c0_i32_0 = arith.constant 0 : i32
    %2 = arith.cmpi ne, %1, %c0_i32_0 : i32
    scf.if %2 {
      %c0_66 = arith.constant 0 : index
      %c0_67 = arith.constant 0 : index
      %c0_68 = arith.constant 0 : index
      %161 = vector.load %arg1[%c0_66, %c0_67, %c0_68] : memref<2x64x128xf32, #tpu.memory_space<vmem>>, vector<2x64x128xf32>
      %c0_69 = arith.constant 0 : index
      %c0_70 = arith.constant 0 : index
      %c0_71 = arith.constant 0 : index
      %162 = vector.load %arg10[%c0_69, %c0_70, %c0_71] : memref<2x64x128xf32, #tpu.memory_space<vmem>>, vector<2x64x128xf32>
      tpu.vector_store %arg10[%c0_69, %c0_70, %c0_71], %161 {strides = array<i32>} : memref<2x64x128xf32, #tpu.memory_space<vmem>>, vector<2x64x128xf32>,
    } else {
    }
    %c0 = arith.constant 0 : index
    %c0_1 = arith.constant 0 : index
    %c0_2 = arith.constant 0 : index
    %3 = vector.load %arg10[%c0, %c0_1, %c0_2] : memref<2x64x128xf32, #tpu.memory_space<vmem>>, vector<2x64x128xf32>
    %c0_3 = arith.constant 0 : index
    %c0_4 = arith.constant 0 : index
    %c0_5 = arith.constant 0 : index
    %4 = vector.load %arg2[%c0_3, %c0_4, %c0_5] : memref<2x32x128xf32, #tpu.memory_space<vmem>>, vector<2x32x128xf32>
    %cst = arith.constant 1.280000e+02 : f32
    %5 = math.rsqrt %cst : f32
    %cst_6 = arith.constant dense<0.000000e+00> : vector<2x64xf32>
    %6 = vector.multi_reduction <add>, %3, %cst_6 [2] : vector<2x64x128xf32> to vector<2x64xf32>
    %7 = vector.shape_cast %6 : vector<2x64xf32> to vector<2x64x1xf32>
    %cst_7 = arith.constant 1.280000e+02 : f32
    %8 = vector.broadcast %cst_7 : f32 to vector<2x64x1xf32>
    %9 = arith.divf %7, %8 : vector<2x64x1xf32>
    %10 = vector.broadcast %9 : vector<2x64x1xf32> to vector<2x64x128xf32>
    %11 = arith.subf %3, %10 : vector<2x64x128xf32>
    %12 = arith.mulf %11, %11 : vector<2x64x128xf32>
    %cst_8 = arith.constant dense<0.000000e+00> : vector<2x64xf32>
    %13 = vector.multi_reduction <add>, %12, %cst_8 [2] : vector<2x64x128xf32> to vector<2x64xf32>
    %14 = vector.shape_cast %13 : vector<2x64xf32> to vector<2x64x1xf32>
    %cst_9 = arith.constant 1.280000e+02 : f32
    %15 = vector.broadcast %cst_9 : f32 to vector<2x64x1xf32>
    %16 = arith.divf %14, %15 : vector<2x64x1xf32>
    %17 = vector.broadcast %9 : vector<2x64x1xf32> to vector<2x64x128xf32>
    %18 = arith.subf %3, %17 : vector<2x64x128xf32>
    %cst_10 = arith.constant 9.99999997E-7 : f32
    %19 = vector.broadcast %cst_10 : f32 to vector<2x64x1xf32>
    %20 = arith.addf %16, %19 : vector<2x64x1xf32>
    %21 = math.rsqrt %20 : vector<2x64x1xf32>
    %22 = vector.broadcast %21 : vector<2x64x1xf32> to vector<2x64x128xf32>
    %23 = arith.mulf %18, %22 : vector<2x64x128xf32>
    %24 = vector.shape_cast %23 : vector<2x64x128xf32> to vector<128x128xf32>
    %25 = arith.truncf %24 : vector<128x128xf32> to vector<128x128xbf16>
    %c0_11 = arith.constant 0 : index
    %c0_12 = arith.constant 0 : index
    %c0_13 = arith.constant 0 : index
    %26 = vector.load %arg3[%c0_11, %c0_12, %c0_13] : memref<1x128x384xbf16, #tpu.memory_space<vmem>>, vector<1x128x384xbf16>
    %27 = vector.shape_cast %26 : vector<1x128x384xbf16> to vector<128x384xbf16>
    %cst_14 = arith.constant dense<0.000000e+00> : vector<128x384xf32>
    %28 = tpu.matmul %25, %27, %cst_14 {dimension_numbers = #tpu.dot_dimension_numbers<[1], [0], [0], [1], [0, 0, 1, 1], [], []>} : vector<128x128xbf16>, vector<128x384xbf16>, vector<128x384xf32> -> vector<128x384xf32>
    %29 = vector.shape_cast %28 : vector<128x384xf32> to vector<2x64x384xf32>
    %30 = vector.extract_strided_slice %29 {offsets = [0, 0, 0], sizes = [2, 64, 128], strides = [1, 1, 1]} : vector<2x64x384xf32> to vector<2x64x128xf32>
    %31 = vector.extract_strided_slice %29 {offsets = [0, 0, 128], sizes = [2, 64, 128], strides = [1, 1, 1]} : vector<2x64x384xf32> to vector<2x64x128xf32>
    %32 = vector.extract_strided_slice %29 {offsets = [0, 0, 256], sizes = [2, 64, 128], strides = [1, 1, 1]} : vector<2x64x384xf32> to vector<2x64x128xf32>
    %33 = arith.truncf %30 : vector<2x64x128xf32> to vector<2x64x128xbf16>
    %34 = arith.truncf %31 : vector<2x64x128xf32> to vector<2x64x128xbf16>
    "tpu.trace_start"() <{level = 10 : i32, message = "bqd,bkd->bqk"}> : () -> ()
    %cst_15 = arith.constant dense<0.000000e+00> : vector<2x64x64xf32>
    %35 = tpu.matmul %33, %34, %cst_15 {dimension_numbers = #tpu.dot_dimension_numbers<[2], [2], [1], [1], [0, 0, 0, 1, 1, 1], [0], [0]>} : vector<2x64x128xbf16>, vector<2x64x128xbf16>, vector<2x64x64xf32> -> vector<2x64x64xf32>
    "tpu.trace_stop"() : () -> ()
    %36 = vector.broadcast %5 : f32 to vector<2x64x64xf32>
    %37 = arith.mulf %35, %36 : vector<2x64x64xf32>
    %cst_16 = arith.constant dense<0xFF800000> : vector<2x64xf32>
    %38 = vector.multi_reduction <maximumf>, %37, %cst_16 [2] : vector<2x64x64xf32> to vector<2x64xf32>
    %39 = vector.shape_cast %38 : vector<2x64xf32> to vector<2x64x1xf32>
    %40 = vector.broadcast %39 : vector<2x64x1xf32> to vector<2x64x64xf32>
    %41 = arith.subf %37, %40 : vector<2x64x64xf32>
    %42 = math.exp %41 : vector<2x64x64xf32>
    %cst_17 = arith.constant dense<0.000000e+00> : vector<2x64xf32>
    %43 = vector.multi_reduction <add>, %42, %cst_17 [2] : vector<2x64x64xf32> to vector<2x64xf32>
    %44 = vector.shape_cast %43 : vector<2x64xf32> to vector<2x64x1xf32>
    %45 = tpu.reciprocal %44 {approx = true} : vector<2x64x1xf32> -> vector<2x64x1xf32>
    %46 = vector.broadcast %45 : vector<2x64x1xf32> to vector<2x64x64xf32>
    %47 = arith.mulf %42, %46 : vector<2x64x64xf32>
    %48 = arith.truncf %47 : vector<2x64x64xf32> to vector<2x64x64xbf16>
    %49 = arith.truncf %32 : vector<2x64x128xf32> to vector<2x64x128xbf16>
    "tpu.trace_start"() <{level = 10 : i32, message = "bqk,bkd->bqd"}> : () -> ()
    %cst_18 = arith.constant dense<0.000000e+00> : vector<2x64x128xf32>
    %50 = tpu.matmul %48, %49, %cst_18 {dimension_numbers = #tpu.dot_dimension_numbers<[2], [1], [1], [2], [0, 0, 0, 1, 1, 2], [0], [0]>} : vector<2x64x64xbf16>, vector<2x64x128xbf16>, vector<2x64x128xf32> -> vector<2x64x128xf32>
    "tpu.trace_stop"() : () -> ()
    %51 = vector.shape_cast %50 : vector<2x64x128xf32> to vector<128x128xf32>
    %52 = arith.truncf %51 : vector<128x128xf32> to vector<128x128xbf16>
    %c0_19 = arith.constant 0 : index
    %c0_20 = arith.constant 0 : index
    %c0_21 = arith.constant 0 : index
    %53 = vector.load %arg4[%c0_19, %c0_20, %c0_21] : memref<1x128x128xbf16, #tpu.memory_space<vmem>>, vector<1x128x128xbf16>
    %54 = vector.shape_cast %53 : vector<1x128x128xbf16> to vector<128x128xbf16>
    %cst_22 = arith.constant dense<0.000000e+00> : vector<128x128xf32>
    %55 = tpu.matmul %52, %54, %cst_22 {dimension_numbers = #tpu.dot_dimension_numbers<[1], [0], [0], [1], [0, 0, 1, 1], [], []>} : vector<128x128xbf16>, vector<128x128xbf16>, vector<128x128xf32> -> vector<128x128xf32>
    %56 = vector.shape_cast %55 : vector<128x128xf32> to vector<2x64x128xf32>
    %57 = arith.addf %3, %56 : vector<2x64x128xf32>
    %cst_23 = arith.constant dense<0.000000e+00> : vector<2x64xf32>
    %58 = vector.multi_reduction <add>, %57, %cst_23 [2] : vector<2x64x128xf32> to vector<2x64xf32>
    %59 = vector.shape_cast %58 : vector<2x64xf32> to vector<2x64x1xf32>
    %cst_24 = arith.constant 1.280000e+02 : f32
    %60 = vector.broadcast %cst_24 : f32 to vector<2x64x1xf32>
    %61 = arith.divf %59, %60 : vector<2x64x1xf32>
    %62 = vector.broadcast %61 : vector<2x64x1xf32> to vector<2x64x128xf32>
    %63 = arith.subf %57, %62 : vector<2x64x128xf32>
    %64 = arith.mulf %63, %63 : vector<2x64x128xf32>
    %cst_25 = arith.constant dense<0.000000e+00> : vector<2x64xf32>
    %65 = vector.multi_reduction <add>, %64, %cst_25 [2] : vector<2x64x128xf32> to vector<2x64xf32>
    %66 = vector.shape_cast %65 : vector<2x64xf32> to vector<2x64x1xf32>
    %cst_26 = arith.constant 1.280000e+02 : f32
    %67 = vector.broadcast %cst_26 : f32 to vector<2x64x1xf32>
    %68 = arith.divf %66, %67 : vector<2x64x1xf32>
    %69 = vector.broadcast %61 : vector<2x64x1xf32> to vector<2x64x128xf32>
    %70 = arith.subf %57, %69 : vector<2x64x128xf32>
    %cst_27 = arith.constant 9.99999997E-7 : f32
    %71 = vector.broadcast %cst_27 : f32 to vector<2x64x1xf32>
    %72 = arith.addf %68, %71 : vector<2x64x1xf32>
    %73 = math.rsqrt %72 : vector<2x64x1xf32>
    %74 = vector.broadcast %73 : vector<2x64x1xf32> to vector<2x64x128xf32>
    %75 = arith.mulf %70, %74 : vector<2x64x128xf32>
    %76 = vector.shape_cast %75 : vector<2x64x128xf32> to vector<128x128xf32>
    %77 = arith.truncf %76 : vector<128x128xf32> to vector<128x128xbf16>
    %c0_28 = arith.constant 0 : index
    %c0_29 = arith.constant 0 : index
    %c0_30 = arith.constant 0 : index
    %78 = vector.load %arg5[%c0_28, %c0_29, %c0_30] : memref<1x128x128xbf16, #tpu.memory_space<vmem>>, vector<1x128x128xbf16>
    %79 = vector.shape_cast %78 : vector<1x128x128xbf16> to vector<128x128xbf16>
    %cst_31 = arith.constant dense<0.000000e+00> : vector<128x128xf32>
    %80 = tpu.matmul %77, %79, %cst_31 {dimension_numbers = #tpu.dot_dimension_numbers<[1], [0], [0], [1], [0, 0, 1, 1], [], []>} : vector<128x128xbf16>, vector<128x128xbf16>, vector<128x128xf32> -> vector<128x128xf32>
    %81 = vector.shape_cast %80 : vector<128x128xf32> to vector<2x64x128xf32>
    %82 = vector.shape_cast %4 : vector<2x32x128xf32> to vector<64x128xf32>
    %83 = arith.truncf %82 : vector<64x128xf32> to vector<64x128xbf16>
    %c0_32 = arith.constant 0 : index
    %c0_33 = arith.constant 0 : index
    %c0_34 = arith.constant 0 : index
    %84 = vector.load %arg6[%c0_32, %c0_33, %c0_34] : memref<1x128x256xbf16, #tpu.memory_space<vmem>>, vector<1x128x256xbf16>
    %85 = vector.shape_cast %84 : vector<1x128x256xbf16> to vector<128x256xbf16>
    %cst_35 = arith.constant dense<0.000000e+00> : vector<64x256xf32>
    %86 = tpu.matmul %83, %85, %cst_35 {dimension_numbers = #tpu.dot_dimension_numbers<[1], [0], [0], [1], [0, 0, 1, 1], [], []>} : vector<64x128xbf16>, vector<128x256xbf16>, vector<64x256xf32> -> vector<64x256xf32>
    %87 = vector.shape_cast %86 : vector<64x256xf32> to vector<2x32x256xf32>
    %88 = vector.extract_strided_slice %87 {offsets = [0, 0, 0], sizes = [2, 32, 128], strides = [1, 1, 1]} : vector<2x32x256xf32> to vector<2x32x128xf32>
    %89 = vector.extract_strided_slice %87 {offsets = [0, 0, 128], sizes = [2, 32, 128], strides = [1, 1, 1]} : vector<2x32x256xf32> to vector<2x32x128xf32>
    %90 = arith.truncf %81 : vector<2x64x128xf32> to vector<2x64x128xbf16>
    %91 = arith.truncf %88 : vector<2x32x128xf32> to vector<2x32x128xbf16>
    "tpu.trace_start"() <{level = 10 : i32, message = "bqd,bkd->bqk"}> : () -> ()
    %cst_36 = arith.constant dense<0.000000e+00> : vector<2x64x32xf32>
    %92 = tpu.matmul %90, %91, %cst_36 {dimension_numbers = #tpu.dot_dimension_numbers<[2], [2], [1], [1], [0, 0, 0, 1, 1, 1], [0], [0]>} : vector<2x64x128xbf16>, vector<2x32x128xbf16>, vector<2x64x32xf32> -> vector<2x64x32xf32>
    "tpu.trace_stop"() : () -> ()
    %93 = vector.broadcast %5 : f32 to vector<2x64x32xf32>
    %94 = arith.mulf %92, %93 : vector<2x64x32xf32>
    %cst_37 = arith.constant dense<0xFF800000> : vector<2x64xf32>
    %95 = vector.multi_reduction <maximumf>, %94, %cst_37 [2] : vector<2x64x32xf32> to vector<2x64xf32>
    %96 = vector.shape_cast %95 : vector<2x64xf32> to vector<2x64x1xf32>
    %97 = vector.broadcast %96 : vector<2x64x1xf32> to vector<2x64x32xf32>
    %98 = arith.subf %94, %97 : vector<2x64x32xf32>
    %99 = math.exp %98 : vector<2x64x32xf32>
    %cst_38 = arith.constant dense<0.000000e+00> : vector<2x64xf32>
    %100 = vector.multi_reduction <add>, %99, %cst_38 [2] : vector<2x64x32xf32> to vector<2x64xf32>
    %101 = vector.shape_cast %100 : vector<2x64xf32> to vector<2x64x1xf32>
    %102 = tpu.reciprocal %101 {approx = true} : vector<2x64x1xf32> -> vector<2x64x1xf32>
    %103 = vector.broadcast %102 : vector<2x64x1xf32> to vector<2x64x32xf32>
    %104 = arith.mulf %99, %103 : vector<2x64x32xf32>
    %105 = arith.truncf %104 : vector<2x64x32xf32> to vector<2x64x32xbf16>
    %106 = arith.truncf %89 : vector<2x32x128xf32> to vector<2x32x128xbf16>
    "tpu.trace_start"() <{level = 10 : i32, message = "bqk,bkd->bqd"}> : () -> ()
    %cst_39 = arith.constant dense<0.000000e+00> : vector<2x64x128xf32>
    %107 = tpu.matmul %105, %106, %cst_39 {dimension_numbers = #tpu.dot_dimension_numbers<[2], [1], [1], [2], [0, 0, 0, 1, 1, 2], [0], [0]>} : vector<2x64x32xbf16>, vector<2x32x128xbf16>, vector<2x64x128xf32> -> vector<2x64x128xf32>
    "tpu.trace_stop"() : () -> ()
    %108 = vector.shape_cast %107 : vector<2x64x128xf32> to vector<128x128xf32>
    %109 = arith.truncf %108 : vector<128x128xf32> to vector<128x128xbf16>
    %c0_40 = arith.constant 0 : index
    %c0_41 = arith.constant 0 : index
    %c0_42 = arith.constant 0 : index
    %110 = vector.load %arg7[%c0_40, %c0_41, %c0_42] : memref<1x128x128xbf16, #tpu.memory_space<vmem>>, vector<1x128x128xbf16>
    %111 = vector.shape_cast %110 : vector<1x128x128xbf16> to vector<128x128xbf16>
    %cst_43 = arith.constant dense<0.000000e+00> : vector<128x128xf32>
    %112 = tpu.matmul %109, %111, %cst_43 {dimension_numbers = #tpu.dot_dimension_numbers<[1], [0], [0], [1], [0, 0, 1, 1], [], []>} : vector<128x128xbf16>, vector<128x128xbf16>, vector<128x128xf32> -> vector<128x128xf32>
    %113 = vector.shape_cast %112 : vector<128x128xf32> to vector<2x64x128xf32>
    %114 = arith.addf %57, %113 : vector<2x64x128xf32>
    %cst_44 = arith.constant dense<0.000000e+00> : vector<2x64xf32>
    %115 = vector.multi_reduction <add>, %114, %cst_44 [2] : vector<2x64x128xf32> to vector<2x64xf32>
    %116 = vector.shape_cast %115 : vector<2x64xf32> to vector<2x64x1xf32>
    %cst_45 = arith.constant 1.280000e+02 : f32
    %117 = vector.broadcast %cst_45 : f32 to vector<2x64x1xf32>
    %118 = arith.divf %116, %117 : vector<2x64x1xf32>
    %119 = vector.broadcast %118 : vector<2x64x1xf32> to vector<2x64x128xf32>
    %120 = arith.subf %114, %119 : vector<2x64x128xf32>
    %121 = arith.mulf %120, %120 : vector<2x64x128xf32>
    %cst_46 = arith.constant dense<0.000000e+00> : vector<2x64xf32>
    %122 = vector.multi_reduction <add>, %121, %cst_46 [2] : vector<2x64x128xf32> to vector<2x64xf32>
    %123 = vector.shape_cast %122 : vector<2x64xf32> to vector<2x64x1xf32>
    %cst_47 = arith.constant 1.280000e+02 : f32
    %124 = vector.broadcast %cst_47 : f32 to vector<2x64x1xf32>
    %125 = arith.divf %123, %124 : vector<2x64x1xf32>
    %126 = vector.broadcast %118 : vector<2x64x1xf32> to vector<2x64x128xf32>
    %127 = arith.subf %114, %126 : vector<2x64x128xf32>
    %cst_48 = arith.constant 9.99999997E-7 : f32
    %128 = vector.broadcast %cst_48 : f32 to vector<2x64x1xf32>
    %129 = arith.addf %125, %128 : vector<2x64x1xf32>
    %130 = math.rsqrt %129 : vector<2x64x1xf32>
    %131 = vector.broadcast %130 : vector<2x64x1xf32> to vector<2x64x128xf32>
    %132 = arith.mulf %127, %131 : vector<2x64x128xf32>
    %133 = vector.shape_cast %132 : vector<2x64x128xf32> to vector<128x128xf32>
    %134 = arith.truncf %133 : vector<128x128xf32> to vector<128x128xbf16>
    %c0_49 = arith.constant 0 : index
    %c0_50 = arith.constant 0 : index
    %c0_51 = arith.constant 0 : index
    %135 = vector.load %arg8[%c0_49, %c0_50, %c0_51] : memref<1x128x256xbf16, #tpu.memory_space<vmem>>, vector<1x128x256xbf16>
    %136 = vector.shape_cast %135 : vector<1x128x256xbf16> to vector<128x256xbf16>
    %cst_52 = arith.constant dense<0.000000e+00> : vector<128x256xf32>
    %137 = tpu.matmul %134, %136, %cst_52 {dimension_numbers = #tpu.dot_dimension_numbers<[1], [0], [0], [1], [0, 0, 1, 1], [], []>} : vector<128x128xbf16>, vector<128x256xbf16>, vector<128x256xf32> -> vector<128x256xf32>
    %138 = arith.mulf %137, %137 : vector<128x256xf32>
    %139 = arith.mulf %137, %138 : vector<128x256xf32>
    %cst_53 = arith.constant 4.471500e-02 : f32
    %140 = vector.broadcast %cst_53 : f32 to vector<128x256xf32>
    %141 = arith.mulf %140, %139 : vector<128x256xf32>
    %142 = arith.addf %137, %141 : vector<128x256xf32>
    %cst_54 = arith.constant 0.797884583 : f32
    %143 = vector.broadcast %cst_54 : f32 to vector<128x256xf32>
    %144 = arith.mulf %143, %142 : vector<128x256xf32>
    %145 = math.tanh %144 : vector<128x256xf32>
    %cst_55 = arith.constant 1.000000e+00 : f32
    %146 = vector.broadcast %cst_55 : f32 to vector<128x256xf32>
    %147 = arith.addf %146, %145 : vector<128x256xf32>
    %cst_56 = arith.constant 5.000000e-01 : f32
    %148 = vector.broadcast %cst_56 : f32 to vector<128x256xf32>
    %149 = arith.mulf %148, %147 : vector<128x256xf32>
    %150 = arith.mulf %137, %149 : vector<128x256xf32>
    %151 = arith.truncf %150 : vector<128x256xf32> to vector<128x256xbf16>
    %c0_57 = arith.constant 0 : index
    %c0_58 = arith.constant 0 : index
    %c0_59 = arith.constant 0 : index
    %152 = vector.load %arg9[%c0_57, %c0_58, %c0_59] : memref<1x256x128xbf16, #tpu.memory_space<vmem>>, vector<1x256x128xbf16>
    %153 = vector.shape_cast %152 : vector<1x256x128xbf16> to vector<256x128xbf16>
    %cst_60 = arith.constant dense<0.000000e+00> : vector<128x128xf32>
    %154 = tpu.matmul %151, %153, %cst_60 {dimension_numbers = #tpu.dot_dimension_numbers<[1], [0], [0], [1], [0, 0, 1, 1], [], []>} : vector<128x256xbf16>, vector<256x128xbf16>, vector<128x128xf32> -> vector<128x128xf32>
    %155 = vector.shape_cast %154 : vector<128x128xf32> to vector<2x64x128xf32>
    %156 = arith.addf %114, %155 : vector<2x64x128xf32>
    %c0_61 = arith.constant 0 : index
    %c0_62 = arith.constant 0 : index
    %c0_63 = arith.constant 0 : index
    %157 = vector.load %arg10[%c0_61, %c0_62, %c0_63] : memref<2x64x128xf32, #tpu.memory_space<vmem>>, vector<2x64x128xf32>
    tpu.vector_store %arg10[%c0_61, %c0_62, %c0_63], %156 {strides = array<i32>} : memref<2x64x128xf32, #tpu.memory_space<vmem>>, vector<2x64x128xf32>,
    %c0_i32_64 = arith.constant 0 : i32
    %158 = arith.cmpi eq, %arg0, %c0_i32_64 : i32
    %159 = arith.extui %158 : i1 to i32
    %c0_i32_65 = arith.constant 0 : i32
    %160 = arith.cmpi ne, %159, %c0_i32_65 : i32
    scf.if %160 {
      %c0_66 = arith.constant 0 : index
      %c0_67 = arith.constant 0 : index
      %c0_68 = arith.constant 0 : index
      %161 = vector.load %arg1[%c0_66, %c0_67, %c0_68] : memref<2x64x128xf32, #tpu.memory_space<vmem>>, vector<2x64x128xf32>
      %162 = arith.subf %156, %161 : vector<2x64x128xf32>
      %c0_69 = arith.constant 0 : index
      %c0_70 = arith.constant 0 : index
      %c0_71 = arith.constant 0 : index
      %163 = vector.load %arg11[%c0_69, %c0_70, %c0_71] : memref<2x64x128xf32, #tpu.memory_space<vmem>>, vector<2x64x128xf32>
      tpu.vector_store %arg11[%c0_69, %c0_70, %c0_71], %162 {strides = array<i32>} : memref<2x64x128xf32, #tpu.memory_space<vmem>>, vector<2x64x128xf32>,
    } else {
    }
    return
  }
  func.func @transform_0(%arg0: i32) -> (i32, i32, i32) {
    %c0_i32 = arith.constant 0 : i32
    %c0_i32_0 = arith.constant 0 : i32
    %c0_i32_1 = arith.constant 0 : i32
    %c0_i32_2 = arith.constant 0 : i32
    return %c0_i32, %c0_i32_0, %c0_i32_1 : i32, i32, i32
  }
  func.func @transform_1(%arg0: i32) -> (i32, i32, i32) {
    %c0_i32 = arith.constant 0 : i32
    %c0_i32_0 = arith.constant 0 : i32
    %c0_i32_1 = arith.constant 0 : i32
    %c0_i32_2 = arith.constant 0 : i32
    return %c0_i32, %c0_i32_0, %c0_i32_1 : i32, i32, i32
  }
  func.func @transform_2(%arg0: i32) -> (i32, i32, i32) {
    %c0_i32 = arith.constant 0 : i32
    %c0_i32_0 = arith.constant 0 : i32
    %c0_i32_1 = arith.constant 0 : i32
    return %arg0, %c0_i32, %c0_i32_0 : i32, i32, i32
  }
  func.func @transform_3(%arg0: i32) -> (i32, i32, i32) {
    %c0_i32 = arith.constant 0 : i32
    %c0_i32_0 = arith.constant 0 : i32
    %c0_i32_1 = arith.constant 0 : i32
    return %arg0, %c0_i32, %c0_i32_0 : i32, i32, i32
  }
  func.func @transform_4(%arg0: i32) -> (i32, i32, i32) {
    %c0_i32 = arith.constant 0 : i32
    %c0_i32_0 = arith.constant 0 : i32
    %c0_i32_1 = arith.constant 0 : i32
    return %arg0, %c0_i32, %c0_i32_0 : i32, i32, i32
  }
  func.func @transform_5(%arg0: i32) -> (i32, i32, i32) {
    %c0_i32 = arith.constant 0 : i32
    %c0_i32_0 = arith.constant 0 : i32
    %c0_i32_1 = arith.constant 0 : i32
    return %arg0, %c0_i32, %c0_i32_0 : i32, i32, i32
  }
  func.func @transform_6(%arg0: i32) -> (i32, i32, i32) {
    %c0_i32 = arith.constant 0 : i32
    %c0_i32_0 = arith.constant 0 : i32
    %c0_i32_1 = arith.constant 0 : i32
    return %arg0, %c0_i32, %c0_i32_0 : i32, i32, i32
  }
  func.func @transform_7(%arg0: i32) -> (i32, i32, i32) {
    %c0_i32 = arith.constant 0 : i32
    %c0_i32_0 = arith.constant 0 : i32
    %c0_i32_1 = arith.constant 0 : i32
    return %arg0, %c0_i32, %c0_i32_0 : i32, i32, i32
  }
  func.func @transform_8(%arg0: i32) -> (i32, i32, i32) {
    %c0_i32 = arith.constant 0 : i32
    %c0_i32_0 = arith.constant 0 : i32
    %c0_i32_1 = arith.constant 0 : i32
    return %arg0, %c0_i32, %c0_i32_0 : i32, i32, i32
  }
  func.func @transform_9(%arg0: i32) -> (i32, i32, i32) {
    %c0_i32 = arith.constant 0 : i32
    %c0_i32_0 = arith.constant 0 : i32
    %c0_i32_1 = arith.constant 0 : i32
    %c0_i32_2 = arith.constant 0 : i32
    return %c0_i32, %c0_i32_0, %c0_i32_1 : i32, i32, i32
  }
  func.func @transform_10(%arg0: i32) -> (i32, i32, i32) {
    %c0_i32 = arith.constant 0 : i32
    %c0_i32_0 = arith.constant 0 : i32
    %c0_i32_1 = arith.constant 0 : i32
    %c0_i32_2 = arith.constant 0 : i32
    return %c0_i32, %c0_i32_0, %c0_i32_1 : i32, i32, i32
  }
}

</mosaic_0001>

<llo_original>
// kernel: tpu_custom_call.1
$region0: #{tpu_custom_call.1}
  #allocation0 [shape = 'u32[]', space=smem, size = 0x4, offset = 0x4, fixed_abs, tag = 'smem constant byte address 0x4 - core index']
  #allocation1 [shape = 'u32[144,128]{1,0:T(1,128)}', space=vmem, size = 0x12000, scoped, tag = 'internal scratch']
  %s0 = inlined_call_operand.hbm [shape: f32[2,64,128], index: 0, kind: input, shape index: {}]
  %s1 = inlined_call_operand.hbm [shape: f32[2,32,128], index: 1, kind: input, shape index: {}]
  %s2 = inlined_call_operand.hbm [shape: bf16[1,128,384], index: 2, kind: input, shape index: {}]
  %s3 = inlined_call_operand.hbm [shape: bf16[1,128,128], index: 3, kind: input, shape index: {}]
  %s4 = inlined_call_operand.hbm [shape: bf16[1,128,128], index: 4, kind: input, shape index: {}]
  %s5 = inlined_call_operand.hbm [shape: bf16[1,128,256], index: 5, kind: input, shape index: {}]
  %s6 = inlined_call_operand.hbm [shape: bf16[1,128,128], index: 6, kind: input, shape index: {}]
  %s7 = inlined_call_operand.hbm [shape: bf16[1,128,256], index: 7, kind: input, shape index: {}]
  %s8 = inlined_call_operand.hbm [shape: bf16[1,256,128], index: 8, kind: input, shape index: {}]
  %s9 = inlined_call_operand.hbm [shape: f32[2,64,128], index: 9, kind: output, shape index: {0}]
  %s10 = inlined_call_operand.hbm [shape: f32[2,64,128], index: 10, kind: output, shape index: {1}]
  %11 = xla_tuple %s9, %s10
  %s12 = sld [smem:[#allocation0]]
  $region98: #{tpu_custom_call.1} parent=0
    _
  %s14 = ssub.s32 1, %s12
  %s15 = scalar_select 0, %s14, %s12
  $region1: #{tpu_custom_call.1} parent=0
    #allocation2 [shape = 'u8[65536]{0}', space=vmem, size = 0x10000, scoped, tag = 'input window, operand 0, single buffered']
    #allocation3 [shape = 's32[1]{0}', space=sflag, size = 0x4, scoped, tag = 'scoped memory for tpu_custom_call.1']
    #allocation4 [shape = 's32[1]{0}', space=sflag, size = 0x4, scoped, tag = 'scoped memory for tpu_custom_call.1']
    #allocation5 [shape = 'u8[32768]{0}', space=vmem, size = 0x8000, scoped, tag = 'input window, operand 1, single buffered']
    #allocation6 [shape = 's32[1]{0}', space=sflag, size = 0x4, scoped, tag = 'scoped memory for tpu_custom_call.1']
    #allocation7 [shape = 'u8[98304]{0}', space=vmem, size = 0x18000, scoped, tag = 'input window, operand 2, single buffered']
    #allocation8 [shape = 'u8[32768]{0}', space=vmem, size = 0x8000, scoped, tag = 'input window, operand 3, single buffered']
    #allocation9 [shape = 's32[1]{0}', space=sflag, size = 0x4, scoped, tag = 'scoped memory for tpu_custom_call.1']
    #allocation10 [shape = 'u8[32768]{0}', space=vmem, size = 0x8000, scoped, tag = 'input window, operand 4, single buffered']
    #allocation11 [shape = 'u8[65536]{0}', space=vmem, size = 0x10000, scoped, tag = 'input window, operand 5, single buffered']
    #allocation12 [shape = 's32[1]{0}', space=sflag, size = 0x4, scoped, tag = 'scoped memory for tpu_custom_call.1']
    #allocation13 [shape = 'u8[32768]{0}', space=vmem, size = 0x8000, scoped, tag = 'input window, operand 6, single buffered']
    #allocation14 [shape = 'u8[65536]{0}', space=vmem, size = 0x10000, scoped, tag = 'input window, operand 7, single buffered']
    #allocation15 [shape = 's32[1]{0}', space=sflag, size = 0x4, scoped, tag = 'scoped memory for tpu_custom_call.1']
    #allocation16 [shape = 'u8[65536]{0}', space=vmem, size = 0x10000, scoped, tag = 'input window, operand 8, single buffered']
    #allocation17 [shape = 'u8[65536]{0}', space=vmem, size = 0x10000, scoped, tag = 'output window, operand 0, single buffered']
    #allocation18 [shape = 'u8[65536]{0}', space=vmem, size = 0x10000, scoped, tag = 'output window, operand 1, single buffered']
    #allocation19 [shape = 's32[1]{0}', space=sflag, size = 0x4, scoped, tag = 'scoped memory for tpu_custom_call.1']
    %16 = vsyncpa [#allocation3], 0
    %17 = vsyncpa [#allocation6], 0
    %18 = vsyncpa [#allocation9], 0
    %19 = vsyncpa [#allocation12], 0
    %20 = vsyncpa [#allocation15], 0
    %21 = vsyncpa [#allocation4], 0
    %22 = vsyncpa [#allocation19], 0
    // Predicated region
    $region2: #{tpu_custom_call.1} parent=1 // pred_check
      _
    $region3: #{tpu_custom_call.1} parent=1 // pred_check_branch
      %24 = sbr.rel (0) target = $region5
    $region4: #{tpu_custom_call.1} parent=1 // pred_region
      %s26 = ssub.s32 2048, 2048
      %27 = vsyncadd [#allocation3], %s26
      %s28 = sshll.u32 [#allocation2], 4
      %s29 = int_to_ptr.vmem [resolvable:$true] %s28
      %34 = dma.hbm_to_vmem [thread:$0]  %s0, 2048, %s29, [#allocation3], 128, 128, 8
    $region5: #{tpu_custom_call.1} parent=1 // pred_fallthru
      _
    // Predicated region
    $region6: #{tpu_custom_call.1} parent=1 // pred_check
      _
    $region7: #{tpu_custom_call.1} parent=1 // pred_check_branch
      %36 = sbr.rel (0) target = $region9
    $region8: #{tpu_custom_call.1} parent=1 // pred_region
      %s38 = ssub.s32 1024, 1024
      %39 = vsyncadd [#allocation6], %s38
      %s40 = sshll.u32 [#allocation5], 4
      %s41 = int_to_ptr.vmem [resolvable:$true] %s40
      %46 = dma.hbm_to_vmem [thread:$0]  %s1, 1024, %s41, [#allocation6], 128, 128, 8
    $region9: #{tpu_custom_call.1} parent=1 // pred_fallthru
      _
    // Predicated region
    $region10: #{tpu_custom_call.1} parent=1 // pred_check
      _
    $region11: #{tpu_custom_call.1} parent=1 // pred_check_branch
      %48 = sbr.rel (0) target = $region13
    $region12: #{tpu_custom_call.1} parent=1 // pred_region
      %s50 = ssub.s32 3072, 3072
      %51 = vsyncadd [#allocation6], %s50
      %s52 = sshll.u32 [#allocation7], 4
      %s53 = int_to_ptr.vmem [resolvable:$true] %s52
      %58 = dma.hbm_to_vmem [thread:$0]  %s2, 3072, %s53, [#allocation6], 192, 192, 12
    $region13: #{tpu_custom_call.1} parent=1 // pred_fallthru
      _
    // Predicated region
    $region14: #{tpu_custom_call.1} parent=1 // pred_check
      _
    $region15: #{tpu_custom_call.1} parent=1 // pred_check_branch
      %60 = sbr.rel (0) target = $region17
    $region16: #{tpu_custom_call.1} parent=1 // pred_region
      %s62 = ssub.s32 1024, 1024
      %63 = vsyncadd [#allocation9], %s62
      %s64 = sshll.u32 [#allocation8], 4
      %s65 = int_to_ptr.vmem [resolvable:$true] %s64
      %70 = dma.hbm_to_vmem [thread:$0]  %s3, 1024, %s65, [#allocation9], 64, 64, 4
    $region17: #{tpu_custom_call.1} parent=1 // pred_fallthru
      _
    // Predicated region
    $region18: #{tpu_custom_call.1} parent=1 // pred_check
      _
    $region19: #{tpu_custom_call.1} parent=1 // pred_check_branch
      %72 = sbr.rel (0) target = $region21
    $region20: #{tpu_custom_call.1} parent=1 // pred_region
      %s74 = ssub.s32 1024, 1024
      %75 = vsyncadd [#allocation9], %s74
      %s76 = sshll.u32 [#allocation10], 4
      %s77 = int_to_ptr.vmem [resolvable:$true] %s76
      %82 = dma.hbm_to_vmem [thread:$0]  %s4, 1024, %s77, [#allocation9], 64, 64, 4
    $region21: #{tpu_custom_call.1} parent=1 // pred_fallthru
      _
    // Predicated region
    $region22: #{tpu_custom_call.1} parent=1 // pred_check
      _
    $region23: #{tpu_custom_call.1} parent=1 // pred_check_branch
      %84 = sbr.rel (0) target = $region25
    $region24: #{tpu_custom_call.1} parent=1 // pred_region
      %s86 = ssub.s32 2048, 2048
      %87 = vsyncadd [#allocation12], %s86
      %s88 = sshll.u32 [#allocation11], 4
      %s89 = int_to_ptr.vmem [resolvable:$true] %s88
      %94 = dma.hbm_to_vmem [thread:$0]  %s5, 2048, %s89, [#allocation12], 128, 128, 8
    $region25: #{tpu_custom_call.1} parent=1 // pred_fallthru
      _
    // Predicated region
    $region26: #{tpu_custom_call.1} parent=1 // pred_check
      _
    $region27: #{tpu_custom_call.1} parent=1 // pred_check_branch
      %96 = sbr.rel (0) target = $region29
    $region28: #{tpu_custom_call.1} parent=1 // pred_region
      %s98 = ssub.s32 1024, 1024
      %99 = vsyncadd [#allocation12], %s98
      %s100 = sshll.u32 [#allocation13], 4
      %s101 = int_to_ptr.vmem [resolvable:$true] %s100
      %106 = dma.hbm_to_vmem [thread:$0]  %s6, 1024, %s101, [#allocation12], 64, 64, 4
    $region29: #{tpu_custom_call.1} parent=1 // pred_fallthru
      _
    // Predicated region
    $region30: #{tpu_custom_call.1} parent=1 // pred_check
      _
    $region31: #{tpu_custom_call.1} parent=1 // pred_check_branch
      %108 = sbr.rel (0) target = $region33
    $region32: #{tpu_custom_call.1} parent=1 // pred_region
      %s110 = ssub.s32 2048, 2048
      %111 = vsyncadd [#allocation15], %s110
      %s112 = sshll.u32 [#allocation14], 4
      %s113 = int_to_ptr.vmem [resolvable:$true] %s112
      %118 = dma.hbm_to_vmem [thread:$0]  %s7, 2048, %s113, [#allocation15], 128, 128, 8
    $region33: #{tpu_custom_call.1} parent=1 // pred_fallthru
      _
    // Predicated region
    $region34: #{tpu_custom_call.1} parent=1 // pred_check
      _
    $region35: #{tpu_custom_call.1} parent=1 // pred_check_branch
      %120 = sbr.rel (0) target = $region37
    $region36: #{tpu_custom_call.1} parent=1 // pred_region
      %s122 = ssub.s32 2048, 2048
      %123 = vsyncadd [#allocation15], %s122
      %s124 = sshll.u32 [#allocation16], 4
      %s125 = int_to_ptr.vmem [resolvable:$true] %s124
      %130 = dma.hbm_to_vmem [thread:$0]  %s8, 2048, %s125, [#allocation15], 64, 64, 4
    $region37: #{tpu_custom_call.1} parent=1 // pred_fallthru
      _
    // Predicated region
    $region38: #{tpu_custom_call.1} parent=1 // pred_check
      _
    $region39: #{tpu_custom_call.1} parent=1 // pred_check_branch
      %132 = sbr.rel (0) target = $region41
    $region40: #{tpu_custom_call.1} parent=1 // pred_region
      %133 = dma.done [#allocation3], 2048
    $region41: #{tpu_custom_call.1} parent=1 // pred_fallthru
      _
    // Predicated region
    $region42: #{tpu_custom_call.1} parent=1 // pred_check
      _
    $region43: #{tpu_custom_call.1} parent=1 // pred_check_branch
      %135 = sbr.rel (0) target = $region45
    $region44: #{tpu_custom_call.1} parent=1 // pred_region
      %136 = dma.done [#allocation6], 1024
    $region45: #{tpu_custom_call.1} parent=1 // pred_fallthru
      _
    // Predicated region
    $region46: #{tpu_custom_call.1} parent=1 // pred_check
      _
    $region47: #{tpu_custom_call.1} parent=1 // pred_check_branch
      %138 = sbr.rel (0) target = $region49
    $region48: #{tpu_custom_call.1} parent=1 // pred_region
      %139 = dma.done [#allocation6], 3072
    $region49: #{tpu_custom_call.1} parent=1 // pred_fallthru
      _
    // Predicated region
    $region50: #{tpu_custom_call.1} parent=1 // pred_check
      _
    $region51: #{tpu_custom_call.1} parent=1 // pred_check_branch
      %141 = sbr.rel (0) target = $region53
    $region52: #{tpu_custom_call.1} parent=1 // pred_region
      %142 = dma.done [#allocation9], 1024
    $region53: #{tpu_custom_call.1} parent=1 // pred_fallthru
      _
    // Predicated region
    $region54: #{tpu_custom_call.1} parent=1 // pred_check
      _
    $region55: #{tpu_custom_call.1} parent=1 // pred_check_branch
      %144 = sbr.rel (0) target = $region57
    $region56: #{tpu_custom_call.1} parent=1 // pred_region
      %145 = dma.done [#allocation9], 1024
    $region57: #{tpu_custom_call.1} parent=1 // pred_fallthru
      _
    // Predicated region
    $region58: #{tpu_custom_call.1} parent=1 // pred_check
      _
    $region59: #{tpu_custom_call.1} parent=1 // pred_check_branch
      %147 = sbr.rel (0) target = $region61
    $region60: #{tpu_custom_call.1} parent=1 // pred_region
      %148 = dma.done [#allocation12], 2048
    $region61: #{tpu_custom_call.1} parent=1 // pred_fallthru
      _
    // Predicated region
    $region62: #{tpu_custom_call.1} parent=1 // pred_check
      _
    $region63: #{tpu_custom_call.1} parent=1 // pred_check_branch
      %150 = sbr.rel (0) target = $region65
    $region64: #{tpu_custom_call.1} parent=1 // pred_region
      %151 = dma.done [#allocation12], 1024
    $region65: #{tpu_custom_call.1} parent=1 // pred_fallthru
      _
    // Predicated region
    $region66: #{tpu_custom_call.1} parent=1 // pred_check
      _
    $region67: #{tpu_custom_call.1} parent=1 // pred_check_branch
      %153 = sbr.rel (0) target = $region69
    $region68: #{tpu_custom_call.1} parent=1 // pred_region
      %154 = dma.done [#allocation15], 2048
    $region69: #{tpu_custom_call.1} parent=1 // pred_fallthru
      _
    // Predicated region
    $region70: #{tpu_custom_call.1} parent=1 // pred_check
      _
    $region71: #{tpu_custom_call.1} parent=1 // pred_check_branch
      %156 = sbr.rel (0) target = $region73
    $region72: #{tpu_custom_call.1} parent=1 // pred_region
      %157 = dma.done [#allocation15], 2048
    $region73: #{tpu_custom_call.1} parent=1 // pred_fallthru
      _
    %p159 = scmp.eq.s32.totalorder 0, 0
    // Predicated region
    $region74: #{tpu_custom_call.1} parent=1 // pred_check
      %p160 = pneg %p159
    $region75: #{tpu_custom_call.1} parent=1 // pred_check_branch
      %162 = sbr.rel (%p160) target = $region77
    $region76: #{tpu_custom_call.1} parent=1 // pred_region
      %v163 = vld [vmem:[#allocation2] sm:$0xff]
      %v164 = vld [vmem:[#allocation2 + $0x8] sm:$0xff]
      %v165 = vld [vmem:[#allocation2 + $0x10] sm:$0xff]
      %v166 = vld [vmem:[#allocation2 + $0x18] sm:$0xff]
      %v167 = vld [vmem:[#allocation2 + $0x20] sm:$0xff]
      %v168 = vld [vmem:[#allocation2 + $0x28] sm:$0xff]
      %v169 = vld [vmem:[#allocation2 + $0x30] sm:$0xff]
      %v170 = vld [vmem:[#allocation2 + $0x38] sm:$0xff]
      %v171 = vld [vmem:[#allocation2 + $0x40] sm:$0xff]
      %v172 = vld [vmem:[#allocation2 + $0x48] sm:$0xff]
      %v173 = vld [vmem:[#allocation2 + $0x50] sm:$0xff]
      %v174 = vld [vmem:[#allocation2 + $0x58] sm:$0xff]
      %v175 = vld [vmem:[#allocation2 + $0x60] sm:$0xff]
      %v176 = vld [vmem:[#allocation2 + $0x68] sm:$0xff]
      %v177 = vld [vmem:[#allocation2 + $0x70] sm:$0xff]
      %v178 = vld [vmem:[#allocation2 + $0x78] sm:$0xff]
      %179 = vst [vmem:[#allocation17] sm:$0xff] %v163
      %180 = vst [vmem:[#allocation17 + $0x8] sm:$0xff] %v164
      %181 = vst [vmem:[#allocation17 + $0x10] sm:$0xff] %v165
      %182 = vst [vmem:[#allocation17 + $0x18] sm:$0xff] %v166
      %183 = vst [vmem:[#allocation17 + $0x20] sm:$0xff] %v167
      %184 = vst [vmem:[#allocation17 + $0x28] sm:$0xff] %v168
      %185 = vst [vmem:[#allocation17 + $0x30] sm:$0xff] %v169
      %186 = vst [vmem:[#allocation17 + $0x38] sm:$0xff] %v170
      %187 = vst [vmem:[#allocation17 + $0x40] sm:$0xff] %v171
      %188 = vst [vmem:[#allocation17 + $0x48] sm:$0xff] %v172
      %189 = vst [vmem:[#allocation17 + $0x50] sm:$0xff] %v173
      %190 = vst [vmem:[#allocation17 + $0x58] sm:$0xff] %v174
      %191 = vst [vmem:[#allocation17 + $0x60] sm:$0xff] %v175
      %192 = vst [vmem:[#allocation17 + $0x68] sm:$0xff] %v176
      %193 = vst [vmem:[#allocation17 + $0x70] sm:$0xff] %v177
      %194 = vst [vmem:[#allocation17 + $0x78] sm:$0xff] %v178
    $region77: #{tpu_custom_call.1} parent=1 // pred_fallthru
      _
    %v195 = vld [vmem:[#allocation17] sm:$0xff]
    %v196 = vld [vmem:[#allocation17 + $0x8] sm:$0xff]
    %v197 = vld [vmem:[#allocation17 + $0x10] sm:$0xff]
    %v198 = vld [vmem:[#allocation17 + $0x18] sm:$0xff]
    %v199 = vld [vmem:[#allocation17 + $0x20] sm:$0xff]
    %v200 = vld [vmem:[#allocation17 + $0x28] sm:$0xff]
    %v201 = vld [vmem:[#allocation17 + $0x30] sm:$0xff]
    %v202 = vld [vmem:[#allocation17 + $0x38] sm:$0xff]
    %v203 = vld [vmem:[#allocation17 + $0x40] sm:$0xff]
    %v204 = vld [vmem:[#allocation17 + $0x48] sm:$0xff]
    %v205 = vld [vmem:[#allocation17 + $0x50] sm:$0xff]
    %v206 = vld [vmem:[#allocation17 + $0x58] sm:$0xff]
    %v207 = vld [vmem:[#allocation17 + $0x60] sm:$0xff]
    %v208 = vld [vmem:[#allocation17 + $0x68] sm:$0xff]
    %v209 = vld [vmem:[#allocation17 + $0x70] sm:$0xff]
    %v210 = vld [vmem:[#allocation17 + $0x78] sm:$0xff]
    %v211 = vld [vmem:[#allocation5] sm:$0xff]
    %v212 = vld [vmem:[#allocation5 + $0x8] sm:$0xff]
    %v213 = vld [vmem:[#allocation5 + $0x10] sm:$0xff]
    %v214 = vld [vmem:[#allocation5 + $0x18] sm:$0xff]
    %v215 = vld [vmem:[#allocation5 + $0x20] sm:$0xff]
    %v216 = vld [vmem:[#allocation5 + $0x28] sm:$0xff]
    %v217 = vld [vmem:[#allocation5 + $0x30] sm:$0xff]
    %v218 = vld [vmem:[#allocation5 + $0x38] sm:$0xff]
    %219 = vadd.xlane.f32.xlu0 %v195
    %v220 = vpop.xlane.xlu0 %219
    %221 = vadd.xlane.f32.xlu0 %v196
    %v222 = vpop.xlane.xlu0 %221
    %223 = vadd.xlane.f32.xlu0 %v197
    %v224 = vpop.xlane.xlu0 %223
    %225 = vadd.xlane.f32.xlu0 %v198
    %v226 = vpop.xlane.xlu0 %225
    %227 = vadd.xlane.f32.xlu0 %v199
    %v228 = vpop.xlane.xlu0 %227
    %229 = vadd.xlane.f32.xlu0 %v200
    %v230 = vpop.xlane.xlu0 %229
    %231 = vadd.xlane.f32.xlu0 %v201
    %v232 = vpop.xlane.xlu0 %231
    %233 = vadd.xlane.f32.xlu0 %v202
    %v234 = vpop.xlane.xlu0 %233
    %235 = vadd.xlane.f32.xlu0 %v203
    %v236 = vpop.xlane.xlu0 %235
    %237 = vadd.xlane.f32.xlu0 %v204
    %v238 = vpop.xlane.xlu0 %237
    %239 = vadd.xlane.f32.xlu0 %v205
    %v240 = vpop.xlane.xlu0 %239
    %241 = vadd.xlane.f32.xlu0 %v206
    %v242 = vpop.xlane.xlu0 %241
    %243 = vadd.xlane.f32.xlu0 %v207
    %v244 = vpop.xlane.xlu0 %243
    %245 = vadd.xlane.f32.xlu0 %v208
    %v246 = vpop.xlane.xlu0 %245
    %247 = vadd.xlane.f32.xlu0 %v209
    %v248 = vpop.xlane.xlu0 %247
    %249 = vadd.xlane.f32.xlu0 %v210
    %v250 = vpop.xlane.xlu0 %249
    %v251 = vrcp.pop 128.0
    %v252 = vmul.f32 %v220, %v251
    %v253 = vmul.f32 %v222, %v251
    %v254 = vmul.f32 %v224, %v251
    %v255 = vmul.f32 %v226, %v251
    %v256 = vmul.f32 %v228, %v251
    %v257 = vmul.f32 %v230, %v251
    %v258 = vmul.f32 %v232, %v251
    %v259 = vmul.f32 %v234, %v251
    %v260 = vmul.f32 %v236, %v251
    %v261 = vmul.f32 %v238, %v251
    %v262 = vmul.f32 %v240, %v251
    %v263 = vmul.f32 %v242, %v251
    %v264 = vmul.f32 %v244, %v251
    %v265 = vmul.f32 %v246, %v251
    %v266 = vmul.f32 %v248, %v251
    %v267 = vmul.f32 %v250, %v251
    %v268 = vsub.f32 %v195, %v252
    %v269 = vsub.f32 %v196, %v253
    %v270 = vsub.f32 %v197, %v254
    %v271 = vsub.f32 %v198, %v255
    %v272 = vsub.f32 %v199, %v256
    %v273 = vsub.f32 %v200, %v257
    %v274 = vsub.f32 %v201, %v258
    %v275 = vsub.f32 %v202, %v259
    %v276 = vsub.f32 %v203, %v260
    %v277 = vsub.f32 %v204, %v261
    %v278 = vsub.f32 %v205, %v262
    %v279 = vsub.f32 %v206, %v263
    %v280 = vsub.f32 %v207, %v264
    %v281 = vsub.f32 %v208, %v265
    %v282 = vsub.f32 %v209, %v266
    %v283 = vsub.f32 %v210, %v267
    %v284 = vmul.f32 %v268, %v268
    %v285 = vmul.f32 %v269, %v269
    %v286 = vmul.f32 %v270, %v270
    %v287 = vmul.f32 %v271, %v271
    %v288 = vmul.f32 %v272, %v272
    %v289 = vmul.f32 %v273, %v273
    %v290 = vmul.f32 %v274, %v274
    %v291 = vmul.f32 %v275, %v275
    %v292 = vmul.f32 %v276, %v276
    %v293 = vmul.f32 %v277, %v277
    %v294 = vmul.f32 %v278, %v278
    %v295 = vmul.f32 %v279, %v279
    %v296 = vmul.f32 %v280, %v280
    %v297 = vmul.f32 %v281, %v281
    %v298 = vmul.f32 %v282, %v282
    %v299 = vmul.f32 %v283, %v283
    %300 = vadd.xlane.f32.xlu0 %v284
    %v301 = vpop.xlane.xlu0 %300
    %302 = vadd.xlane.f32.xlu0 %v285
    %v303 = vpop.xlane.xlu0 %302
    %304 = vadd.xlane.f32.xlu0 %v286
    %v305 = vpop.xlane.xlu0 %304
    %306 = vadd.xlane.f32.xlu0 %v287
    %v307 = vpop.xlane.xlu0 %306
    %308 = vadd.xlane.f32.xlu0 %v288
    %v309 = vpop.xlane.xlu0 %308
    %310 = vadd.xlane.f32.xlu0 %v289
    %v311 = vpop.xlane.xlu0 %310
    %312 = vadd.xlane.f32.xlu0 %v290
    %v313 = vpop.xlane.xlu0 %312
    %314 = vadd.xlane.f32.xlu0 %v291
    %v315 = vpop.xlane.xlu0 %314
    %316 = vadd.xlane.f32.xlu0 %v292
    %v317 = vpop.xlane.xlu0 %316
    %318 = vadd.xlane.f32.xlu0 %v293
    %v319 = vpop.xlane.xlu0 %318
    %320 = vadd.xlane.f32.xlu0 %v294
    %v321 = vpop.xlane.xlu0 %320
    %322 = vadd.xlane.f32.xlu0 %v295
    %v323 = vpop.xlane.xlu0 %322
    %324 = vadd.xlane.f32.xlu0 %v296
    %v325 = vpop.xlane.xlu0 %324
    %326 = vadd.xlane.f32.xlu0 %v297
    %v327 = vpop.xlane.xlu0 %326
    %328 = vadd.xlane.f32.xlu0 %v298
    %v329 = vpop.xlane.xlu0 %328
    %330 = vadd.xlane.f32.xlu0 %v299
    %v331 = vpop.xlane.xlu0 %330
    %v332 = vmul.f32 %v301, %v251
    %v333 = vmul.f32 %v303, %v251
    %v334 = vmul.f32 %v305, %v251
    %v335 = vmul.f32 %v307, %v251
    %v336 = vmul.f32 %v309, %v251
    %v337 = vmul.f32 %v311, %v251
    %v338 = vmul.f32 %v313, %v251
    %v339 = vmul.f32 %v315, %v251
    %v340 = vmul.f32 %v317, %v251
    %v341 = vmul.f32 %v319, %v251
    %v342 = vmul.f32 %v321, %v251
    %v343 = vmul.f32 %v323, %v251
    %v344 = vmul.f32 %v325, %v251
    %v345 = vmul.f32 %v327, %v251
    %v346 = vmul.f32 %v329, %v251
    %v347 = vmul.f32 %v331, %v251
    %v348 = vadd.f32 %v332, 1e-06
    %v349 = vadd.f32 %v333, 1e-06
    %v350 = vadd.f32 %v334, 1e-06
    %v351 = vadd.f32 %v335, 1e-06
    %v352 = vadd.f32 %v336, 1e-06
    %v353 = vadd.f32 %v337, 1e-06
    %v354 = vadd.f32 %v338, 1e-06
    %v355 = vadd.f32 %v339, 1e-06
    %v356 = vadd.f32 %v340, 1e-06
    %v357 = vadd.f32 %v341, 1e-06
    %v358 = vadd.f32 %v342, 1e-06
    %v359 = vadd.f32 %v343, 1e-06
    %v360 = vadd.f32 %v344, 1e-06
    %v361 = vadd.f32 %v345, 1e-06
    %v362 = vadd.f32 %v346, 1e-06
    %v363 = vadd.f32 %v347, 1e-06
    %v364 = vrsqrt.pop %v348
    %v365 = vrsqrt.pop %v349
    %v366 = vrsqrt.pop %v350
    %v367 = vrsqrt.pop %v351
    %v368 = vrsqrt.pop %v352
    %v369 = vrsqrt.pop %v353
    %v370 = vrsqrt.pop %v354
    %v371 = vrsqrt.pop %v355
    %v372 = vrsqrt.pop %v356
    %v373 = vrsqrt.pop %v357
    %v374 = vrsqrt.pop %v358
    %v375 = vrsqrt.pop %v359
    %v376 = vrsqrt.pop %v360
    %v377 = vrsqrt.pop %v361
    %v378 = vrsqrt.pop %v362
    %v379 = vrsqrt.pop %v363
    %v380 = vmul.f32 %v268, %v364
    %v381 = vmul.f32 %v269, %v365
    %v382 = vmul.f32 %v270, %v366
    %v383 = vmul.f32 %v271, %v367
    %v384 = vmul.f32 %v272, %v368
    %v385 = vmul.f32 %v273, %v369
    %v386 = vmul.f32 %v274, %v370
    %v387 = vmul.f32 %v275, %v371
    %v388 = vmul.f32 %v276, %v372
    %v389 = vmul.f32 %v277, %v373
    %v390 = vmul.f32 %v278, %v374
    %v391 = vmul.f32 %v279, %v375
    %v392 = vmul.f32 %v280, %v376
    %v393 = vmul.f32 %v281, %v377
    %v394 = vmul.f32 %v282, %v378
    %v395 = vmul.f32 %v283, %v379
    %v396 = vpack.c.bf16 %v381, %v380
    %v397 = vpack.c.bf16 %v383, %v382
    %v398 = vpack.c.bf16 %v385, %v384
    %v399 = vpack.c.bf16 %v387, %v386
    %v400 = vpack.c.bf16 %v389, %v388
    %v401 = vpack.c.bf16 %v391, %v390
    %v402 = vpack.c.bf16 %v393, %v392
    %v403 = vpack.c.bf16 %v395, %v394
    %v404 = vld [vmem:[#allocation7] sm:$0xff]
    %v405 = vld [vmem:[#allocation7 + $0x8] sm:$0xf]
    %v406 = vld [vmem:[#allocation7 + $0xc] sm:$0xff]
    %v407 = vld [vmem:[#allocation7 + $0x14] sm:$0xf]
    %v408 = vld [vmem:[#allocation7 + $0x18] sm:$0xff]
    %v409 = vld [vmem:[#allocation7 + $0x20] sm:$0xf]
    %v410 = vld [vmem:[#allocation7 + $0x24] sm:$0xff]
    %v411 = vld [vmem:[#allocation7 + $0x2c] sm:$0xf]
    %v412 = vld [vmem:[#allocation7 + $0x30] sm:$0xff]
    %v413 = vld [vmem:[#allocation7 + $0x38] sm:$0xf]
    %v414 = vld [vmem:[#allocation7 + $0x3c] sm:$0xff]
    %v415 = vld [vmem:[#allocation7 + $0x44] sm:$0xf]
    %v416 = vld [vmem:[#allocation7 + $0x48] sm:$0xff]
    %v417 = vld [vmem:[#allocation7 + $0x50] sm:$0xf]
    %v418 = vld [vmem:[#allocation7 + $0x54] sm:$0xff]
    %v419 = vld [vmem:[#allocation7 + $0x5c] sm:$0xf]
    %v420 = vld [vmem:[#allocation7 + $0x60] sm:$0xff]
    %v421 = vld [vmem:[#allocation7 + $0x68] sm:$0xf]
    %v422 = vld [vmem:[#allocation7 + $0x6c] sm:$0xff]
    %v423 = vld [vmem:[#allocation7 + $0x74] sm:$0xf]
    %v424 = vld [vmem:[#allocation7 + $0x78] sm:$0xff]
    %v425 = vld [vmem:[#allocation7 + $0x80] sm:$0xf]
    %v426 = vld [vmem:[#allocation7 + $0x84] sm:$0xff]
    %v427 = vld [vmem:[#allocation7 + $0x8c] sm:$0xf]
    %v428 = vld [vmem:[#allocation7 + $0x90] sm:$0xff]
    %v429 = vld [vmem:[#allocation7 + $0x98] sm:$0xf]
    %v430 = vld [vmem:[#allocation7 + $0x9c] sm:$0xff]
    %v431 = vld [vmem:[#allocation7 + $0xa4] sm:$0xf]
    %v432 = vld [vmem:[#allocation7 + $0xa8] sm:$0xff]
    %v433 = vld [vmem:[#allocation7 + $0xb0] sm:$0xf]
    %v434 = vld [vmem:[#allocation7 + $0xb4] sm:$0xff]
    %v435 = vld [vmem:[#allocation7 + $0xbc] sm:$0xf]
    %v468 = vunpack.c.l.b16 %v404
    %v469 = vunpack.c.h.b16 %v404
    %v470 = vunpack.c.l.b16 %v405
    %v471 = vunpack.c.l.b16 %v406
    %v472 = vunpack.c.h.b16 %v406
    %v473 = vunpack.c.l.b16 %v407
    %v474 = vunpack.c.l.b16 %v408
    %v475 = vunpack.c.h.b16 %v408
    %v476 = vunpack.c.l.b16 %v409
    %v477 = vunpack.c.l.b16 %v410
    %v478 = vunpack.c.h.b16 %v410
    %v479 = vunpack.c.l.b16 %v411
    %v480 = vunpack.c.l.b16 %v412
    %v481 = vunpack.c.h.b16 %v412
    %v482 = vunpack.c.l.b16 %v413
    %v483 = vunpack.c.l.b16 %v414
    %v484 = vunpack.c.h.b16 %v414
    %v485 = vunpack.c.l.b16 %v415
    %v486 = vunpack.c.l.b16 %v416
    %v487 = vunpack.c.h.b16 %v416
    %v488 = vunpack.c.l.b16 %v417
    %v489 = vunpack.c.l.b16 %v418
    %v490 = vunpack.c.h.b16 %v418
    %v491 = vunpack.c.l.b16 %v419
    %v492 = vunpack.c.l.b16 %v420
    %v493 = vunpack.c.h.b16 %v420
    %v494 = vunpack.c.l.b16 %v421
    %v495 = vunpack.c.l.b16 %v422
    %v496 = vunpack.c.h.b16 %v422
    %v497 = vunpack.c.l.b16 %v423
    %v498 = vunpack.c.l.b16 %v424
    %v499 = vunpack.c.h.b16 %v424
    %v500 = vunpack.c.l.b16 %v425
    %v501 = vunpack.c.l.b16 %v426
    %v502 = vunpack.c.h.b16 %v426
    %v503 = vunpack.c.l.b16 %v427
    %v504 = vunpack.c.l.b16 %v428
    %v505 = vunpack.c.h.b16 %v428
    %v506 = vunpack.c.l.b16 %v429
    %v507 = vunpack.c.l.b16 %v430
    %v508 = vunpack.c.h.b16 %v430
    %v509 = vunpack.c.l.b16 %v431
    %v510 = vunpack.c.l.b16 %v432
    %v511 = vunpack.c.h.b16 %v432
    %v512 = vunpack.c.l.b16 %v433
    %v513 = vunpack.c.l.b16 %v434
    %v514 = vunpack.c.h.b16 %v434
    %v515 = vunpack.c.l.b16 %v435
    %v516 = vpack.c.b16 %v471, %v468
    %v517 = vpack.c.b16 %v472, %v469
    %v518 = vpack.c.b16 %v473, %v470
    %v519 = vpack.c.b16 %v477, %v474
    %v520 = vpack.c.b16 %v478, %v475
    %v521 = vpack.c.b16 %v479, %v476
    %v522 = vpack.c.b16 %v483, %v480
    %v523 = vpack.c.b16 %v484, %v481
    %v524 = vpack.c.b16 %v485, %v482
    %v525 = vpack.c.b16 %v489, %v486
    %v526 = vpack.c.b16 %v490, %v487
    %v527 = vpack.c.b16 %v491, %v488
    %v528 = vpack.c.b16 %v495, %v492
    %v529 = vpack.c.b16 %v496, %v493
    %v530 = vpack.c.b16 %v497, %v494
    %v531 = vpack.c.b16 %v501, %v498
    %v532 = vpack.c.b16 %v502, %v499
    %v533 = vpack.c.b16 %v503, %v500
    %v534 = vpack.c.b16 %v507, %v504
    %v535 = vpack.c.b16 %v508, %v505
    %v536 = vpack.c.b16 %v509, %v506
    %v537 = vpack.c.b16 %v513, %v510
    %v538 = vpack.c.b16 %v514, %v511
    %v539 = vpack.c.b16 %v515, %v512
    %564 = vmatprep.subr.bf16.mxu0 %v538
    %565 = vmatpush1.bf16.msra.mxu0 %v537
    %566 = vmatprep.subr.bf16.mxu0 %v535
    %567 = vmatpush1.bf16.msra.mxu0 %v534
    %568 = vmatprep.subr.bf16.mxu0 %v532
    %569 = vmatpush1.bf16.msra.mxu0 %v531
    %570 = vmatprep.subr.bf16.mxu0 %v529
    %571 = vmatpush1.bf16.msra.mxu0 %v528
    %572 = vmatprep.subr.bf16.mxu0 %v526
    %573 = vmatpush1.bf16.msra.mxu0 %v525
    %574 = vmatprep.subr.bf16.mxu0 %v523
    %575 = vmatpush1.bf16.msra.mxu0 %v522
    %576 = vmatprep.subr.bf16.mxu0 %v520
    %577 = vmatpush1.bf16.msra.mxu0 %v519
    %578 = vmatprep.subr.bf16.mxu0 %v517
    %579 = vmatpush1.bf16.msra.mxu0 %v516
    %580 = vmatprep.subr.bf16.mxu0 0
    %581 = vmatpush2.bf16.msra.mxu0 0
    %582 = vmatprep.subr.bf16.mxu0 0
    %583 = vmatpush2.bf16.msra.mxu0 0
    %584 = vmatprep.subr.bf16.mxu0 0
    %585 = vmatpush2.bf16.msra.mxu0 0
    %586 = vmatprep.subr.bf16.mxu0 0
    %587 = vmatpush2.bf16.msra.mxu0 0
    %588 = vmatprep.subr.bf16.mxu0 0
    %589 = vmatpush2.bf16.msra.mxu0 0
    %590 = vmatprep.subr.bf16.mxu0 0
    %591 = vmatpush2.bf16.msra.mxu0 0
    %592 = vmatprep.subr.bf16.mxu0 0
    %593 = vmatpush2.bf16.msra.mxu0 0
    %594 = vmatprep.subr.bf16.mxu0 0
    %595 = vmatpush2.bf16.msra.mxu0 0
    %596 = vmatprep.mubr.bf16.mxu0 0
    %597 = vmatmul.mubr.bf16.gmra.mxu0 %v396
    %v598 = vpop.f32.mrf.mxu0
    %v599 = vadd.f32 0.0, %v598
    %v600 = vpop.f32.mrf.mxu0
    %v601 = vadd.f32 0.0, %v600
    %v602 = vpop.f32.mrf.mxu0
    %v603 = vadd.f32 0.0, %v602
    %v604 = vpop.f32.mrf.mxu0
    %v605 = vadd.f32 0.0, %v604
    %606 = vmatprep.mubr.bf16.mxu0 0
    %607 = vmatmul.mubr.bf16.gmra.mxu0 %v397
    %v608 = vpop.f32.mrf.mxu0
    %v609 = vadd.f32 0.0, %v608
    %v610 = vpop.f32.mrf.mxu0
    %v611 = vadd.f32 0.0, %v610
    %v612 = vpop.f32.mrf.mxu0
    %v613 = vadd.f32 0.0, %v612
    %v614 = vpop.f32.mrf.mxu0
    %v615 = vadd.f32 0.0, %v614
    %616 = vmatprep.mubr.bf16.mxu0 0
    %617 = vmatmul.mubr.bf16.gmra.mxu0 %v398
    %v618 = vpop.f32.mrf.mxu0
    %v619 = vadd.f32 0.0, %v618
    %v620 = vpop.f32.mrf.mxu0
    %v621 = vadd.f32 0.0, %v620
    %v622 = vpop.f32.mrf.mxu0
    %v623 = vadd.f32 0.0, %v622
    %v624 = vpop.f32.mrf.mxu0
    %v625 = vadd.f32 0.0, %v624
    %626 = vmatprep.mubr.bf16.mxu0 0
    %627 = vmatmul.mubr.bf16.gmra.mxu0 %v399
    %v628 = vpop.f32.mrf.mxu0
    %v629 = vadd.f32 0.0, %v628
    %v630 = vpop.f32.mrf.mxu0
    %v631 = vadd.f32 0.0, %v630
    %v632 = vpop.f32.mrf.mxu0
    %v633 = vadd.f32 0.0, %v632
    %v634 = vpop.f32.mrf.mxu0
    %v635 = vadd.f32 0.0, %v634
    %636 = vmatprep.mubr.bf16.mxu0 0
    %637 = vmatmul.mubr.bf16.gmra.mxu0 %v400
    %v638 = vpop.f32.mrf.mxu0
    %v639 = vadd.f32 0.0, %v638
    %v640 = vpop.f32.mrf.mxu0
    %v641 = vadd.f32 0.0, %v640
    %v642 = vpop.f32.mrf.mxu0
    %v643 = vadd.f32 0.0, %v642
    %v644 = vpop.f32.mrf.mxu0
    %v645 = vadd.f32 0.0, %v644
    %646 = vmatprep.mubr.bf16.mxu0 0
    %647 = vmatmul.mubr.bf16.gmra.mxu0 %v401
    %v648 = vpop.f32.mrf.mxu0
    %v649 = vadd.f32 0.0, %v648
    %v650 = vpop.f32.mrf.mxu0
    %v651 = vadd.f32 0.0, %v650
    %v652 = vpop.f32.mrf.mxu0
    %v653 = vadd.f32 0.0, %v652
    %v654 = vpop.f32.mrf.mxu0
    %v655 = vadd.f32 0.0, %v654
    %656 = vmatprep.mubr.bf16.mxu0 0
    %657 = vmatmul.mubr.bf16.gmra.mxu0 %v402
    %v658 = vpop.f32.mrf.mxu0
    %v659 = vadd.f32 0.0, %v658
    %v660 = vpop.f32.mrf.mxu0
    %v661 = vadd.f32 0.0, %v660
    %v662 = vpop.f32.mrf.mxu0
    %v663 = vadd.f32 0.0, %v662
    %v664 = vpop.f32.mrf.mxu0
    %v665 = vadd.f32 0.0, %v664
    %666 = vmatprep.mubr.bf16.mxu0 0
    %667 = vmatmul.mubr.bf16.gmra.mxu0 %v403
    %v668 = vpop.f32.mrf.mxu0
    %v669 = vadd.f32 0.0, %v668
    %v670 = vpop.f32.mrf.mxu0
    %v671 = vadd.f32 0.0, %v670
    %v672 = vpop.f32.mrf.mxu0
    %v673 = vadd.f32 0.0, %v672
    %v674 = vpop.f32.mrf.mxu0
    %v675 = vadd.f32 0.0, %v674
    %676 = vdwg.mxu0
    %677 = vmatprep.subr.bf16.mxu0 0
    %678 = vmatpush1.bf16.msra.mxu0 %v539
    %679 = vmatprep.subr.bf16.mxu0 0
    %680 = vmatpush1.bf16.msra.mxu0 %v536
    %681 = vmatprep.subr.bf16.mxu0 0
    %682 = vmatpush1.bf16.msra.mxu0 %v533
    %683 = vmatprep.subr.bf16.mxu0 0
    %684 = vmatpush1.bf16.msra.mxu0 %v530
    %685 = vmatprep.subr.bf16.mxu0 0
    %686 = vmatpush1.bf16.msra.mxu0 %v527
    %687 = vmatprep.subr.bf16.mxu0 0
    %688 = vmatpush1.bf16.msra.mxu0 %v524
    %689 = vmatprep.subr.bf16.mxu0 0
    %690 = vmatpush1.bf16.msra.mxu0 %v521
    %691 = vmatprep.subr.bf16.mxu0 0
    %692 = vmatpush1.bf16.msra.mxu0 %v518
    %693 = vmatprep.subr.bf16.mxu0 0
    %694 = vmatpush2.bf16.msra.mxu0 0
    %695 = vmatprep.subr.bf16.mxu0 0
    %696 = vmatpush2.bf16.msra.mxu0 0
    %697 = vmatprep.subr.bf16.mxu0 0
    %698 = vmatpush2.bf16.msra.mxu0 0
    %699 = vmatprep.subr.bf16.mxu0 0
    %700 = vmatpush2.bf16.msra.mxu0 0
    %701 = vmatprep.subr.bf16.mxu0 0
    %702 = vmatpush2.bf16.msra.mxu0 0
    %703 = vmatprep.subr.bf16.mxu0 0
    %704 = vmatpush2.bf16.msra.mxu0 0
    %705 = vmatprep.subr.bf16.mxu0 0
    %706 = vmatpush2.bf16.msra.mxu0 0
    %707 = vmatprep.subr.bf16.mxu0 0
    %708 = vmatpush2.bf16.msra.mxu0 0
    %709 = vmatprep.mubr.bf16.mxu0 0
    %710 = vmatmul.mubr.bf16.gmra.mxu0 %v396
    %v711 = vpop.f32.mrf.mxu0
    %v712 = vadd.f32 0.0, %v711
    %v713 = vpop.f32.mrf.mxu0
    %v714 = vpop.f32.mrf.mxu0
    %v715 = vadd.f32 0.0, %v714
    %v716 = vpop.f32.mrf.mxu0
    %717 = vmatprep.mubr.bf16.mxu0 0
    %718 = vmatmul.mubr.bf16.gmra.mxu0 %v397
    %v719 = vpop.f32.mrf.mxu0
    %v720 = vadd.f32 0.0, %v719
    %v721 = vpop.f32.mrf.mxu0
    %v722 = vpop.f32.mrf.mxu0
    %v723 = vadd.f32 0.0, %v722
    %v724 = vpop.f32.mrf.mxu0
    %725 = vmatprep.mubr.bf16.mxu0 0
    %726 = vmatmul.mubr.bf16.gmra.mxu0 %v398
    %v727 = vpop.f32.mrf.mxu0
    %v728 = vadd.f32 0.0, %v727
    %v729 = vpop.f32.mrf.mxu0
    %v730 = vpop.f32.mrf.mxu0
    %v731 = vadd.f32 0.0, %v730
    %v732 = vpop.f32.mrf.mxu0
    %733 = vmatprep.mubr.bf16.mxu0 0
    %734 = vmatmul.mubr.bf16.gmra.mxu0 %v399
    %v735 = vpop.f32.mrf.mxu0
    %v736 = vadd.f32 0.0, %v735
    %v737 = vpop.f32.mrf.mxu0
    %v738 = vpop.f32.mrf.mxu0
    %v739 = vadd.f32 0.0, %v738
    %v740 = vpop.f32.mrf.mxu0
    %741 = vmatprep.mubr.bf16.mxu0 0
    %742 = vmatmul.mubr.bf16.gmra.mxu0 %v400
    %v743 = vpop.f32.mrf.mxu0
    %v744 = vadd.f32 0.0, %v743
    %v745 = vpop.f32.mrf.mxu0
    %v746 = vpop.f32.mrf.mxu0
    %v747 = vadd.f32 0.0, %v746
    %v748 = vpop.f32.mrf.mxu0
    %749 = vmatprep.mubr.bf16.mxu0 0
    %750 = vmatmul.mubr.bf16.gmra.mxu0 %v401
    %v751 = vpop.f32.mrf.mxu0
    %v752 = vadd.f32 0.0, %v751
    %v753 = vpop.f32.mrf.mxu0
    %v754 = vpop.f32.mrf.mxu0
    %v755 = vadd.f32 0.0, %v754
    %v756 = vpop.f32.mrf.mxu0
    %757 = vmatprep.mubr.bf16.mxu0 0
    %758 = vmatmul.mubr.bf16.gmra.mxu0 %v402
    %v759 = vpop.f32.mrf.mxu0
    %v760 = vadd.f32 0.0, %v759
    %v761 = vpop.f32.mrf.mxu0
    %v762 = vpop.f32.mrf.mxu0
    %v763 = vadd.f32 0.0, %v762
    %v764 = vpop.f32.mrf.mxu0
    %765 = vmatprep.mubr.bf16.mxu0 0
    %766 = vmatmul.mubr.bf16.gmra.mxu0 %v403
    %v767 = vpop.f32.mrf.mxu0
    %v768 = vadd.f32 0.0, %v767
    %v769 = vpop.f32.mrf.mxu0
    %v770 = vpop.f32.mrf.mxu0
    %v771 = vadd.f32 0.0, %v770
    %v772 = vpop.f32.mrf.mxu0
    %773 = vdwg.mxu0
    %v774 = vpack.c.bf16 %v603, %v599
    %v775 = vpack.c.bf16 %v613, %v609
    %v776 = vpack.c.bf16 %v623, %v619
    %v777 = vpack.c.bf16 %v633, %v629
    %v778 = vpack.c.bf16 %v643, %v639
    %v779 = vpack.c.bf16 %v653, %v649
    %v780 = vpack.c.bf16 %v663, %v659
    %v781 = vpack.c.bf16 %v673, %v669
    %v782 = vpack.c.bf16 %v605, %v601
    %v783 = vpack.c.bf16 %v615, %v611
    %v784 = vpack.c.bf16 %v625, %v621
    %v785 = vpack.c.bf16 %v635, %v631
    %v786 = vpack.c.bf16 %v645, %v641
    %v787 = vpack.c.bf16 %v655, %v651
    %v788 = vpack.c.bf16 %v665, %v661
    %v789 = vpack.c.bf16 %v675, %v671
    %790 = vmatprep.subr.bf16.mxu0 0
    %791 = vmatpush1.bf16.xpose.msra.mxu0 0
    %792 = vmatprep.subr.bf16.mxu0 0
    %793 = vmatpush1.bf16.xpose.msra.mxu0 0
    %794 = vmatprep.subr.bf16.mxu0 0
    %795 = vmatpush1.bf16.xpose.msra.mxu0 0
    %796 = vmatprep.subr.bf16.mxu0 0
    %797 = vmatpush1.bf16.xpose.msra.mxu0 0
    %798 = vmatprep.subr.bf16.mxu0 0
    %799 = vmatpush1.bf16.xpose.msra.mxu0 %v785
    %800 = vmatprep.subr.bf16.mxu0 0
    %801 = vmatpush1.bf16.xpose.msra.mxu0 %v784
    %802 = vmatprep.subr.bf16.mxu0 0
    %803 = vmatpush1.bf16.xpose.msra.mxu0 %v783
    %804 = vmatprep.subr.bf16.mxu0 0
    %805 = vmatpush1.bf16.xpose.msra.mxu0 %v782
    %806 = vmatprep.subr.bf16.mxu0 0
    %807 = vmatpush2.bf16.xpose.msra.mxu0 0
    %808 = vmatprep.subr.bf16.mxu0 0
    %809 = vmatpush2.bf16.xpose.msra.mxu0 0
    %810 = vmatprep.subr.bf16.mxu0 0
    %811 = vmatpush2.bf16.xpose.msra.mxu0 0
    %812 = vmatprep.subr.bf16.mxu0 0
    %813 = vmatpush2.bf16.xpose.msra.mxu0 0
    %814 = vmatprep.subr.bf16.mxu0 0
    %815 = vmatpush2.bf16.xpose.msra.mxu0 0
    %816 = vmatprep.subr.bf16.mxu0 0
    %817 = vmatpush2.bf16.xpose.msra.mxu0 0
    %818 = vmatprep.subr.bf16.mxu0 0
    %819 = vmatpush2.bf16.xpose.msra.mxu0 0
    %820 = vmatprep.subr.bf16.mxu0 0
    %821 = vmatpush2.bf16.xpose.msra.mxu0 0
    %822 = vmatprep.mubr.bf16.mxu0 0
    %823 = vmatmul.mubr.bf16.gmra.mxu0 %v774
    %v824 = vpop.f32.mrf.mxu0
    %v825 = vadd.f32 0.0, %v824
    %v826 = vpop.f32.mrf.mxu0
    %v827 = vpop.f32.mrf.mxu0
    %v828 = vadd.f32 0.0, %v827
    %v829 = vpop.f32.mrf.mxu0
    %830 = vmatprep.mubr.bf16.mxu0 0
    %831 = vmatmul.mubr.bf16.gmra.mxu0 %v775
    %v832 = vpop.f32.mrf.mxu0
    %v833 = vadd.f32 0.0, %v832
    %v834 = vpop.f32.mrf.mxu0
    %v835 = vpop.f32.mrf.mxu0
    %v836 = vadd.f32 0.0, %v835
    %v837 = vpop.f32.mrf.mxu0
    %838 = vmatprep.mubr.bf16.mxu0 0
    %839 = vmatmul.mubr.bf16.gmra.mxu0 %v776
    %v840 = vpop.f32.mrf.mxu0
    %v841 = vadd.f32 0.0, %v840
    %v842 = vpop.f32.mrf.mxu0
    %v843 = vpop.f32.mrf.mxu0
    %v844 = vadd.f32 0.0, %v843
    %v845 = vpop.f32.mrf.mxu0
    %846 = vmatprep.mubr.bf16.mxu0 0
    %847 = vmatmul.mubr.bf16.gmra.mxu0 %v777
    %v848 = vpop.f32.mrf.mxu0
    %v849 = vadd.f32 0.0, %v848
    %v850 = vpop.f32.mrf.mxu0
    %v851 = vpop.f32.mrf.mxu0
    %v852 = vadd.f32 0.0, %v851
    %v853 = vpop.f32.mrf.mxu0
    %854 = vdwg.mxu0
    %855 = vmatprep.subr.bf16.mxu0 0
    %856 = vmatpush1.bf16.xpose.msra.mxu0 0
    %857 = vmatprep.subr.bf16.mxu0 0
    %858 = vmatpush1.bf16.xpose.msra.mxu0 0
    %859 = vmatprep.subr.bf16.mxu0 0
    %860 = vmatpush1.bf16.xpose.msra.mxu0 0
    %861 = vmatprep.subr.bf16.mxu0 0
    %862 = vmatpush1.bf16.xpose.msra.mxu0 0
    %863 = vmatprep.subr.bf16.mxu0 0
    %864 = vmatpush1.bf16.xpose.msra.mxu0 %v789
    %865 = vmatprep.subr.bf16.mxu0 0
    %866 = vmatpush1.bf16.xpose.msra.mxu0 %v788
    %867 = vmatprep.subr.bf16.mxu0 0
    %868 = vmatpush1.bf16.xpose.msra.mxu0 %v787
    %869 = vmatprep.subr.bf16.mxu0 0
    %870 = vmatpush1.bf16.xpose.msra.mxu0 %v786
    %871 = vmatprep.subr.bf16.mxu0 0
    %872 = vmatpush2.bf16.xpose.msra.mxu0 0
    %873 = vmatprep.subr.bf16.mxu0 0
    %874 = vmatpush2.bf16.xpose.msra.mxu0 0
    %875 = vmatprep.subr.bf16.mxu0 0
    %876 = vmatpush2.bf16.xpose.msra.mxu0 0
    %877 = vmatprep.subr.bf16.mxu0 0
    %878 = vmatpush2.bf16.xpose.msra.mxu0 0
    %879 = vmatprep.subr.bf16.mxu0 0
    %880 = vmatpush2.bf16.xpose.msra.mxu0 0
    %881 = vmatprep.subr.bf16.mxu0 0
    %882 = vmatpush2.bf16.xpose.msra.mxu0 0
    %883 = vmatprep.subr.bf16.mxu0 0
    %884 = vmatpush2.bf16.xpose.msra.mxu0 0
    %885 = vmatprep.subr.bf16.mxu0 0
    %886 = vmatpush2.bf16.xpose.msra.mxu0 0
    %887 = vmatprep.mubr.bf16.mxu0 0
    %888 = vmatmul.mubr.bf16.gmra.mxu0 %v778
    %v889 = vpop.f32.mrf.mxu0
    %v890 = vadd.f32 0.0, %v889
    %v891 = vpop.f32.mrf.mxu0
    %v892 = vpop.f32.mrf.mxu0
    %v893 = vadd.f32 0.0, %v892
    %v894 = vpop.f32.mrf.mxu0
    %895 = vmatprep.mubr.bf16.mxu0 0
    %896 = vmatmul.mubr.bf16.gmra.mxu0 %v779
    %v897 = vpop.f32.mrf.mxu0
    %v898 = vadd.f32 0.0, %v897
    %v899 = vpop.f32.mrf.mxu0
    %v900 = vpop.f32.mrf.mxu0
    %v901 = vadd.f32 0.0, %v900
    %v902 = vpop.f32.mrf.mxu0
    %903 = vmatprep.mubr.bf16.mxu0 0
    %904 = vmatmul.mubr.bf16.gmra.mxu0 %v780
    %v905 = vpop.f32.mrf.mxu0
    %v906 = vadd.f32 0.0, %v905
    %v907 = vpop.f32.mrf.mxu0
    %v908 = vpop.f32.mrf.mxu0
    %v909 = vadd.f32 0.0, %v908
    %v910 = vpop.f32.mrf.mxu0
    %911 = vmatprep.mubr.bf16.mxu0 0
    %912 = vmatmul.mubr.bf16.gmra.mxu0 %v781
    %v913 = vpop.f32.mrf.mxu0
    %v914 = vadd.f32 0.0, %v913
    %v915 = vpop.f32.mrf.mxu0
    %v916 = vpop.f32.mrf.mxu0
    %v917 = vadd.f32 0.0, %v916
    %v918 = vpop.f32.mrf.mxu0
    %919 = vdwg.mxu0
    %v920 = vmul.f32 %v825, 0.088388346
    %v921 = vmul.f32 %v828, 0.088388346
    %v922 = vmul.f32 %v833, 0.088388346
    %v923 = vmul.f32 %v836, 0.088388346
    %v924 = vmul.f32 %v841, 0.088388346
    %v925 = vmul.f32 %v844, 0.088388346
    %v926 = vmul.f32 %v849, 0.088388346
    %v927 = vmul.f32 %v852, 0.088388346
    %v928 = vmul.f32 %v890, 0.088388346
    %v929 = vmul.f32 %v893, 0.088388346
    %v930 = vmul.f32 %v898, 0.088388346
    %v931 = vmul.f32 %v901, 0.088388346
    %v932 = vmul.f32 %v906, 0.088388346
    %v933 = vmul.f32 %v909, 0.088388346
    %v934 = vmul.f32 %v914, 0.088388346
    %v935 = vmul.f32 %v917, 0.088388346
    %vm936 = vcmask 523264
    %v937 = vsel %vm936, %v920, -inf
    %938 = vmax.xlane.f32.xlu0 %v937
    %v939 = vpop.xlane.xlu0 %938
    %v940 = vsel %vm936, %v921, -inf
    %941 = vmax.xlane.f32.xlu0 %v940
    %v942 = vpop.xlane.xlu0 %941
    %v943 = vsel %vm936, %v922, -inf
    %944 = vmax.xlane.f32.xlu0 %v943
    %v945 = vpop.xlane.xlu0 %944
    %v946 = vsel %vm936, %v923, -inf
    %947 = vmax.xlane.f32.xlu0 %v946
    %v948 = vpop.xlane.xlu0 %947
    %v949 = vsel %vm936, %v924, -inf
    %950 = vmax.xlane.f32.xlu0 %v949
    %v951 = vpop.xlane.xlu0 %950
    %v952 = vsel %vm936, %v925, -inf
    %953 = vmax.xlane.f32.xlu0 %v952
    %v954 = vpop.xlane.xlu0 %953
    %v955 = vsel %vm936, %v926, -inf
    %956 = vmax.xlane.f32.xlu0 %v955
    %v957 = vpop.xlane.xlu0 %956
    %v958 = vsel %vm936, %v927, -inf
    %959 = vmax.xlane.f32.xlu0 %v958
    %v960 = vpop.xlane.xlu0 %959
    %v961 = vsel %vm936, %v928, -inf
    %962 = vmax.xlane.f32.xlu0 %v961
    %v963 = vpop.xlane.xlu0 %962
    %v964 = vsel %vm936, %v929, -inf
    %965 = vmax.xlane.f32.xlu0 %v964
    %v966 = vpop.xlane.xlu0 %965
    %v967 = vsel %vm936, %v930, -inf
    %968 = vmax.xlane.f32.xlu0 %v967
    %v969 = vpop.xlane.xlu0 %968
    %v970 = vsel %vm936, %v931, -inf
    %971 = vmax.xlane.f32.xlu0 %v970
    %v972 = vpop.xlane.xlu0 %971
    %v973 = vsel %vm936, %v932, -inf
    %974 = vmax.xlane.f32.xlu0 %v973
    %v975 = vpop.xlane.xlu0 %974
    %v976 = vsel %vm936, %v933, -inf
    %977 = vmax.xlane.f32.xlu0 %v976
    %v978 = vpop.xlane.xlu0 %977
    %v979 = vsel %vm936, %v934, -inf
    %980 = vmax.xlane.f32.xlu0 %v979
    %v981 = vpop.xlane.xlu0 %980
    %v982 = vsel %vm936, %v935, -inf
    %983 = vmax.xlane.f32.xlu0 %v982
    %v984 = vpop.xlane.xlu0 %983
    %v985 = vsub.f32 %v920, %v939
    %v986 = vsub.f32 %v921, %v942
    %v987 = vsub.f32 %v922, %v945
    %v988 = vsub.f32 %v923, %v948
    %v989 = vsub.f32 %v924, %v951
    %v990 = vsub.f32 %v925, %v954
    %v991 = vsub.f32 %v926, %v957
    %v992 = vsub.f32 %v927, %v960
    %v993 = vsub.f32 %v928, %v963
    %v994 = vsub.f32 %v929, %v966
    %v995 = vsub.f32 %v930, %v969
    %v996 = vsub.f32 %v931, %v972
    %v997 = vsub.f32 %v932, %v975
    %v998 = vsub.f32 %v933, %v978
    %v999 = vsub.f32 %v934, %v981
    %v1000 = vsub.f32 %v935, %v984
    %v1001 = vmul.f32 %v985, 1.442695
    %v1002 = vpow.pop %v1001
    %v1003 = vmul.f32 %v986, 1.442695
    %v1004 = vpow.pop %v1003
    %v1005 = vmul.f32 %v987, 1.442695
    %v1006 = vpow.pop %v1005
    %v1007 = vmul.f32 %v988, 1.442695
    %v1008 = vpow.pop %v1007
    %v1009 = vmul.f32 %v989, 1.442695
    %v1010 = vpow.pop %v1009
    %v1011 = vmul.f32 %v990, 1.442695
    %v1012 = vpow.pop %v1011
    %v1013 = vmul.f32 %v991, 1.442695
    %v1014 = vpow.pop %v1013
    %v1015 = vmul.f32 %v992, 1.442695
    %v1016 = vpow.pop %v1015
    %v1017 = vmul.f32 %v993, 1.442695
    %v1018 = vpow.pop %v1017
    %v1019 = vmul.f32 %v994, 1.442695
    %v1020 = vpow.pop %v1019
    %v1021 = vmul.f32 %v995, 1.442695
    %v1022 = vpow.pop %v1021
    %v1023 = vmul.f32 %v996, 1.442695
    %v1024 = vpow.pop %v1023
    %v1025 = vmul.f32 %v997, 1.442695
    %v1026 = vpow.pop %v1025
    %v1027 = vmul.f32 %v998, 1.442695
    %v1028 = vpow.pop %v1027
    %v1029 = vmul.f32 %v999, 1.442695
    %v1030 = vpow.pop %v1029
    %v1031 = vmul.f32 %v1000, 1.442695
    %v1032 = vpow.pop %v1031
    %v1033 = vsel %vm936, %v1002, 0.0
    %1034 = vadd.xlane.f32.xlu0 %v1033
    %v1035 = vpop.xlane.xlu0 %1034
    %v1036 = vsel %vm936, %v1004, 0.0
    %1037 = vadd.xlane.f32.xlu0 %v1036
    %v1038 = vpop.xlane.xlu0 %1037
    %v1039 = vsel %vm936, %v1006, 0.0
    %1040 = vadd.xlane.f32.xlu0 %v1039
    %v1041 = vpop.xlane.xlu0 %1040
    %v1042 = vsel %vm936, %v1008, 0.0
    %1043 = vadd.xlane.f32.xlu0 %v1042
    %v1044 = vpop.xlane.xlu0 %1043
    %v1045 = vsel %vm936, %v1010, 0.0
    %1046 = vadd.xlane.f32.xlu0 %v1045
    %v1047 = vpop.xlane.xlu0 %1046
    %v1048 = vsel %vm936, %v1012, 0.0
    %1049 = vadd.xlane.f32.xlu0 %v1048
    %v1050 = vpop.xlane.xlu0 %1049
    %v1051 = vsel %vm936, %v1014, 0.0
    %1052 = vadd.xlane.f32.xlu0 %v1051
    %v1053 = vpop.xlane.xlu0 %1052
    %v1054 = vsel %vm936, %v1016, 0.0
    %1055 = vadd.xlane.f32.xlu0 %v1054
    %v1056 = vpop.xlane.xlu0 %1055
    %v1057 = vsel %vm936, %v1018, 0.0
    %1058 = vadd.xlane.f32.xlu0 %v1057
    %v1059 = vpop.xlane.xlu0 %1058
    %v1060 = vsel %vm936, %v1020, 0.0
    %1061 = vadd.xlane.f32.xlu0 %v1060
    %v1062 = vpop.xlane.xlu0 %1061
    %v1063 = vsel %vm936, %v1022, 0.0
    %1064 = vadd.xlane.f32.xlu0 %v1063
    %v1065 = vpop.xlane.xlu0 %1064
    %v1066 = vsel %vm936, %v1024, 0.0
    %1067 = vadd.xlane.f32.xlu0 %v1066
    %v1068 = vpop.xlane.xlu0 %1067
    %v1069 = vsel %vm936, %v1026, 0.0
    %1070 = vadd.xlane.f32.xlu0 %v1069
    %v1071 = vpop.xlane.xlu0 %1070
    %v1072 = vsel %vm936, %v1028, 0.0
    %1073 = vadd.xlane.f32.xlu0 %v1072
    %v1074 = vpop.xlane.xlu0 %1073
    %v1075 = vsel %vm936, %v1030, 0.0
    %1076 = vadd.xlane.f32.xlu0 %v1075
    %v1077 = vpop.xlane.xlu0 %1076
    %v1078 = vsel %vm936, %v1032, 0.0
    %1079 = vadd.xlane.f32.xlu0 %v1078
    %v1080 = vpop.xlane.xlu0 %1079
    %v1081 = vrcp.pop %v1035
    %v1082 = vrcp.pop %v1038
    %v1083 = vrcp.pop %v1041
    %v1084 = vrcp.pop %v1044
    %v1085 = vrcp.pop %v1047
    %v1086 = vrcp.pop %v1050
    %v1087 = vrcp.pop %v1053
    %v1088 = vrcp.pop %v1056
    %v1089 = vrcp.pop %v1059
    %v1090 = vrcp.pop %v1062
    %v1091 = vrcp.pop %v1065
    %v1092 = vrcp.pop %v1068
    %v1093 = vrcp.pop %v1071
    %v1094 = vrcp.pop %v1074
    %v1095 = vrcp.pop %v1077
    %v1096 = vrcp.pop %v1080
    %v1097 = vmul.f32 %v1002, %v1081
    %v1098 = vmul.f32 %v1004, %v1082
    %v1099 = vmul.f32 %v1006, %v1083
    %v1100 = vmul.f32 %v1008, %v1084
    %v1101 = vmul.f32 %v1010, %v1085
    %v1102 = vmul.f32 %v1012, %v1086
    %v1103 = vmul.f32 %v1014, %v1087
    %v1104 = vmul.f32 %v1016, %v1088
    %v1105 = vmul.f32 %v1018, %v1089
    %v1106 = vmul.f32 %v1020, %v1090
    %v1107 = vmul.f32 %v1022, %v1091
    %v1108 = vmul.f32 %v1024, %v1092
    %v1109 = vmul.f32 %v1026, %v1093
    %v1110 = vmul.f32 %v1028, %v1094
    %v1111 = vmul.f32 %v1030, %v1095
    %v1112 = vmul.f32 %v1032, %v1096
    %v1113 = vpack.c.bf16 %v1098, %v1097
    %v1114 = vpack.c.bf16 %v1100, %v1099
    %v1115 = vpack.c.bf16 %v1102, %v1101
    %v1116 = vpack.c.bf16 %v1104, %v1103
    %v1117 = vpack.c.bf16 %v1106, %v1105
    %v1118 = vpack.c.bf16 %v1108, %v1107
    %v1119 = vpack.c.bf16 %v1110, %v1109
    %v1120 = vpack.c.bf16 %v1112, %v1111
    %v1121 = vpack.c.bf16 %v715, %v712
    %v1122 = vpack.c.bf16 %v723, %v720
    %v1123 = vpack.c.bf16 %v731, %v728
    %v1124 = vpack.c.bf16 %v739, %v736
    %v1125 = vpack.c.bf16 %v747, %v744
    %v1126 = vpack.c.bf16 %v755, %v752
    %v1127 = vpack.c.bf16 %v763, %v760
    %v1128 = vpack.c.bf16 %v771, %v768
    %v1130 = vsel %vm936, %v1113, 0
    %v1133 = vsel %vm936, %v1114, 0
    %v1136 = vsel %vm936, %v1115, 0
    %v1139 = vsel %vm936, %v1116, 0
    %1141 = vmatprep.subr.bf16.mxu0 0
    %1142 = vmatpush1.bf16.msra.mxu0 0
    %1143 = vmatprep.subr.bf16.mxu0 0
    %1144 = vmatpush1.bf16.msra.mxu0 0
    %1145 = vmatprep.subr.bf16.mxu0 0
    %1146 = vmatpush1.bf16.msra.mxu0 0
    %1147 = vmatprep.subr.bf16.mxu0 0
    %1148 = vmatpush1.bf16.msra.mxu0 0
    %1149 = vmatprep.subr.bf16.mxu0 0
    %1150 = vmatpush1.bf16.msra.mxu0 %v1124
    %1151 = vmatprep.subr.bf16.mxu0 0
    %1152 = vmatpush1.bf16.msra.mxu0 %v1123
    %1153 = vmatprep.subr.bf16.mxu0 0
    %1154 = vmatpush1.bf16.msra.mxu0 %v1122
    %1155 = vmatprep.subr.bf16.mxu0 0
    %1156 = vmatpush1.bf16.msra.mxu0 %v1121
    %1157 = vmatprep.subr.bf16.mxu0 0
    %1158 = vmatpush2.bf16.msra.mxu0 0
    %1159 = vmatprep.subr.bf16.mxu0 0
    %1160 = vmatpush2.bf16.msra.mxu0 0
    %1161 = vmatprep.subr.bf16.mxu0 0
    %1162 = vmatpush2.bf16.msra.mxu0 0
    %1163 = vmatprep.subr.bf16.mxu0 0
    %1164 = vmatpush2.bf16.msra.mxu0 0
    %1165 = vmatprep.subr.bf16.mxu0 0
    %1166 = vmatpush2.bf16.msra.mxu0 0
    %1167 = vmatprep.subr.bf16.mxu0 0
    %1168 = vmatpush2.bf16.msra.mxu0 0
    %1169 = vmatprep.subr.bf16.mxu0 0
    %1170 = vmatpush2.bf16.msra.mxu0 0
    %1171 = vmatprep.subr.bf16.mxu0 0
    %1172 = vmatpush2.bf16.msra.mxu0 0
    %1173 = vmatprep.mubr.bf16.mxu0 0
    %1174 = vmatmul.mubr.bf16.gmra.mxu0 %v1130
    %v1175 = vpop.f32.mrf.mxu0
    %v1176 = vadd.f32 0.0, %v1175
    %v1177 = vpop.f32.mrf.mxu0
    %v1178 = vpop.f32.mrf.mxu0
    %v1179 = vadd.f32 0.0, %v1178
    %v1180 = vpop.f32.mrf.mxu0
    %1181 = vmatprep.mubr.bf16.mxu0 0
    %1182 = vmatmul.mubr.bf16.gmra.mxu0 %v1133
    %v1183 = vpop.f32.mrf.mxu0
    %v1184 = vadd.f32 0.0, %v1183
    %v1185 = vpop.f32.mrf.mxu0
    %v1186 = vpop.f32.mrf.mxu0
    %v1187 = vadd.f32 0.0, %v1186
    %v1188 = vpop.f32.mrf.mxu0
    %1189 = vmatprep.mubr.bf16.mxu0 0
    %1190 = vmatmul.mubr.bf16.gmra.mxu0 %v1136
    %v1191 = vpop.f32.mrf.mxu0
    %v1192 = vadd.f32 0.0, %v1191
    %v1193 = vpop.f32.mrf.mxu0
    %v1194 = vpop.f32.mrf.mxu0
    %v1195 = vadd.f32 0.0, %v1194
    %v1196 = vpop.f32.mrf.mxu0
    %1197 = vmatprep.mubr.bf16.mxu0 0
    %1198 = vmatmul.mubr.bf16.gmra.mxu0 %v1139
    %v1199 = vpop.f32.mrf.mxu0
    %v1200 = vadd.f32 0.0, %v1199
    %v1201 = vpop.f32.mrf.mxu0
    %v1202 = vpop.f32.mrf.mxu0
    %v1203 = vadd.f32 0.0, %v1202
    %v1204 = vpop.f32.mrf.mxu0
    %1205 = vdwg.mxu0
    %v1207 = vsel %vm936, %v1117, 0
    %v1210 = vsel %vm936, %v1118, 0
    %v1213 = vsel %vm936, %v1119, 0
    %v1216 = vsel %vm936, %v1120, 0
    %1218 = vmatprep.subr.bf16.mxu0 0
    %1219 = vmatpush1.bf16.msra.mxu0 0
    %1220 = vmatprep.subr.bf16.mxu0 0
    %1221 = vmatpush1.bf16.msra.mxu0 0
    %1222 = vmatprep.subr.bf16.mxu0 0
    %1223 = vmatpush1.bf16.msra.mxu0 0
    %1224 = vmatprep.subr.bf16.mxu0 0
    %1225 = vmatpush1.bf16.msra.mxu0 0
    %1226 = vmatprep.subr.bf16.mxu0 0
    %1227 = vmatpush1.bf16.msra.mxu0 %v1128
    %1228 = vmatprep.subr.bf16.mxu0 0
    %1229 = vmatpush1.bf16.msra.mxu0 %v1127
    %1230 = vmatprep.subr.bf16.mxu0 0
    %1231 = vmatpush1.bf16.msra.mxu0 %v1126
    %1232 = vmatprep.subr.bf16.mxu0 0
    %1233 = vmatpush1.bf16.msra.mxu0 %v1125
    %1234 = vmatprep.subr.bf16.mxu0 0
    %1235 = vmatpush2.bf16.msra.mxu0 0
    %1236 = vmatprep.subr.bf16.mxu0 0
    %1237 = vmatpush2.bf16.msra.mxu0 0
    %1238 = vmatprep.subr.bf16.mxu0 0
    %1239 = vmatpush2.bf16.msra.mxu0 0
    %1240 = vmatprep.subr.bf16.mxu0 0
    %1241 = vmatpush2.bf16.msra.mxu0 0
    %1242 = vmatprep.subr.bf16.mxu0 0
    %1243 = vmatpush2.bf16.msra.mxu0 0
    %1244 = vmatprep.subr.bf16.mxu0 0
    %1245 = vmatpush2.bf16.msra.mxu0 0
    %1246 = vmatprep.subr.bf16.mxu0 0
    %1247 = vmatpush2.bf16.msra.mxu0 0
    %1248 = vmatprep.subr.bf16.mxu0 0
    %1249 = vmatpush2.bf16.msra.mxu0 0
    %1250 = vmatprep.mubr.bf16.mxu0 0
    %1251 = vmatmul.mubr.bf16.gmra.mxu0 %v1207
    %v1252 = vpop.f32.mrf.mxu0
    %v1253 = vadd.f32 0.0, %v1252
    %v1254 = vpop.f32.mrf.mxu0
    %v1255 = vpop.f32.mrf.mxu0
    %v1256 = vadd.f32 0.0, %v1255
    %v1257 = vpop.f32.mrf.mxu0
    %1258 = vmatprep.mubr.bf16.mxu0 0
    %1259 = vmatmul.mubr.bf16.gmra.mxu0 %v1210
    %v1260 = vpop.f32.mrf.mxu0
    %v1261 = vadd.f32 0.0, %v1260
    %v1262 = vpop.f32.mrf.mxu0
    %v1263 = vpop.f32.mrf.mxu0
    %v1264 = vadd.f32 0.0, %v1263
    %v1265 = vpop.f32.mrf.mxu0
    %1266 = vmatprep.mubr.bf16.mxu0 0
    %1267 = vmatmul.mubr.bf16.gmra.mxu0 %v1213
    %v1268 = vpop.f32.mrf.mxu0
    %v1269 = vadd.f32 0.0, %v1268
    %v1270 = vpop.f32.mrf.mxu0
    %v1271 = vpop.f32.mrf.mxu0
    %v1272 = vadd.f32 0.0, %v1271
    %v1273 = vpop.f32.mrf.mxu0
    %1274 = vmatprep.mubr.bf16.mxu0 0
    %1275 = vmatmul.mubr.bf16.gmra.mxu0 %v1216
    %v1276 = vpop.f32.mrf.mxu0
    %v1277 = vadd.f32 0.0, %v1276
    %v1278 = vpop.f32.mrf.mxu0
    %v1279 = vpop.f32.mrf.mxu0
    %v1280 = vadd.f32 0.0, %v1279
    %v1281 = vpop.f32.mrf.mxu0
    %1282 = vdwg.mxu0
    %v1283 = vpack.c.bf16 %v1179, %v1176
    %v1284 = vpack.c.bf16 %v1187, %v1184
    %v1285 = vpack.c.bf16 %v1195, %v1192
    %v1286 = vpack.c.bf16 %v1203, %v1200
    %v1287 = vpack.c.bf16 %v1256, %v1253
    %v1288 = vpack.c.bf16 %v1264, %v1261
    %v1289 = vpack.c.bf16 %v1272, %v1269
    %v1290 = vpack.c.bf16 %v1280, %v1277
    %v1291 = vld [vmem:[#allocation8] sm:$0xf]
    %v1292 = vld [vmem:[#allocation8 + $0x4] sm:$0xf]
    %v1293 = vld [vmem:[#allocation8 + $0x8] sm:$0xf]
    %v1294 = vld [vmem:[#allocation8 + $0xc] sm:$0xf]
    %v1295 = vld [vmem:[#allocation8 + $0x10] sm:$0xf]
    %v1296 = vld [vmem:[#allocation8 + $0x14] sm:$0xf]
    %v1297 = vld [vmem:[#allocation8 + $0x18] sm:$0xf]
    %v1298 = vld [vmem:[#allocation8 + $0x1c] sm:$0xf]
    %v1299 = vld [vmem:[#allocation8 + $0x20] sm:$0xf]
    %v1300 = vld [vmem:[#allocation8 + $0x24] sm:$0xf]
    %v1301 = vld [vmem:[#allocation8 + $0x28] sm:$0xf]
    %v1302 = vld [vmem:[#allocation8 + $0x2c] sm:$0xf]
    %v1303 = vld [vmem:[#allocation8 + $0x30] sm:$0xf]
    %v1304 = vld [vmem:[#allocation8 + $0x34] sm:$0xf]
    %v1305 = vld [vmem:[#allocation8 + $0x38] sm:$0xf]
    %v1306 = vld [vmem:[#allocation8 + $0x3c] sm:$0xf]
    %v1323 = vunpack.c.l.b16 %v1291
    %v1324 = vunpack.c.l.b16 %v1292
    %v1325 = vunpack.c.l.b16 %v1293
    %v1326 = vunpack.c.l.b16 %v1294
    %v1327 = vunpack.c.l.b16 %v1295
    %v1328 = vunpack.c.l.b16 %v1296
    %v1329 = vunpack.c.l.b16 %v1297
    %v1330 = vunpack.c.l.b16 %v1298
    %v1331 = vunpack.c.l.b16 %v1299
    %v1332 = vunpack.c.l.b16 %v1300
    %v1333 = vunpack.c.l.b16 %v1301
    %v1334 = vunpack.c.l.b16 %v1302
    %v1335 = vunpack.c.l.b16 %v1303
    %v1336 = vunpack.c.l.b16 %v1304
    %v1337 = vunpack.c.l.b16 %v1305
    %v1338 = vunpack.c.l.b16 %v1306
    %v1339 = vpack.c.b16 %v1324, %v1323
    %v1340 = vpack.c.b16 %v1326, %v1325
    %v1341 = vpack.c.b16 %v1328, %v1327
    %v1342 = vpack.c.b16 %v1330, %v1329
    %v1343 = vpack.c.b16 %v1332, %v1331
    %v1344 = vpack.c.b16 %v1334, %v1333
    %v1345 = vpack.c.b16 %v1336, %v1335
    %v1346 = vpack.c.b16 %v1338, %v1337
    %1355 = vmatprep.subr.bf16.mxu0 0
    %1356 = vmatpush1.bf16.msra.mxu0 %v1346
    %1357 = vmatprep.subr.bf16.mxu0 0
    %1358 = vmatpush1.bf16.msra.mxu0 %v1345
    %1359 = vmatprep.subr.bf16.mxu0 0
    %1360 = vmatpush1.bf16.msra.mxu0 %v1344
    %1361 = vmatprep.subr.bf16.mxu0 0
    %1362 = vmatpush1.bf16.msra.mxu0 %v1343
    %1363 = vmatprep.subr.bf16.mxu0 0
    %1364 = vmatpush1.bf16.msra.mxu0 %v1342
    %1365 = vmatprep.subr.bf16.mxu0 0
    %1366 = vmatpush1.bf16.msra.mxu0 %v1341
    %1367 = vmatprep.subr.bf16.mxu0 0
    %1368 = vmatpush1.bf16.msra.mxu0 %v1340
    %1369 = vmatprep.subr.bf16.mxu0 0
    %1370 = vmatpush1.bf16.msra.mxu0 %v1339
    %1371 = vmatprep.subr.bf16.mxu0 0
    %1372 = vmatpush2.bf16.msra.mxu0 0
    %1373 = vmatprep.subr.bf16.mxu0 0
    %1374 = vmatpush2.bf16.msra.mxu0 0
    %1375 = vmatprep.subr.bf16.mxu0 0
    %1376 = vmatpush2.bf16.msra.mxu0 0
    %1377 = vmatprep.subr.bf16.mxu0 0
    %1378 = vmatpush2.bf16.msra.mxu0 0
    %1379 = vmatprep.subr.bf16.mxu0 0
    %1380 = vmatpush2.bf16.msra.mxu0 0
    %1381 = vmatprep.subr.bf16.mxu0 0
    %1382 = vmatpush2.bf16.msra.mxu0 0
    %1383 = vmatprep.subr.bf16.mxu0 0
    %1384 = vmatpush2.bf16.msra.mxu0 0
    %1385 = vmatprep.subr.bf16.mxu0 0
    %1386 = vmatpush2.bf16.msra.mxu0 0
    %1387 = vmatprep.mubr.bf16.mxu0 0
    %1388 = vmatmul.mubr.bf16.gmra.mxu0 %v1283
    %v1389 = vpop.f32.mrf.mxu0
    %v1390 = vadd.f32 0.0, %v1389
    %v1391 = vpop.f32.mrf.mxu0
    %v1392 = vpop.f32.mrf.mxu0
    %v1393 = vadd.f32 0.0, %v1392
    %v1394 = vpop.f32.mrf.mxu0
    %1395 = vmatprep.mubr.bf16.mxu0 0
    %1396 = vmatmul.mubr.bf16.gmra.mxu0 %v1284
    %v1397 = vpop.f32.mrf.mxu0
    %v1398 = vadd.f32 0.0, %v1397
    %v1399 = vpop.f32.mrf.mxu0
    %v1400 = vpop.f32.mrf.mxu0
    %v1401 = vadd.f32 0.0, %v1400
    %v1402 = vpop.f32.mrf.mxu0
    %1403 = vmatprep.mubr.bf16.mxu0 0
    %1404 = vmatmul.mubr.bf16.gmra.mxu0 %v1285
    %v1405 = vpop.f32.mrf.mxu0
    %v1406 = vadd.f32 0.0, %v1405
    %v1407 = vpop.f32.mrf.mxu0
    %v1408 = vpop.f32.mrf.mxu0
    %v1409 = vadd.f32 0.0, %v1408
    %v1410 = vpop.f32.mrf.mxu0
    %1411 = vmatprep.mubr.bf16.mxu0 0
    %1412 = vmatmul.mubr.bf16.gmra.mxu0 %v1286
    %v1413 = vpop.f32.mrf.mxu0
    %v1414 = vadd.f32 0.0, %v1413
    %v1415 = vpop.f32.mrf.mxu0
    %v1416 = vpop.f32.mrf.mxu0
    %v1417 = vadd.f32 0.0, %v1416
    %v1418 = vpop.f32.mrf.mxu0
    %1419 = vmatprep.mubr.bf16.mxu0 0
    %1420 = vmatmul.mubr.bf16.gmra.mxu0 %v1287
    %v1421 = vpop.f32.mrf.mxu0
    %v1422 = vadd.f32 0.0, %v1421
    %v1423 = vpop.f32.mrf.mxu0
    %v1424 = vpop.f32.mrf.mxu0
    %v1425 = vadd.f32 0.0, %v1424
    %v1426 = vpop.f32.mrf.mxu0
    %1427 = vmatprep.mubr.bf16.mxu0 0
    %1428 = vmatmul.mubr.bf16.gmra.mxu0 %v1288
    %v1429 = vpop.f32.mrf.mxu0
    %v1430 = vadd.f32 0.0, %v1429
    %v1431 = vpop.f32.mrf.mxu0
    %v1432 = vpop.f32.mrf.mxu0
    %v1433 = vadd.f32 0.0, %v1432
    %v1434 = vpop.f32.mrf.mxu0
    %1435 = vmatprep.mubr.bf16.mxu0 0
    %1436 = vmatmul.mubr.bf16.gmra.mxu0 %v1289
    %v1437 = vpop.f32.mrf.mxu0
    %v1438 = vadd.f32 0.0, %v1437
    %v1439 = vpop.f32.mrf.mxu0
    %v1440 = vpop.f32.mrf.mxu0
    %v1441 = vadd.f32 0.0, %v1440
    %v1442 = vpop.f32.mrf.mxu0
    %1443 = vmatprep.mubr.bf16.mxu0 0
    %1444 = vmatmul.mubr.bf16.gmra.mxu0 %v1290
    %v1445 = vpop.f32.mrf.mxu0
    %v1446 = vadd.f32 0.0, %v1445
    %v1447 = vpop.f32.mrf.mxu0
    %v1448 = vpop.f32.mrf.mxu0
    %v1449 = vadd.f32 0.0, %v1448
    %v1450 = vpop.f32.mrf.mxu0
    %1451 = vdwg.mxu0
    %v1452 = vadd.f32 %v195, %v1390
    %v1453 = vadd.f32 %v196, %v1393
    %v1454 = vadd.f32 %v197, %v1398
    %v1455 = vadd.f32 %v198, %v1401
    %v1456 = vadd.f32 %v199, %v1406
    %v1457 = vadd.f32 %v200, %v1409
    %v1458 = vadd.f32 %v201, %v1414
    %v1459 = vadd.f32 %v202, %v1417
    %v1460 = vadd.f32 %v203, %v1422
    %v1461 = vadd.f32 %v204, %v1425
    %v1462 = vadd.f32 %v205, %v1430
    %v1463 = vadd.f32 %v206, %v1433
    %v1464 = vadd.f32 %v207, %v1438
    %v1465 = vadd.f32 %v208, %v1441
    %v1466 = vadd.f32 %v209, %v1446
    %v1467 = vadd.f32 %v210, %v1449
    %1468 = vadd.xlane.f32.xlu0 %v1452
    %v1469 = vpop.xlane.xlu0 %1468
    %1470 = vadd.xlane.f32.xlu0 %v1453
    %v1471 = vpop.xlane.xlu0 %1470
    %1472 = vadd.xlane.f32.xlu0 %v1454
    %v1473 = vpop.xlane.xlu0 %1472
    %1474 = vadd.xlane.f32.xlu0 %v1455
    %v1475 = vpop.xlane.xlu0 %1474
    %1476 = vadd.xlane.f32.xlu0 %v1456
    %v1477 = vpop.xlane.xlu0 %1476
    %1478 = vadd.xlane.f32.xlu0 %v1457
    %v1479 = vpop.xlane.xlu0 %1478
    %1480 = vadd.xlane.f32.xlu0 %v1458
    %v1481 = vpop.xlane.xlu0 %1480
    %1482 = vadd.xlane.f32.xlu0 %v1459
    %v1483 = vpop.xlane.xlu0 %1482
    %1484 = vadd.xlane.f32.xlu0 %v1460
    %v1485 = vpop.xlane.xlu0 %1484
    %1486 = vadd.xlane.f32.xlu0 %v1461
    %v1487 = vpop.xlane.xlu0 %1486
    %1488 = vadd.xlane.f32.xlu0 %v1462
    %v1489 = vpop.xlane.xlu0 %1488
    %1490 = vadd.xlane.f32.xlu0 %v1463
    %v1491 = vpop.xlane.xlu0 %1490
    %1492 = vadd.xlane.f32.xlu0 %v1464
    %v1493 = vpop.xlane.xlu0 %1492
    %1494 = vadd.xlane.f32.xlu0 %v1465
    %v1495 = vpop.xlane.xlu0 %1494
    %1496 = vadd.xlane.f32.xlu0 %v1466
    %v1497 = vpop.xlane.xlu0 %1496
    %1498 = vadd.xlane.f32.xlu0 %v1467
    %v1499 = vpop.xlane.xlu0 %1498
    %v1500 = vmul.f32 %v1469, %v251
    %v1501 = vmul.f32 %v1471, %v251
    %v1502 = vmul.f32 %v1473, %v251
    %v1503 = vmul.f32 %v1475, %v251
    %v1504 = vmul.f32 %v1477, %v251
    %v1505 = vmul.f32 %v1479, %v251
    %v1506 = vmul.f32 %v1481, %v251
    %v1507 = vmul.f32 %v1483, %v251
    %v1508 = vmul.f32 %v1485, %v251
    %v1509 = vmul.f32 %v1487, %v251
    %v1510 = vmul.f32 %v1489, %v251
    %v1511 = vmul.f32 %v1491, %v251
    %v1512 = vmul.f32 %v1493, %v251
    %v1513 = vmul.f32 %v1495, %v251
    %v1514 = vmul.f32 %v1497, %v251
    %v1515 = vmul.f32 %v1499, %v251
    %v1516 = vsub.f32 %v1452, %v1500
    %v1517 = vsub.f32 %v1453, %v1501
    %v1518 = vsub.f32 %v1454, %v1502
    %v1519 = vsub.f32 %v1455, %v1503
    %v1520 = vsub.f32 %v1456, %v1504
    %v1521 = vsub.f32 %v1457, %v1505
    %v1522 = vsub.f32 %v1458, %v1506
    %v1523 = vsub.f32 %v1459, %v1507
    %v1524 = vsub.f32 %v1460, %v1508
    %v1525 = vsub.f32 %v1461, %v1509
    %v1526 = vsub.f32 %v1462, %v1510
    %v1527 = vsub.f32 %v1463, %v1511
    %v1528 = vsub.f32 %v1464, %v1512
    %v1529 = vsub.f32 %v1465, %v1513
    %v1530 = vsub.f32 %v1466, %v1514
    %v1531 = vsub.f32 %v1467, %v1515
    %v1532 = vmul.f32 %v1516, %v1516
    %v1533 = vmul.f32 %v1517, %v1517
    %v1534 = vmul.f32 %v1518, %v1518
    %v1535 = vmul.f32 %v1519, %v1519
    %v1536 = vmul.f32 %v1520, %v1520
    %v1537 = vmul.f32 %v1521, %v1521
    %v1538 = vmul.f32 %v1522, %v1522
    %v1539 = vmul.f32 %v1523, %v1523
    %v1540 = vmul.f32 %v1524, %v1524
    %v1541 = vmul.f32 %v1525, %v1525
    %v1542 = vmul.f32 %v1526, %v1526
    %v1543 = vmul.f32 %v1527, %v1527
    %v1544 = vmul.f32 %v1528, %v1528
    %v1545 = vmul.f32 %v1529, %v1529
    %v1546 = vmul.f32 %v1530, %v1530
    %v1547 = vmul.f32 %v1531, %v1531
    %1548 = vadd.xlane.f32.xlu0 %v1532
    %v1549 = vpop.xlane.xlu0 %1548
    %1550 = vadd.xlane.f32.xlu0 %v1533
    %v1551 = vpop.xlane.xlu0 %1550
    %1552 = vadd.xlane.f32.xlu0 %v1534
    %v1553 = vpop.xlane.xlu0 %1552
    %1554 = vadd.xlane.f32.xlu0 %v1535
    %v1555 = vpop.xlane.xlu0 %1554
    %1556 = vadd.xlane.f32.xlu0 %v1536
    %v1557 = vpop.xlane.xlu0 %1556
    %1558 = vadd.xlane.f32.xlu0 %v1537
    %v1559 = vpop.xlane.xlu0 %1558
    %1560 = vadd.xlane.f32.xlu0 %v1538
    %v1561 = vpop.xlane.xlu0 %1560
    %1562 = vadd.xlane.f32.xlu0 %v1539
    %v1563 = vpop.xlane.xlu0 %1562
    %1564 = vadd.xlane.f32.xlu0 %v1540
    %v1565 = vpop.xlane.xlu0 %1564
    %1566 = vadd.xlane.f32.xlu0 %v1541
    %v1567 = vpop.xlane.xlu0 %1566
    %1568 = vadd.xlane.f32.xlu0 %v1542
    %v1569 = vpop.xlane.xlu0 %1568
    %1570 = vadd.xlane.f32.xlu0 %v1543
    %v1571 = vpop.xlane.xlu0 %1570
    %1572 = vadd.xlane.f32.xlu0 %v1544
    %v1573 = vpop.xlane.xlu0 %1572
    %1574 = vadd.xlane.f32.xlu0 %v1545
    %v1575 = vpop.xlane.xlu0 %1574
    %1576 = vadd.xlane.f32.xlu0 %v1546
    %v1577 = vpop.xlane.xlu0 %1576
    %1578 = vadd.xlane.f32.xlu0 %v1547
    %v1579 = vpop.xlane.xlu0 %1578
    %v1580 = vmul.f32 %v1549, %v251
    %v1581 = vmul.f32 %v1551, %v251
    %v1582 = vmul.f32 %v1553, %v251
    %v1583 = vmul.f32 %v1555, %v251
    %v1584 = vmul.f32 %v1557, %v251
    %v1585 = vmul.f32 %v1559, %v251
    %v1586 = vmul.f32 %v1561, %v251
    %v1587 = vmul.f32 %v1563, %v251
    %v1588 = vmul.f32 %v1565, %v251
    %v1589 = vmul.f32 %v1567, %v251
    %v1590 = vmul.f32 %v1569, %v251
    %v1591 = vmul.f32 %v1571, %v251
    %v1592 = vmul.f32 %v1573, %v251
    %v1593 = vmul.f32 %v1575, %v251
    %v1594 = vmul.f32 %v1577, %v251
    %v1595 = vmul.f32 %v1579, %v251
    %v1596 = vadd.f32 %v1580, 1e-06
    %v1597 = vadd.f32 %v1581, 1e-06
    %v1598 = vadd.f32 %v1582, 1e-06
    %v1599 = vadd.f32 %v1583, 1e-06
    %v1600 = vadd.f32 %v1584, 1e-06
    %v1601 = vadd.f32 %v1585, 1e-06
    %v1602 = vadd.f32 %v1586, 1e-06
    %v1603 = vadd.f32 %v1587, 1e-06
    %v1604 = vadd.f32 %v1588, 1e-06
    %v1605 = vadd.f32 %v1589, 1e-06
    %v1606 = vadd.f32 %v1590, 1e-06
    %v1607 = vadd.f32 %v1591, 1e-06
    %v1608 = vadd.f32 %v1592, 1e-06
    %v1609 = vadd.f32 %v1593, 1e-06
    %v1610 = vadd.f32 %v1594, 1e-06
    %v1611 = vadd.f32 %v1595, 1e-06
    %v1612 = vrsqrt.pop %v1596
    %v1613 = vrsqrt.pop %v1597
    %v1614 = vrsqrt.pop %v1598
    %v1615 = vrsqrt.pop %v1599
    %v1616 = vrsqrt.pop %v1600
    %v1617 = vrsqrt.pop %v1601
    %v1618 = vrsqrt.pop %v1602
    %v1619 = vrsqrt.pop %v1603
    %v1620 = vrsqrt.pop %v1604
    %v1621 = vrsqrt.pop %v1605
    %v1622 = vrsqrt.pop %v1606
    %v1623 = vrsqrt.pop %v1607
    %v1624 = vrsqrt.pop %v1608
    %v1625 = vrsqrt.pop %v1609
    %v1626 = vrsqrt.pop %v1610
    %v1627 = vrsqrt.pop %v1611
    %v1628 = vmul.f32 %v1516, %v1612
    %v1629 = vmul.f32 %v1517, %v1613
    %v1630 = vmul.f32 %v1518, %v1614
    %v1631 = vmul.f32 %v1519, %v1615
    %v1632 = vmul.f32 %v1520, %v1616
    %v1633 = vmul.f32 %v1521, %v1617
    %v1634 = vmul.f32 %v1522, %v1618
    %v1635 = vmul.f32 %v1523, %v1619
    %v1636 = vmul.f32 %v1524, %v1620
    %v1637 = vmul.f32 %v1525, %v1621
    %v1638 = vmul.f32 %v1526, %v1622
    %v1639 = vmul.f32 %v1527, %v1623
    %v1640 = vmul.f32 %v1528, %v1624
    %v1641 = vmul.f32 %v1529, %v1625
    %v1642 = vmul.f32 %v1530, %v1626
    %v1643 = vmul.f32 %v1531, %v1627
    %v1644 = vpack.c.bf16 %v1629, %v1628
    %v1645 = vpack.c.bf16 %v1631, %v1630
    %v1646 = vpack.c.bf16 %v1633, %v1632
    %v1647 = vpack.c.bf16 %v1635, %v1634
    %v1648 = vpack.c.bf16 %v1637, %v1636
    %v1649 = vpack.c.bf16 %v1639, %v1638
    %v1650 = vpack.c.bf16 %v1641, %v1640
    %v1651 = vpack.c.bf16 %v1643, %v1642
    %v1652 = vld [vmem:[#allocation10] sm:$0xf]
    %v1653 = vld [vmem:[#allocation10 + $0x4] sm:$0xf]
    %v1654 = vld [vmem:[#allocation10 + $0x8] sm:$0xf]
    %v1655 = vld [vmem:[#allocation10 + $0xc] sm:$0xf]
    %v1656 = vld [vmem:[#allocation10 + $0x10] sm:$0xf]
    %v1657 = vld [vmem:[#allocation10 + $0x14] sm:$0xf]
    %v1658 = vld [vmem:[#allocation10 + $0x18] sm:$0xf]
    %v1659 = vld [vmem:[#allocation10 + $0x1c] sm:$0xf]
    %v1660 = vld [vmem:[#allocation10 + $0x20] sm:$0xf]
    %v1661 = vld [vmem:[#allocation10 + $0x24] sm:$0xf]
    %v1662 = vld [vmem:[#allocation10 + $0x28] sm:$0xf]
    %v1663 = vld [vmem:[#allocation10 + $0x2c] sm:$0xf]
    %v1664 = vld [vmem:[#allocation10 + $0x30] sm:$0xf]
    %v1665 = vld [vmem:[#allocation10 + $0x34] sm:$0xf]
    %v1666 = vld [vmem:[#allocation10 + $0x38] sm:$0xf]
    %v1667 = vld [vmem:[#allocation10 + $0x3c] sm:$0xf]
    %v1684 = vunpack.c.l.b16 %v1652
    %v1685 = vunpack.c.l.b16 %v1653
    %v1686 = vunpack.c.l.b16 %v1654
    %v1687 = vunpack.c.l.b16 %v1655
    %v1688 = vunpack.c.l.b16 %v1656
    %v1689 = vunpack.c.l.b16 %v1657
    %v1690 = vunpack.c.l.b16 %v1658
    %v1691 = vunpack.c.l.b16 %v1659
    %v1692 = vunpack.c.l.b16 %v1660
    %v1693 = vunpack.c.l.b16 %v1661
    %v1694 = vunpack.c.l.b16 %v1662
    %v1695 = vunpack.c.l.b16 %v1663
    %v1696 = vunpack.c.l.b16 %v1664
    %v1697 = vunpack.c.l.b16 %v1665
    %v1698 = vunpack.c.l.b16 %v1666
    %v1699 = vunpack.c.l.b16 %v1667
    %v1700 = vpack.c.b16 %v1685, %v1684
    %v1701 = vpack.c.b16 %v1687, %v1686
    %v1702 = vpack.c.b16 %v1689, %v1688
    %v1703 = vpack.c.b16 %v1691, %v1690
    %v1704 = vpack.c.b16 %v1693, %v1692
    %v1705 = vpack.c.b16 %v1695, %v1694
    %v1706 = vpack.c.b16 %v1697, %v1696
    %v1707 = vpack.c.b16 %v1699, %v1698
    %1716 = vmatprep.subr.bf16.mxu0 0
    %1717 = vmatpush1.bf16.msra.mxu0 %v1707
    %1718 = vmatprep.subr.bf16.mxu0 0
    %1719 = vmatpush1.bf16.msra.mxu0 %v1706
    %1720 = vmatprep.subr.bf16.mxu0 0
    %1721 = vmatpush1.bf16.msra.mxu0 %v1705
    %1722 = vmatprep.subr.bf16.mxu0 0
    %1723 = vmatpush1.bf16.msra.mxu0 %v1704
    %1724 = vmatprep.subr.bf16.mxu0 0
    %1725 = vmatpush1.bf16.msra.mxu0 %v1703
    %1726 = vmatprep.subr.bf16.mxu0 0
    %1727 = vmatpush1.bf16.msra.mxu0 %v1702
    %1728 = vmatprep.subr.bf16.mxu0 0
    %1729 = vmatpush1.bf16.msra.mxu0 %v1701
    %1730 = vmatprep.subr.bf16.mxu0 0
    %1731 = vmatpush1.bf16.msra.mxu0 %v1700
    %1732 = vmatprep.subr.bf16.mxu0 0
    %1733 = vmatpush2.bf16.msra.mxu0 0
    %1734 = vmatprep.subr.bf16.mxu0 0
    %1735 = vmatpush2.bf16.msra.mxu0 0
    %1736 = vmatprep.subr.bf16.mxu0 0
    %1737 = vmatpush2.bf16.msra.mxu0 0
    %1738 = vmatprep.subr.bf16.mxu0 0
    %1739 = vmatpush2.bf16.msra.mxu0 0
    %1740 = vmatprep.subr.bf16.mxu0 0
    %1741 = vmatpush2.bf16.msra.mxu0 0
    %1742 = vmatprep.subr.bf16.mxu0 0
    %1743 = vmatpush2.bf16.msra.mxu0 0
    %1744 = vmatprep.subr.bf16.mxu0 0
    %1745 = vmatpush2.bf16.msra.mxu0 0
    %1746 = vmatprep.subr.bf16.mxu0 0
    %1747 = vmatpush2.bf16.msra.mxu0 0
    %1748 = vmatprep.mubr.bf16.mxu0 0
    %1749 = vmatmul.mubr.bf16.gmra.mxu0 %v1644
    %v1750 = vpop.f32.mrf.mxu0
    %v1751 = vadd.f32 0.0, %v1750
    %v1752 = vpop.f32.mrf.mxu0
    %v1753 = vpop.f32.mrf.mxu0
    %v1754 = vadd.f32 0.0, %v1753
    %v1755 = vpop.f32.mrf.mxu0
    %1756 = vmatprep.mubr.bf16.mxu0 0
    %1757 = vmatmul.mubr.bf16.gmra.mxu0 %v1645
    %v1758 = vpop.f32.mrf.mxu0
    %v1759 = vadd.f32 0.0, %v1758
    %v1760 = vpop.f32.mrf.mxu0
    %v1761 = vpop.f32.mrf.mxu0
    %v1762 = vadd.f32 0.0, %v1761
    %v1763 = vpop.f32.mrf.mxu0
    %1764 = vmatprep.mubr.bf16.mxu0 0
    %1765 = vmatmul.mubr.bf16.gmra.mxu0 %v1646
    %v1766 = vpop.f32.mrf.mxu0
    %v1767 = vadd.f32 0.0, %v1766
    %v1768 = vpop.f32.mrf.mxu0
    %v1769 = vpop.f32.mrf.mxu0
    %v1770 = vadd.f32 0.0, %v1769
    %v1771 = vpop.f32.mrf.mxu0
    %1772 = vmatprep.mubr.bf16.mxu0 0
    %1773 = vmatmul.mubr.bf16.gmra.mxu0 %v1647
    %v1774 = vpop.f32.mrf.mxu0
    %v1775 = vadd.f32 0.0, %v1774
    %v1776 = vpop.f32.mrf.mxu0
    %v1777 = vpop.f32.mrf.mxu0
    %v1778 = vadd.f32 0.0, %v1777
    %v1779 = vpop.f32.mrf.mxu0
    %1780 = vmatprep.mubr.bf16.mxu0 0
    %1781 = vmatmul.mubr.bf16.gmra.mxu0 %v1648
    %v1782 = vpop.f32.mrf.mxu0
    %v1783 = vadd.f32 0.0, %v1782
    %v1784 = vpop.f32.mrf.mxu0
    %v1785 = vpop.f32.mrf.mxu0
    %v1786 = vadd.f32 0.0, %v1785
    %v1787 = vpop.f32.mrf.mxu0
    %1788 = vmatprep.mubr.bf16.mxu0 0
    %1789 = vmatmul.mubr.bf16.gmra.mxu0 %v1649
    %v1790 = vpop.f32.mrf.mxu0
    %v1791 = vadd.f32 0.0, %v1790
    %v1792 = vpop.f32.mrf.mxu0
    %v1793 = vpop.f32.mrf.mxu0
    %v1794 = vadd.f32 0.0, %v1793
    %v1795 = vpop.f32.mrf.mxu0
    %1796 = vmatprep.mubr.bf16.mxu0 0
    %1797 = vmatmul.mubr.bf16.gmra.mxu0 %v1650
    %v1798 = vpop.f32.mrf.mxu0
    %v1799 = vadd.f32 0.0, %v1798
    %v1800 = vpop.f32.mrf.mxu0
    %v1801 = vpop.f32.mrf.mxu0
    %v1802 = vadd.f32 0.0, %v1801
    %v1803 = vpop.f32.mrf.mxu0
    %1804 = vmatprep.mubr.bf16.mxu0 0
    %1805 = vmatmul.mubr.bf16.gmra.mxu0 %v1651
    %v1806 = vpop.f32.mrf.mxu0
    %v1807 = vadd.f32 0.0, %v1806
    %v1808 = vpop.f32.mrf.mxu0
    %v1809 = vpop.f32.mrf.mxu0
    %v1810 = vadd.f32 0.0, %v1809
    %v1811 = vpop.f32.mrf.mxu0
    %1812 = vdwg.mxu0
    %v1813 = vpack.c.bf16 %v212, %v211
    %v1814 = vpack.c.bf16 %v214, %v213
    %v1815 = vpack.c.bf16 %v216, %v215
    %v1816 = vpack.c.bf16 %v218, %v217
    %v1817 = vld [vmem:[#allocation11] sm:$0xff]
    %v1818 = vld [vmem:[#allocation11 + $0x8] sm:$0xff]
    %v1819 = vld [vmem:[#allocation11 + $0x10] sm:$0xff]
    %v1820 = vld [vmem:[#allocation11 + $0x18] sm:$0xff]
    %v1821 = vld [vmem:[#allocation11 + $0x20] sm:$0xff]
    %v1822 = vld [vmem:[#allocation11 + $0x28] sm:$0xff]
    %v1823 = vld [vmem:[#allocation11 + $0x30] sm:$0xff]
    %v1824 = vld [vmem:[#allocation11 + $0x38] sm:$0xff]
    %v1825 = vld [vmem:[#allocation11 + $0x40] sm:$0xff]
    %v1826 = vld [vmem:[#allocation11 + $0x48] sm:$0xff]
    %v1827 = vld [vmem:[#allocation11 + $0x50] sm:$0xff]
    %v1828 = vld [vmem:[#allocation11 + $0x58] sm:$0xff]
    %v1829 = vld [vmem:[#allocation11 + $0x60] sm:$0xff]
    %v1830 = vld [vmem:[#allocation11 + $0x68] sm:$0xff]
    %v1831 = vld [vmem:[#allocation11 + $0x70] sm:$0xff]
    %v1832 = vld [vmem:[#allocation11 + $0x78] sm:$0xff]
    %v1849 = vunpack.c.l.b16 %v1817
    %v1850 = vunpack.c.h.b16 %v1817
    %v1851 = vunpack.c.l.b16 %v1818
    %v1852 = vunpack.c.h.b16 %v1818
    %v1853 = vunpack.c.l.b16 %v1819
    %v1854 = vunpack.c.h.b16 %v1819
    %v1855 = vunpack.c.l.b16 %v1820
    %v1856 = vunpack.c.h.b16 %v1820
    %v1857 = vunpack.c.l.b16 %v1821
    %v1858 = vunpack.c.h.b16 %v1821
    %v1859 = vunpack.c.l.b16 %v1822
    %v1860 = vunpack.c.h.b16 %v1822
    %v1861 = vunpack.c.l.b16 %v1823
    %v1862 = vunpack.c.h.b16 %v1823
    %v1863 = vunpack.c.l.b16 %v1824
    %v1864 = vunpack.c.h.b16 %v1824
    %v1865 = vunpack.c.l.b16 %v1825
    %v1866 = vunpack.c.h.b16 %v1825
    %v1867 = vunpack.c.l.b16 %v1826
    %v1868 = vunpack.c.h.b16 %v1826
    %v1869 = vunpack.c.l.b16 %v1827
    %v1870 = vunpack.c.h.b16 %v1827
    %v1871 = vunpack.c.l.b16 %v1828
    %v1872 = vunpack.c.h.b16 %v1828
    %v1873 = vunpack.c.l.b16 %v1829
    %v1874 = vunpack.c.h.b16 %v1829
    %v1875 = vunpack.c.l.b16 %v1830
    %v1876 = vunpack.c.h.b16 %v1830
    %v1877 = vunpack.c.l.b16 %v1831
    %v1878 = vunpack.c.h.b16 %v1831
    %v1879 = vunpack.c.l.b16 %v1832
    %v1880 = vunpack.c.h.b16 %v1832
    %v1881 = vpack.c.b16 %v1851, %v1849
    %v1882 = vpack.c.b16 %v1852, %v1850
    %v1883 = vpack.c.b16 %v1855, %v1853
    %v1884 = vpack.c.b16 %v1856, %v1854
    %v1885 = vpack.c.b16 %v1859, %v1857
    %v1886 = vpack.c.b16 %v1860, %v1858
    %v1887 = vpack.c.b16 %v1863, %v1861
    %v1888 = vpack.c.b16 %v1864, %v1862
    %v1889 = vpack.c.b16 %v1867, %v1865
    %v1890 = vpack.c.b16 %v1868, %v1866
    %v1891 = vpack.c.b16 %v1871, %v1869
    %v1892 = vpack.c.b16 %v1872, %v1870
    %v1893 = vpack.c.b16 %v1875, %v1873
    %v1894 = vpack.c.b16 %v1876, %v1874
    %v1895 = vpack.c.b16 %v1879, %v1877
    %v1896 = vpack.c.b16 %v1880, %v1878
    %1913 = vmatprep.subr.bf16.mxu0 %v1896
    %1914 = vmatpush1.bf16.msra.mxu0 %v1895
    %1915 = vmatprep.subr.bf16.mxu0 %v1894
    %1916 = vmatpush1.bf16.msra.mxu0 %v1893
    %1917 = vmatprep.subr.bf16.mxu0 %v1892
    %1918 = vmatpush1.bf16.msra.mxu0 %v1891
    %1919 = vmatprep.subr.bf16.mxu0 %v1890
    %1920 = vmatpush1.bf16.msra.mxu0 %v1889
    %1921 = vmatprep.subr.bf16.mxu0 %v1888
    %1922 = vmatpush1.bf16.msra.mxu0 %v1887
    %1923 = vmatprep.subr.bf16.mxu0 %v1886
    %1924 = vmatpush1.bf16.msra.mxu0 %v1885
    %1925 = vmatprep.subr.bf16.mxu0 %v1884
    %1926 = vmatpush1.bf16.msra.mxu0 %v1883
    %1927 = vmatprep.subr.bf16.mxu0 %v1882
    %1928 = vmatpush1.bf16.msra.mxu0 %v1881
    %1929 = vmatprep.subr.bf16.mxu0 0
    %1930 = vmatpush2.bf16.msra.mxu0 0
    %1931 = vmatprep.subr.bf16.mxu0 0
    %1932 = vmatpush2.bf16.msra.mxu0 0
    %1933 = vmatprep.subr.bf16.mxu0 0
    %1934 = vmatpush2.bf16.msra.mxu0 0
    %1935 = vmatprep.subr.bf16.mxu0 0
    %1936 = vmatpush2.bf16.msra.mxu0 0
    %1937 = vmatprep.subr.bf16.mxu0 0
    %1938 = vmatpush2.bf16.msra.mxu0 0
    %1939 = vmatprep.subr.bf16.mxu0 0
    %1940 = vmatpush2.bf16.msra.mxu0 0
    %1941 = vmatprep.subr.bf16.mxu0 0
    %1942 = vmatpush2.bf16.msra.mxu0 0
    %1943 = vmatprep.subr.bf16.mxu0 0
    %1944 = vmatpush2.bf16.msra.mxu0 0
    %1945 = vmatprep.mubr.bf16.mxu0 0
    %1946 = vmatmul.mubr.bf16.gmra.mxu0 %v1813
    %v1947 = vpop.f32.mrf.mxu0
    %v1948 = vadd.f32 0.0, %v1947
    %v1949 = vpop.f32.mrf.mxu0
    %v1950 = vadd.f32 0.0, %v1949
    %v1951 = vpop.f32.mrf.mxu0
    %v1952 = vadd.f32 0.0, %v1951
    %v1953 = vpop.f32.mrf.mxu0
    %v1954 = vadd.f32 0.0, %v1953
    %1955 = vmatprep.mubr.bf16.mxu0 0
    %1956 = vmatmul.mubr.bf16.gmra.mxu0 %v1814
    %v1957 = vpop.f32.mrf.mxu0
    %v1958 = vadd.f32 0.0, %v1957
    %v1959 = vpop.f32.mrf.mxu0
    %v1960 = vadd.f32 0.0, %v1959
    %v1961 = vpop.f32.mrf.mxu0
    %v1962 = vadd.f32 0.0, %v1961
    %v1963 = vpop.f32.mrf.mxu0
    %v1964 = vadd.f32 0.0, %v1963
    %1965 = vmatprep.mubr.bf16.mxu0 0
    %1966 = vmatmul.mubr.bf16.gmra.mxu0 %v1815
    %v1967 = vpop.f32.mrf.mxu0
    %v1968 = vadd.f32 0.0, %v1967
    %v1969 = vpop.f32.mrf.mxu0
    %v1970 = vadd.f32 0.0, %v1969
    %v1971 = vpop.f32.mrf.mxu0
    %v1972 = vadd.f32 0.0, %v1971
    %v1973 = vpop.f32.mrf.mxu0
    %v1974 = vadd.f32 0.0, %v1973
    %1975 = vmatprep.mubr.bf16.mxu0 0
    %1976 = vmatmul.mubr.bf16.gmra.mxu0 %v1816
    %v1977 = vpop.f32.mrf.mxu0
    %v1978 = vadd.f32 0.0, %v1977
    %v1979 = vpop.f32.mrf.mxu0
    %v1980 = vadd.f32 0.0, %v1979
    %v1981 = vpop.f32.mrf.mxu0
    %v1982 = vadd.f32 0.0, %v1981
    %v1983 = vpop.f32.mrf.mxu0
    %v1984 = vadd.f32 0.0, %v1983
    %1985 = vdwg.mxu0
    %v1986 = vpack.c.bf16 %v1754, %v1751
    %v1987 = vpack.c.bf16 %v1762, %v1759
    %v1988 = vpack.c.bf16 %v1770, %v1767
    %v1989 = vpack.c.bf16 %v1778, %v1775
    %v1990 = vpack.c.bf16 %v1786, %v1783
    %v1991 = vpack.c.bf16 %v1794, %v1791
    %v1992 = vpack.c.bf16 %v1802, %v1799
    %v1993 = vpack.c.bf16 %v1810, %v1807
    %v1994 = vpack.c.bf16 %v1952, %v1948
    %v1995 = vpack.c.bf16 %v1962, %v1958
    %v1996 = vpack.c.bf16 %v1972, %v1968
    %v1997 = vpack.c.bf16 %v1982, %v1978
    %1998 = vmatprep.subr.bf16.mxu0 0
    %1999 = vmatpush1.bf16.xpose.msra.mxu0 0
    %2000 = vmatprep.subr.bf16.mxu0 0
    %2001 = vmatpush1.bf16.xpose.msra.mxu0 0
    %2002 = vmatprep.subr.bf16.mxu0 0
    %2003 = vmatpush1.bf16.xpose.msra.mxu0 0
    %2004 = vmatprep.subr.bf16.mxu0 0
    %2005 = vmatpush1.bf16.xpose.msra.mxu0 0
    %2006 = vmatprep.subr.bf16.mxu0 0
    %2007 = vmatpush1.bf16.xpose.msra.mxu0 0
    %2008 = vmatprep.subr.bf16.mxu0 0
    %2009 = vmatpush1.bf16.xpose.msra.mxu0 0
    %2010 = vmatprep.subr.bf16.mxu0 0
    %2011 = vmatpush1.bf16.xpose.msra.mxu0 %v1995
    %2012 = vmatprep.subr.bf16.mxu0 0
    %2013 = vmatpush1.bf16.xpose.msra.mxu0 %v1994
    %2014 = vmatprep.subr.bf16.mxu0 0
    %2015 = vmatpush2.bf16.xpose.msra.mxu0 0
    %2016 = vmatprep.subr.bf16.mxu0 0
    %2017 = vmatpush2.bf16.xpose.msra.mxu0 0
    %2018 = vmatprep.subr.bf16.mxu0 0
    %2019 = vmatpush2.bf16.xpose.msra.mxu0 0
    %2020 = vmatprep.subr.bf16.mxu0 0
    %2021 = vmatpush2.bf16.xpose.msra.mxu0 0
    %2022 = vmatprep.subr.bf16.mxu0 0
    %2023 = vmatpush2.bf16.xpose.msra.mxu0 0
    %2024 = vmatprep.subr.bf16.mxu0 0
    %2025 = vmatpush2.bf16.xpose.msra.mxu0 0
    %2026 = vmatprep.subr.bf16.mxu0 0
    %2027 = vmatpush2.bf16.xpose.msra.mxu0 0
    %2028 = vmatprep.subr.bf16.mxu0 0
    %2029 = vmatpush2.bf16.xpose.msra.mxu0 0
    %2030 = vmatprep.mubr.bf16.mxu0 0
    %2031 = vmatmul.mubr.bf16.gmra.mxu0 %v1986
    %v2032 = vpop.f32.mrf.mxu0
    %v2033 = vadd.f32 0.0, %v2032
    %v2034 = vpop.f32.mrf.mxu0
    %v2035 = vpop.f32.mrf.mxu0
    %v2036 = vadd.f32 0.0, %v2035
    %v2037 = vpop.f32.mrf.mxu0
    %2038 = vmatprep.mubr.bf16.mxu0 0
    %2039 = vmatmul.mubr.bf16.gmra.mxu0 %v1987
    %v2040 = vpop.f32.mrf.mxu0
    %v2041 = vadd.f32 0.0, %v2040
    %v2042 = vpop.f32.mrf.mxu0
    %v2043 = vpop.f32.mrf.mxu0
    %v2044 = vadd.f32 0.0, %v2043
    %v2045 = vpop.f32.mrf.mxu0
    %2046 = vmatprep.mubr.bf16.mxu0 0
    %2047 = vmatmul.mubr.bf16.gmra.mxu0 %v1988
    %v2048 = vpop.f32.mrf.mxu0
    %v2049 = vadd.f32 0.0, %v2048
    %v2050 = vpop.f32.mrf.mxu0
    %v2051 = vpop.f32.mrf.mxu0
    %v2052 = vadd.f32 0.0, %v2051
    %v2053 = vpop.f32.mrf.mxu0
    %2054 = vmatprep.mubr.bf16.mxu0 0
    %2055 = vmatmul.mubr.bf16.gmra.mxu0 %v1989
    %v2056 = vpop.f32.mrf.mxu0
    %v2057 = vadd.f32 0.0, %v2056
    %v2058 = vpop.f32.mrf.mxu0
    %v2059 = vpop.f32.mrf.mxu0
    %v2060 = vadd.f32 0.0, %v2059
    %v2061 = vpop.f32.mrf.mxu0
    %2062 = vdwg.mxu0
    %2063 = vmatprep.subr.bf16.mxu0 0
    %2064 = vmatpush1.bf16.xpose.msra.mxu0 0
    %2065 = vmatprep.subr.bf16.mxu0 0
    %2066 = vmatpush1.bf16.xpose.msra.mxu0 0
    %2067 = vmatprep.subr.bf16.mxu0 0
    %2068 = vmatpush1.bf16.xpose.msra.mxu0 0
    %2069 = vmatprep.subr.bf16.mxu0 0
    %2070 = vmatpush1.bf16.xpose.msra.mxu0 0
    %2071 = vmatprep.subr.bf16.mxu0 0
    %2072 = vmatpush1.bf16.xpose.msra.mxu0 0
    %2073 = vmatprep.subr.bf16.mxu0 0
    %2074 = vmatpush1.bf16.xpose.msra.mxu0 0
    %2075 = vmatprep.subr.bf16.mxu0 0
    %2076 = vmatpush1.bf16.xpose.msra.mxu0 %v1997
    %2077 = vmatprep.subr.bf16.mxu0 0
    %2078 = vmatpush1.bf16.xpose.msra.mxu0 %v1996
    %2079 = vmatprep.subr.bf16.mxu0 0
    %2080 = vmatpush2.bf16.xpose.msra.mxu0 0
    %2081 = vmatprep.subr.bf16.mxu0 0
    %2082 = vmatpush2.bf16.xpose.msra.mxu0 0
    %2083 = vmatprep.subr.bf16.mxu0 0
    %2084 = vmatpush2.bf16.xpose.msra.mxu0 0
    %2085 = vmatprep.subr.bf16.mxu0 0
    %2086 = vmatpush2.bf16.xpose.msra.mxu0 0
    %2087 = vmatprep.subr.bf16.mxu0 0
    %2088 = vmatpush2.bf16.xpose.msra.mxu0 0
    %2089 = vmatprep.subr.bf16.mxu0 0
    %2090 = vmatpush2.bf16.xpose.msra.mxu0 0
    %2091 = vmatprep.subr.bf16.mxu0 0
    %2092 = vmatpush2.bf16.xpose.msra.mxu0 0
    %2093 = vmatprep.subr.bf16.mxu0 0
    %2094 = vmatpush2.bf16.xpose.msra.mxu0 0
    %2095 = vmatprep.mubr.bf16.mxu0 0
    %2096 = vmatmul.mubr.bf16.gmra.mxu0 %v1990
    %v2097 = vpop.f32.mrf.mxu0
    %v2098 = vadd.f32 0.0, %v2097
    %v2099 = vpop.f32.mrf.mxu0
    %v2100 = vpop.f32.mrf.mxu0
    %v2101 = vadd.f32 0.0, %v2100
    %v2102 = vpop.f32.mrf.mxu0
    %2103 = vmatprep.mubr.bf16.mxu0 0
    %2104 = vmatmul.mubr.bf16.gmra.mxu0 %v1991
    %v2105 = vpop.f32.mrf.mxu0
    %v2106 = vadd.f32 0.0, %v2105
    %v2107 = vpop.f32.mrf.mxu0
    %v2108 = vpop.f32.mrf.mxu0
    %v2109 = vadd.f32 0.0, %v2108
    %v2110 = vpop.f32.mrf.mxu0
    %2111 = vmatprep.mubr.bf16.mxu0 0
    %2112 = vmatmul.mubr.bf16.gmra.mxu0 %v1992
    %v2113 = vpop.f32.mrf.mxu0
    %v2114 = vadd.f32 0.0, %v2113
    %v2115 = vpop.f32.mrf.mxu0
    %v2116 = vpop.f32.mrf.mxu0
    %v2117 = vadd.f32 0.0, %v2116
    %v2118 = vpop.f32.mrf.mxu0
    %2119 = vmatprep.mubr.bf16.mxu0 0
    %2120 = vmatmul.mubr.bf16.gmra.mxu0 %v1993
    %v2121 = vpop.f32.mrf.mxu0
    %v2122 = vadd.f32 0.0, %v2121
    %v2123 = vpop.f32.mrf.mxu0
    %v2124 = vpop.f32.mrf.mxu0
    %v2125 = vadd.f32 0.0, %v2124
    %v2126 = vpop.f32.mrf.mxu0
    %2127 = vdwg.mxu0
    %v2128 = vmul.f32 %v2033, 0.088388346
    %v2129 = vmul.f32 %v2036, 0.088388346
    %v2130 = vmul.f32 %v2041, 0.088388346
    %v2131 = vmul.f32 %v2044, 0.088388346
    %v2132 = vmul.f32 %v2049, 0.088388346
    %v2133 = vmul.f32 %v2052, 0.088388346
    %v2134 = vmul.f32 %v2057, 0.088388346
    %v2135 = vmul.f32 %v2060, 0.088388346
    %v2136 = vmul.f32 %v2098, 0.088388346
    %v2137 = vmul.f32 %v2101, 0.088388346
    %v2138 = vmul.f32 %v2106, 0.088388346
    %v2139 = vmul.f32 %v2109, 0.088388346
    %v2140 = vmul.f32 %v2114, 0.088388346
    %v2141 = vmul.f32 %v2117, 0.088388346
    %v2142 = vmul.f32 %v2122, 0.088388346
    %v2143 = vmul.f32 %v2125, 0.088388346
    %vm2144 = vcmask 261120
    %v2145 = vsel %vm2144, %v2128, -inf
    %2146 = vmax.xlane.f32.xlu0 %v2145
    %v2147 = vpop.xlane.xlu0 %2146
    %v2148 = vsel %vm2144, %v2129, -inf
    %2149 = vmax.xlane.f32.xlu0 %v2148
    %v2150 = vpop.xlane.xlu0 %2149
    %v2151 = vsel %vm2144, %v2130, -inf
    %2152 = vmax.xlane.f32.xlu0 %v2151
    %v2153 = vpop.xlane.xlu0 %2152
    %v2154 = vsel %vm2144, %v2131, -inf
    %2155 = vmax.xlane.f32.xlu0 %v2154
    %v2156 = vpop.xlane.xlu0 %2155
    %v2157 = vsel %vm2144, %v2132, -inf
    %2158 = vmax.xlane.f32.xlu0 %v2157
    %v2159 = vpop.xlane.xlu0 %2158
    %v2160 = vsel %vm2144, %v2133, -inf
    %2161 = vmax.xlane.f32.xlu0 %v2160
    %v2162 = vpop.xlane.xlu0 %2161
    %v2163 = vsel %vm2144, %v2134, -inf
    %2164 = vmax.xlane.f32.xlu0 %v2163
    %v2165 = vpop.xlane.xlu0 %2164
    %v2166 = vsel %vm2144, %v2135, -inf
    %2167 = vmax.xlane.f32.xlu0 %v2166
    %v2168 = vpop.xlane.xlu0 %2167
    %v2169 = vsel %vm2144, %v2136, -inf
    %2170 = vmax.xlane.f32.xlu0 %v2169
    %v2171 = vpop.xlane.xlu0 %2170
    %v2172 = vsel %vm2144, %v2137, -inf
    %2173 = vmax.xlane.f32.xlu0 %v2172
    %v2174 = vpop.xlane.xlu0 %2173
    %v2175 = vsel %vm2144, %v2138, -inf
    %2176 = vmax.xlane.f32.xlu0 %v2175
    %v2177 = vpop.xlane.xlu0 %2176
    %v2178 = vsel %vm2144, %v2139, -inf
    %2179 = vmax.xlane.f32.xlu0 %v2178
    %v2180 = vpop.xlane.xlu0 %2179
    %v2181 = vsel %vm2144, %v2140, -inf
    %2182 = vmax.xlane.f32.xlu0 %v2181
    %v2183 = vpop.xlane.xlu0 %2182
    %v2184 = vsel %vm2144, %v2141, -inf
    %2185 = vmax.xlane.f32.xlu0 %v2184
    %v2186 = vpop.xlane.xlu0 %2185
    %v2187 = vsel %vm2144, %v2142, -inf
    %2188 = vmax.xlane.f32.xlu0 %v2187
    %v2189 = vpop.xlane.xlu0 %2188
    %v2190 = vsel %vm2144, %v2143, -inf
    %2191 = vmax.xlane.f32.xlu0 %v2190
    %v2192 = vpop.xlane.xlu0 %2191
    %v2193 = vsub.f32 %v2128, %v2147
    %v2194 = vsub.f32 %v2129, %v2150
    %v2195 = vsub.f32 %v2130, %v2153
    %v2196 = vsub.f32 %v2131, %v2156
    %v2197 = vsub.f32 %v2132, %v2159
    %v2198 = vsub.f32 %v2133, %v2162
    %v2199 = vsub.f32 %v2134, %v2165
    %v2200 = vsub.f32 %v2135, %v2168
    %v2201 = vsub.f32 %v2136, %v2171
    %v2202 = vsub.f32 %v2137, %v2174
    %v2203 = vsub.f32 %v2138, %v2177
    %v2204 = vsub.f32 %v2139, %v2180
    %v2205 = vsub.f32 %v2140, %v2183
    %v2206 = vsub.f32 %v2141, %v2186
    %v2207 = vsub.f32 %v2142, %v2189
    %v2208 = vsub.f32 %v2143, %v2192
    %v2209 = vmul.f32 %v2193, 1.442695
    %v2210 = vpow.pop %v2209
    %v2211 = vmul.f32 %v2194, 1.442695
    %v2212 = vpow.pop %v2211
    %v2213 = vmul.f32 %v2195, 1.442695
    %v2214 = vpow.pop %v2213
    %v2215 = vmul.f32 %v2196, 1.442695
    %v2216 = vpow.pop %v2215
    %v2217 = vmul.f32 %v2197, 1.442695
    %v2218 = vpow.pop %v2217
    %v2219 = vmul.f32 %v2198, 1.442695
    %v2220 = vpow.pop %v2219
    %v2221 = vmul.f32 %v2199, 1.442695
    %v2222 = vpow.pop %v2221
    %v2223 = vmul.f32 %v2200, 1.442695
    %v2224 = vpow.pop %v2223
    %v2225 = vmul.f32 %v2201, 1.442695
    %v2226 = vpow.pop %v2225
    %v2227 = vmul.f32 %v2202, 1.442695
    %v2228 = vpow.pop %v2227
    %v2229 = vmul.f32 %v2203, 1.442695
    %v2230 = vpow.pop %v2229
    %v2231 = vmul.f32 %v2204, 1.442695
    %v2232 = vpow.pop %v2231
    %v2233 = vmul.f32 %v2205, 1.442695
    %v2234 = vpow.pop %v2233
    %v2235 = vmul.f32 %v2206, 1.442695
    %v2236 = vpow.pop %v2235
    %v2237 = vmul.f32 %v2207, 1.442695
    %v2238 = vpow.pop %v2237
    %v2239 = vmul.f32 %v2208, 1.442695
    %v2240 = vpow.pop %v2239
    %v2241 = vsel %vm2144, %v2210, 0.0
    %2242 = vadd.xlane.f32.xlu0 %v2241
    %v2243 = vpop.xlane.xlu0 %2242
    %v2244 = vsel %vm2144, %v2212, 0.0
    %2245 = vadd.xlane.f32.xlu0 %v2244
    %v2246 = vpop.xlane.xlu0 %2245
    %v2247 = vsel %vm2144, %v2214, 0.0
    %2248 = vadd.xlane.f32.xlu0 %v2247
    %v2249 = vpop.xlane.xlu0 %2248
    %v2250 = vsel %vm2144, %v2216, 0.0
    %2251 = vadd.xlane.f32.xlu0 %v2250
    %v2252 = vpop.xlane.xlu0 %2251
    %v2253 = vsel %vm2144, %v2218, 0.0
    %2254 = vadd.xlane.f32.xlu0 %v2253
    %v2255 = vpop.xlane.xlu0 %2254
    %v2256 = vsel %vm2144, %v2220, 0.0
    %2257 = vadd.xlane.f32.xlu0 %v2256
    %v2258 = vpop.xlane.xlu0 %2257
    %v2259 = vsel %vm2144, %v2222, 0.0
    %2260 = vadd.xlane.f32.xlu0 %v2259
    %v2261 = vpop.xlane.xlu0 %2260
    %v2262 = vsel %vm2144, %v2224, 0.0
    %2263 = vadd.xlane.f32.xlu0 %v2262
    %v2264 = vpop.xlane.xlu0 %2263
    %v2265 = vsel %vm2144, %v2226, 0.0
    %2266 = vadd.xlane.f32.xlu0 %v2265
    %v2267 = vpop.xlane.xlu0 %2266
    %v2268 = vsel %vm2144, %v2228, 0.0
    %2269 = vadd.xlane.f32.xlu0 %v2268
    %v2270 = vpop.xlane.xlu0 %2269
    %v2271 = vsel %vm2144, %v2230, 0.0
    %2272 = vadd.xlane.f32.xlu0 %v2271
    %v2273 = vpop.xlane.xlu0 %2272
    %v2274 = vsel %vm2144, %v2232, 0.0
    %2275 = vadd.xlane.f32.xlu0 %v2274
    %v2276 = vpop.xlane.xlu0 %2275
    %v2277 = vsel %vm2144, %v2234, 0.0
    %2278 = vadd.xlane.f32.xlu0 %v2277
    %v2279 = vpop.xlane.xlu0 %2278
    %v2280 = vsel %vm2144, %v2236, 0.0
    %2281 = vadd.xlane.f32.xlu0 %v2280
    %v2282 = vpop.xlane.xlu0 %2281
    %v2283 = vsel %vm2144, %v2238, 0.0
    %2284 = vadd.xlane.f32.xlu0 %v2283
    %v2285 = vpop.xlane.xlu0 %2284
    %v2286 = vsel %vm2144, %v2240, 0.0
    %2287 = vadd.xlane.f32.xlu0 %v2286
    %v2288 = vpop.xlane.xlu0 %2287
    %v2289 = vrcp.pop %v2243
    %v2290 = vrcp.pop %v2246
    %v2291 = vrcp.pop %v2249
    %v2292 = vrcp.pop %v2252
    %v2293 = vrcp.pop %v2255
    %v2294 = vrcp.pop %v2258
    %v2295 = vrcp.pop %v2261
    %v2296 = vrcp.pop %v2264
    %v2297 = vrcp.pop %v2267
    %v2298 = vrcp.pop %v2270
    %v2299 = vrcp.pop %v2273
    %v2300 = vrcp.pop %v2276
    %v2301 = vrcp.pop %v2279
    %v2302 = vrcp.pop %v2282
    %v2303 = vrcp.pop %v2285
    %v2304 = vrcp.pop %v2288
    %v2305 = vmul.f32 %v2210, %v2289
    %v2306 = vmul.f32 %v2212, %v2290
    %v2307 = vmul.f32 %v2214, %v2291
    %v2308 = vmul.f32 %v2216, %v2292
    %v2309 = vmul.f32 %v2218, %v2293
    %v2310 = vmul.f32 %v2220, %v2294
    %v2311 = vmul.f32 %v2222, %v2295
    %v2312 = vmul.f32 %v2224, %v2296
    %v2313 = vmul.f32 %v2226, %v2297
    %v2314 = vmul.f32 %v2228, %v2298
    %v2315 = vmul.f32 %v2230, %v2299
    %v2316 = vmul.f32 %v2232, %v2300
    %v2317 = vmul.f32 %v2234, %v2301
    %v2318 = vmul.f32 %v2236, %v2302
    %v2319 = vmul.f32 %v2238, %v2303
    %v2320 = vmul.f32 %v2240, %v2304
    %v2321 = vpack.c.bf16 %v2306, %v2305
    %v2322 = vpack.c.bf16 %v2308, %v2307
    %v2323 = vpack.c.bf16 %v2310, %v2309
    %v2324 = vpack.c.bf16 %v2312, %v2311
    %v2325 = vpack.c.bf16 %v2314, %v2313
    %v2326 = vpack.c.bf16 %v2316, %v2315
    %v2327 = vpack.c.bf16 %v2318, %v2317
    %v2328 = vpack.c.bf16 %v2320, %v2319
    %v2329 = vpack.c.bf16 %v1954, %v1950
    %v2330 = vpack.c.bf16 %v1964, %v1960
    %v2331 = vpack.c.bf16 %v1974, %v1970
    %v2332 = vpack.c.bf16 %v1984, %v1980
    %v2334 = vsel %vm2144, %v2321, 0
    %v2337 = vsel %vm2144, %v2322, 0
    %v2340 = vsel %vm2144, %v2323, 0
    %v2343 = vsel %vm2144, %v2324, 0
    %2345 = vmatprep.subr.bf16.mxu0 0
    %2346 = vmatpush1.bf16.msra.mxu0 0
    %2347 = vmatprep.subr.bf16.mxu0 0
    %2348 = vmatpush1.bf16.msra.mxu0 0
    %2349 = vmatprep.subr.bf16.mxu0 0
    %2350 = vmatpush1.bf16.msra.mxu0 0
    %2351 = vmatprep.subr.bf16.mxu0 0
    %2352 = vmatpush1.bf16.msra.mxu0 0
    %2353 = vmatprep.subr.bf16.mxu0 0
    %2354 = vmatpush1.bf16.msra.mxu0 0
    %2355 = vmatprep.subr.bf16.mxu0 0
    %2356 = vmatpush1.bf16.msra.mxu0 0
    %2357 = vmatprep.subr.bf16.mxu0 0
    %2358 = vmatpush1.bf16.msra.mxu0 %v2330
    %2359 = vmatprep.subr.bf16.mxu0 0
    %2360 = vmatpush1.bf16.msra.mxu0 %v2329
    %2361 = vmatprep.subr.bf16.mxu0 0
    %2362 = vmatpush2.bf16.msra.mxu0 0
    %2363 = vmatprep.subr.bf16.mxu0 0
    %2364 = vmatpush2.bf16.msra.mxu0 0
    %2365 = vmatprep.subr.bf16.mxu0 0
    %2366 = vmatpush2.bf16.msra.mxu0 0
    %2367 = vmatprep.subr.bf16.mxu0 0
    %2368 = vmatpush2.bf16.msra.mxu0 0
    %2369 = vmatprep.subr.bf16.mxu0 0
    %2370 = vmatpush2.bf16.msra.mxu0 0
    %2371 = vmatprep.subr.bf16.mxu0 0
    %2372 = vmatpush2.bf16.msra.mxu0 0
    %2373 = vmatprep.subr.bf16.mxu0 0
    %2374 = vmatpush2.bf16.msra.mxu0 0
    %2375 = vmatprep.subr.bf16.mxu0 0
    %2376 = vmatpush2.bf16.msra.mxu0 0
    %2377 = vmatprep.mubr.bf16.mxu0 0
    %2378 = vmatmul.mubr.bf16.gmra.mxu0 %v2334
    %v2379 = vpop.f32.mrf.mxu0
    %v2380 = vadd.f32 0.0, %v2379
    %v2381 = vpop.f32.mrf.mxu0
    %v2382 = vpop.f32.mrf.mxu0
    %v2383 = vadd.f32 0.0, %v2382
    %v2384 = vpop.f32.mrf.mxu0
    %2385 = vmatprep.mubr.bf16.mxu0 0
    %2386 = vmatmul.mubr.bf16.gmra.mxu0 %v2337
    %v2387 = vpop.f32.mrf.mxu0
    %v2388 = vadd.f32 0.0, %v2387
    %v2389 = vpop.f32.mrf.mxu0
    %v2390 = vpop.f32.mrf.mxu0
    %v2391 = vadd.f32 0.0, %v2390
    %v2392 = vpop.f32.mrf.mxu0
    %2393 = vmatprep.mubr.bf16.mxu0 0
    %2394 = vmatmul.mubr.bf16.gmra.mxu0 %v2340
    %v2395 = vpop.f32.mrf.mxu0
    %v2396 = vadd.f32 0.0, %v2395
    %v2397 = vpop.f32.mrf.mxu0
    %v2398 = vpop.f32.mrf.mxu0
    %v2399 = vadd.f32 0.0, %v2398
    %v2400 = vpop.f32.mrf.mxu0
    %2401 = vmatprep.mubr.bf16.mxu0 0
    %2402 = vmatmul.mubr.bf16.gmra.mxu0 %v2343
    %v2403 = vpop.f32.mrf.mxu0
    %v2404 = vadd.f32 0.0, %v2403
    %v2405 = vpop.f32.mrf.mxu0
    %v2406 = vpop.f32.mrf.mxu0
    %v2407 = vadd.f32 0.0, %v2406
    %v2408 = vpop.f32.mrf.mxu0
    %2409 = vdwg.mxu0
    %v2411 = vsel %vm2144, %v2325, 0
    %v2414 = vsel %vm2144, %v2326, 0
    %v2417 = vsel %vm2144, %v2327, 0
    %v2420 = vsel %vm2144, %v2328, 0
    %2422 = vmatprep.subr.bf16.mxu0 0
    %2423 = vmatpush1.bf16.msra.mxu0 0
    %2424 = vmatprep.subr.bf16.mxu0 0
    %2425 = vmatpush1.bf16.msra.mxu0 0
    %2426 = vmatprep.subr.bf16.mxu0 0
    %2427 = vmatpush1.bf16.msra.mxu0 0
    %2428 = vmatprep.subr.bf16.mxu0 0
    %2429 = vmatpush1.bf16.msra.mxu0 0
    %2430 = vmatprep.subr.bf16.mxu0 0
    %2431 = vmatpush1.bf16.msra.mxu0 0
    %2432 = vmatprep.subr.bf16.mxu0 0
    %2433 = vmatpush1.bf16.msra.mxu0 0
    %2434 = vmatprep.subr.bf16.mxu0 0
    %2435 = vmatpush1.bf16.msra.mxu0 %v2332
    %2436 = vmatprep.subr.bf16.mxu0 0
    %2437 = vmatpush1.bf16.msra.mxu0 %v2331
    %2438 = vmatprep.subr.bf16.mxu0 0
    %2439 = vmatpush2.bf16.msra.mxu0 0
    %2440 = vmatprep.subr.bf16.mxu0 0
    %2441 = vmatpush2.bf16.msra.mxu0 0
    %2442 = vmatprep.subr.bf16.mxu0 0
    %2443 = vmatpush2.bf16.msra.mxu0 0
    %2444 = vmatprep.subr.bf16.mxu0 0
    %2445 = vmatpush2.bf16.msra.mxu0 0
    %2446 = vmatprep.subr.bf16.mxu0 0
    %2447 = vmatpush2.bf16.msra.mxu0 0
    %2448 = vmatprep.subr.bf16.mxu0 0
    %2449 = vmatpush2.bf16.msra.mxu0 0
    %2450 = vmatprep.subr.bf16.mxu0 0
    %2451 = vmatpush2.bf16.msra.mxu0 0
    %2452 = vmatprep.subr.bf16.mxu0 0
    %2453 = vmatpush2.bf16.msra.mxu0 0
    %2454 = vmatprep.mubr.bf16.mxu0 0
    %2455 = vmatmul.mubr.bf16.gmra.mxu0 %v2411
    %v2456 = vpop.f32.mrf.mxu0
    %v2457 = vadd.f32 0.0, %v2456
    %v2458 = vpop.f32.mrf.mxu0
    %v2459 = vpop.f32.mrf.mxu0
    %v2460 = vadd.f32 0.0, %v2459
    %v2461 = vpop.f32.mrf.mxu0
    %2462 = vmatprep.mubr.bf16.mxu0 0
    %2463 = vmatmul.mubr.bf16.gmra.mxu0 %v2414
    %v2464 = vpop.f32.mrf.mxu0
    %v2465 = vadd.f32 0.0, %v2464
    %v2466 = vpop.f32.mrf.mxu0
    %v2467 = vpop.f32.mrf.mxu0
    %v2468 = vadd.f32 0.0, %v2467
    %v2469 = vpop.f32.mrf.mxu0
    %2470 = vmatprep.mubr.bf16.mxu0 0
    %2471 = vmatmul.mubr.bf16.gmra.mxu0 %v2417
    %v2472 = vpop.f32.mrf.mxu0
    %v2473 = vadd.f32 0.0, %v2472
    %v2474 = vpop.f32.mrf.mxu0
    %v2475 = vpop.f32.mrf.mxu0
    %v2476 = vadd.f32 0.0, %v2475
    %v2477 = vpop.f32.mrf.mxu0
    %2478 = vmatprep.mubr.bf16.mxu0 0
    %2479 = vmatmul.mubr.bf16.gmra.mxu0 %v2420
    %v2480 = vpop.f32.mrf.mxu0
    %v2481 = vadd.f32 0.0, %v2480
    %v2482 = vpop.f32.mrf.mxu0
    %v2483 = vpop.f32.mrf.mxu0
    %v2484 = vadd.f32 0.0, %v2483
    %v2485 = vpop.f32.mrf.mxu0
    %2486 = vdwg.mxu0
    %v2487 = vpack.c.bf16 %v2383, %v2380
    %v2488 = vpack.c.bf16 %v2391, %v2388
    %v2489 = vpack.c.bf16 %v2399, %v2396
    %v2490 = vpack.c.bf16 %v2407, %v2404
    %v2491 = vpack.c.bf16 %v2460, %v2457
    %v2492 = vpack.c.bf16 %v2468, %v2465
    %v2493 = vpack.c.bf16 %v2476, %v2473
    %v2494 = vpack.c.bf16 %v2484, %v2481
    %v2495 = vld [vmem:[#allocation13] sm:$0xf]
    %v2496 = vld [vmem:[#allocation13 + $0x4] sm:$0xf]
    %v2497 = vld [vmem:[#allocation13 + $0x8] sm:$0xf]
    %v2498 = vld [vmem:[#allocation13 + $0xc] sm:$0xf]
    %v2499 = vld [vmem:[#allocation13 + $0x10] sm:$0xf]
    %v2500 = vld [vmem:[#allocation13 + $0x14] sm:$0xf]
    %v2501 = vld [vmem:[#allocation13 + $0x18] sm:$0xf]
    %v2502 = vld [vmem:[#allocation13 + $0x1c] sm:$0xf]
    %v2503 = vld [vmem:[#allocation13 + $0x20] sm:$0xf]
    %v2504 = vld [vmem:[#allocation13 + $0x24] sm:$0xf]
    %v2505 = vld [vmem:[#allocation13 + $0x28] sm:$0xf]
    %v2506 = vld [vmem:[#allocation13 + $0x2c] sm:$0xf]
    %v2507 = vld [vmem:[#allocation13 + $0x30] sm:$0xf]
    %v2508 = vld [vmem:[#allocation13 + $0x34] sm:$0xf]
    %v2509 = vld [vmem:[#allocation13 + $0x38] sm:$0xf]
    %v2510 = vld [vmem:[#allocation13 + $0x3c] sm:$0xf]
    %v2527 = vunpack.c.l.b16 %v2495
    %v2528 = vunpack.c.l.b16 %v2496
    %v2529 = vunpack.c.l.b16 %v2497
    %v2530 = vunpack.c.l.b16 %v2498
    %v2531 = vunpack.c.l.b16 %v2499
    %v2532 = vunpack.c.l.b16 %v2500
    %v2533 = vunpack.c.l.b16 %v2501
    %v2534 = vunpack.c.l.b16 %v2502
    %v2535 = vunpack.c.l.b16 %v2503
    %v2536 = vunpack.c.l.b16 %v2504
    %v2537 = vunpack.c.l.b16 %v2505
    %v2538 = vunpack.c.l.b16 %v2506
    %v2539 = vunpack.c.l.b16 %v2507
    %v2540 = vunpack.c.l.b16 %v2508
    %v2541 = vunpack.c.l.b16 %v2509
    %v2542 = vunpack.c.l.b16 %v2510
    %v2543 = vpack.c.b16 %v2528, %v2527
    %v2544 = vpack.c.b16 %v2530, %v2529
    %v2545 = vpack.c.b16 %v2532, %v2531
    %v2546 = vpack.c.b16 %v2534, %v2533
    %v2547 = vpack.c.b16 %v2536, %v2535
    %v2548 = vpack.c.b16 %v2538, %v2537
    %v2549 = vpack.c.b16 %v2540, %v2539
    %v2550 = vpack.c.b16 %v2542, %v2541
    %2559 = vmatprep.subr.bf16.mxu0 0
    %2560 = vmatpush1.bf16.msra.mxu0 %v2550
    %2561 = vmatprep.subr.bf16.mxu0 0
    %2562 = vmatpush1.bf16.msra.mxu0 %v2549
    %2563 = vmatprep.subr.bf16.mxu0 0
    %2564 = vmatpush1.bf16.msra.mxu0 %v2548
    %2565 = vmatprep.subr.bf16.mxu0 0
    %2566 = vmatpush1.bf16.msra.mxu0 %v2547
    %2567 = vmatprep.subr.bf16.mxu0 0
    %2568 = vmatpush1.bf16.msra.mxu0 %v2546
    %2569 = vmatprep.subr.bf16.mxu0 0
    %2570 = vmatpush1.bf16.msra.mxu0 %v2545
    %2571 = vmatprep.subr.bf16.mxu0 0
    %2572 = vmatpush1.bf16.msra.mxu0 %v2544
    %2573 = vmatprep.subr.bf16.mxu0 0
    %2574 = vmatpush1.bf16.msra.mxu0 %v2543
    %2575 = vmatprep.subr.bf16.mxu0 0
    %2576 = vmatpush2.bf16.msra.mxu0 0
    %2577 = vmatprep.subr.bf16.mxu0 0
    %2578 = vmatpush2.bf16.msra.mxu0 0
    %2579 = vmatprep.subr.bf16.mxu0 0
    %2580 = vmatpush2.bf16.msra.mxu0 0
    %2581 = vmatprep.subr.bf16.mxu0 0
    %2582 = vmatpush2.bf16.msra.mxu0 0
    %2583 = vmatprep.subr.bf16.mxu0 0
    %2584 = vmatpush2.bf16.msra.mxu0 0
    %2585 = vmatprep.subr.bf16.mxu0 0
    %2586 = vmatpush2.bf16.msra.mxu0 0
    %2587 = vmatprep.subr.bf16.mxu0 0
    %2588 = vmatpush2.bf16.msra.mxu0 0
    %2589 = vmatprep.subr.bf16.mxu0 0
    %2590 = vmatpush2.bf16.msra.mxu0 0
    %2591 = vmatprep.mubr.bf16.mxu0 0
    %2592 = vmatmul.mubr.bf16.gmra.mxu0 %v2487
    %v2593 = vpop.f32.mrf.mxu0
    %v2594 = vadd.f32 0.0, %v2593
    %v2595 = vpop.f32.mrf.mxu0
    %v2596 = vpop.f32.mrf.mxu0
    %v2597 = vadd.f32 0.0, %v2596
    %v2598 = vpop.f32.mrf.mxu0
    %2599 = vmatprep.mubr.bf16.mxu0 0
    %2600 = vmatmul.mubr.bf16.gmra.mxu0 %v2488
    %v2601 = vpop.f32.mrf.mxu0
    %v2602 = vadd.f32 0.0, %v2601
    %v2603 = vpop.f32.mrf.mxu0
    %v2604 = vpop.f32.mrf.mxu0
    %v2605 = vadd.f32 0.0, %v2604
    %v2606 = vpop.f32.mrf.mxu0
    %2607 = vmatprep.mubr.bf16.mxu0 0
    %2608 = vmatmul.mubr.bf16.gmra.mxu0 %v2489
    %v2609 = vpop.f32.mrf.mxu0
    %v2610 = vadd.f32 0.0, %v2609
    %v2611 = vpop.f32.mrf.mxu0
    %v2612 = vpop.f32.mrf.mxu0
    %v2613 = vadd.f32 0.0, %v2612
    %v2614 = vpop.f32.mrf.mxu0
    %2615 = vmatprep.mubr.bf16.mxu0 0
    %2616 = vmatmul.mubr.bf16.gmra.mxu0 %v2490
    %v2617 = vpop.f32.mrf.mxu0
    %v2618 = vadd.f32 0.0, %v2617
    %v2619 = vpop.f32.mrf.mxu0
    %v2620 = vpop.f32.mrf.mxu0
    %v2621 = vadd.f32 0.0, %v2620
    %v2622 = vpop.f32.mrf.mxu0
    %2623 = vmatprep.mubr.bf16.mxu0 0
    %2624 = vmatmul.mubr.bf16.gmra.mxu0 %v2491
    %v2625 = vpop.f32.mrf.mxu0
    %v2626 = vadd.f32 0.0, %v2625
    %v2627 = vpop.f32.mrf.mxu0
    %v2628 = vpop.f32.mrf.mxu0
    %v2629 = vadd.f32 0.0, %v2628
    %v2630 = vpop.f32.mrf.mxu0
    %2631 = vmatprep.mubr.bf16.mxu0 0
    %2632 = vmatmul.mubr.bf16.gmra.mxu0 %v2492
    %v2633 = vpop.f32.mrf.mxu0
    %v2634 = vadd.f32 0.0, %v2633
    %v2635 = vpop.f32.mrf.mxu0
    %v2636 = vpop.f32.mrf.mxu0
    %v2637 = vadd.f32 0.0, %v2636
    %v2638 = vpop.f32.mrf.mxu0
    %2639 = vmatprep.mubr.bf16.mxu0 0
    %2640 = vmatmul.mubr.bf16.gmra.mxu0 %v2493
    %v2641 = vpop.f32.mrf.mxu0
    %v2642 = vadd.f32 0.0, %v2641
    %v2643 = vpop.f32.mrf.mxu0
    %v2644 = vpop.f32.mrf.mxu0
    %v2645 = vadd.f32 0.0, %v2644
    %v2646 = vpop.f32.mrf.mxu0
    %2647 = vmatprep.mubr.bf16.mxu0 0
    %2648 = vmatmul.mubr.bf16.gmra.mxu0 %v2494
    %v2649 = vpop.f32.mrf.mxu0
    %v2650 = vadd.f32 0.0, %v2649
    %v2651 = vpop.f32.mrf.mxu0
    %v2652 = vpop.f32.mrf.mxu0
    %v2653 = vadd.f32 0.0, %v2652
    %v2654 = vpop.f32.mrf.mxu0
    %2655 = vdwg.mxu0
    %v2656 = vadd.f32 %v1452, %v2594
    %v2657 = vadd.f32 %v1453, %v2597
    %v2658 = vadd.f32 %v1454, %v2602
    %v2659 = vadd.f32 %v1455, %v2605
    %v2660 = vadd.f32 %v1456, %v2610
    %v2661 = vadd.f32 %v1457, %v2613
    %v2662 = vadd.f32 %v1458, %v2618
    %v2663 = vadd.f32 %v1459, %v2621
    %v2664 = vadd.f32 %v1460, %v2626
    %v2665 = vadd.f32 %v1461, %v2629
    %v2666 = vadd.f32 %v1462, %v2634
    %v2667 = vadd.f32 %v1463, %v2637
    %v2668 = vadd.f32 %v1464, %v2642
    %v2669 = vadd.f32 %v1465, %v2645
    %v2670 = vadd.f32 %v1466, %v2650
    %v2671 = vadd.f32 %v1467, %v2653
    %2672 = vadd.xlane.f32.xlu0 %v2656
    %v2673 = vpop.xlane.xlu0 %2672
    %2674 = vadd.xlane.f32.xlu0 %v2657
    %v2675 = vpop.xlane.xlu0 %2674
    %2676 = vadd.xlane.f32.xlu0 %v2658
    %v2677 = vpop.xlane.xlu0 %2676
    %2678 = vadd.xlane.f32.xlu0 %v2659
    %v2679 = vpop.xlane.xlu0 %2678
    %2680 = vadd.xlane.f32.xlu0 %v2660
    %v2681 = vpop.xlane.xlu0 %2680
    %2682 = vadd.xlane.f32.xlu0 %v2661
    %v2683 = vpop.xlane.xlu0 %2682
    %2684 = vadd.xlane.f32.xlu0 %v2662
    %v2685 = vpop.xlane.xlu0 %2684
    %2686 = vadd.xlane.f32.xlu0 %v2663
    %v2687 = vpop.xlane.xlu0 %2686
    %2688 = vadd.xlane.f32.xlu0 %v2664
    %v2689 = vpop.xlane.xlu0 %2688
    %2690 = vadd.xlane.f32.xlu0 %v2665
    %v2691 = vpop.xlane.xlu0 %2690
    %2692 = vadd.xlane.f32.xlu0 %v2666
    %v2693 = vpop.xlane.xlu0 %2692
    %2694 = vadd.xlane.f32.xlu0 %v2667
    %v2695 = vpop.xlane.xlu0 %2694
    %2696 = vadd.xlane.f32.xlu0 %v2668
    %v2697 = vpop.xlane.xlu0 %2696
    %2698 = vadd.xlane.f32.xlu0 %v2669
    %v2699 = vpop.xlane.xlu0 %2698
    %2700 = vadd.xlane.f32.xlu0 %v2670
    %v2701 = vpop.xlane.xlu0 %2700
    %2702 = vadd.xlane.f32.xlu0 %v2671
    %v2703 = vpop.xlane.xlu0 %2702
    %v2704 = vmul.f32 %v2673, %v251
    %v2705 = vmul.f32 %v2675, %v251
    %v2706 = vmul.f32 %v2677, %v251
    %v2707 = vmul.f32 %v2679, %v251
    %v2708 = vmul.f32 %v2681, %v251
    %v2709 = vmul.f32 %v2683, %v251
    %v2710 = vmul.f32 %v2685, %v251
    %v2711 = vmul.f32 %v2687, %v251
    %v2712 = vmul.f32 %v2689, %v251
    %v2713 = vmul.f32 %v2691, %v251
    %v2714 = vmul.f32 %v2693, %v251
    %v2715 = vmul.f32 %v2695, %v251
    %v2716 = vmul.f32 %v2697, %v251
    %v2717 = vmul.f32 %v2699, %v251
    %v2718 = vmul.f32 %v2701, %v251
    %v2719 = vmul.f32 %v2703, %v251
    %v2720 = vsub.f32 %v2656, %v2704
    %v2721 = vsub.f32 %v2657, %v2705
    %v2722 = vsub.f32 %v2658, %v2706
    %v2723 = vsub.f32 %v2659, %v2707
    %v2724 = vsub.f32 %v2660, %v2708
    %v2725 = vsub.f32 %v2661, %v2709
    %v2726 = vsub.f32 %v2662, %v2710
    %v2727 = vsub.f32 %v2663, %v2711
    %v2728 = vsub.f32 %v2664, %v2712
    %v2729 = vsub.f32 %v2665, %v2713
    %v2730 = vsub.f32 %v2666, %v2714
    %v2731 = vsub.f32 %v2667, %v2715
    %v2732 = vsub.f32 %v2668, %v2716
    %v2733 = vsub.f32 %v2669, %v2717
    %v2734 = vsub.f32 %v2670, %v2718
    %v2735 = vsub.f32 %v2671, %v2719
    %v2736 = vmul.f32 %v2720, %v2720
    %v2737 = vmul.f32 %v2721, %v2721
    %v2738 = vmul.f32 %v2722, %v2722
    %v2739 = vmul.f32 %v2723, %v2723
    %v2740 = vmul.f32 %v2724, %v2724
    %v2741 = vmul.f32 %v2725, %v2725
    %v2742 = vmul.f32 %v2726, %v2726
    %v2743 = vmul.f32 %v2727, %v2727
    %v2744 = vmul.f32 %v2728, %v2728
    %v2745 = vmul.f32 %v2729, %v2729
    %v2746 = vmul.f32 %v2730, %v2730
    %v2747 = vmul.f32 %v2731, %v2731
    %v2748 = vmul.f32 %v2732, %v2732
    %v2749 = vmul.f32 %v2733, %v2733
    %v2750 = vmul.f32 %v2734, %v2734
    %v2751 = vmul.f32 %v2735, %v2735
    %2752 = vadd.xlane.f32.xlu0 %v2736
    %v2753 = vpop.xlane.xlu0 %2752
    %2754 = vadd.xlane.f32.xlu0 %v2737
    %v2755 = vpop.xlane.xlu0 %2754
    %2756 = vadd.xlane.f32.xlu0 %v2738
    %v2757 = vpop.xlane.xlu0 %2756
    %2758 = vadd.xlane.f32.xlu0 %v2739
    %v2759 = vpop.xlane.xlu0 %2758
    %2760 = vadd.xlane.f32.xlu0 %v2740
    %v2761 = vpop.xlane.xlu0 %2760
    %2762 = vadd.xlane.f32.xlu0 %v2741
    %v2763 = vpop.xlane.xlu0 %2762
    %2764 = vadd.xlane.f32.xlu0 %v2742
    %v2765 = vpop.xlane.xlu0 %2764
    %2766 = vadd.xlane.f32.xlu0 %v2743
    %v2767 = vpop.xlane.xlu0 %2766
    %2768 = vadd.xlane.f32.xlu0 %v2744
    %v2769 = vpop.xlane.xlu0 %2768
    %2770 = vadd.xlane.f32.xlu0 %v2745
    %v2771 = vpop.xlane.xlu0 %2770
    %2772 = vadd.xlane.f32.xlu0 %v2746
    %v2773 = vpop.xlane.xlu0 %2772
    %2774 = vadd.xlane.f32.xlu0 %v2747
    %v2775 = vpop.xlane.xlu0 %2774
    %2776 = vadd.xlane.f32.xlu0 %v2748
    %v2777 = vpop.xlane.xlu0 %2776
    %2778 = vadd.xlane.f32.xlu0 %v2749
    %v2779 = vpop.xlane.xlu0 %2778
    %2780 = vadd.xlane.f32.xlu0 %v2750
    %v2781 = vpop.xlane.xlu0 %2780
    %2782 = vadd.xlane.f32.xlu0 %v2751
    %v2783 = vpop.xlane.xlu0 %2782
    %v2784 = vmul.f32 %v2753, %v251
    %v2785 = vmul.f32 %v2755, %v251
    %v2786 = vmul.f32 %v2757, %v251
    %v2787 = vmul.f32 %v2759, %v251
    %v2788 = vmul.f32 %v2761, %v251
    %v2789 = vmul.f32 %v2763, %v251
    %v2790 = vmul.f32 %v2765, %v251
    %v2791 = vmul.f32 %v2767, %v251
    %v2792 = vmul.f32 %v2769, %v251
    %v2793 = vmul.f32 %v2771, %v251
    %v2794 = vmul.f32 %v2773, %v251
    %v2795 = vmul.f32 %v2775, %v251
    %v2796 = vmul.f32 %v2777, %v251
    %v2797 = vmul.f32 %v2779, %v251
    %v2798 = vmul.f32 %v2781, %v251
    %v2799 = vmul.f32 %v2783, %v251
    %v2800 = vadd.f32 %v2784, 1e-06
    %v2801 = vadd.f32 %v2785, 1e-06
    %v2802 = vadd.f32 %v2786, 1e-06
    %v2803 = vadd.f32 %v2787, 1e-06
    %v2804 = vadd.f32 %v2788, 1e-06
    %v2805 = vadd.f32 %v2789, 1e-06
    %v2806 = vadd.f32 %v2790, 1e-06
    %v2807 = vadd.f32 %v2791, 1e-06
    %v2808 = vadd.f32 %v2792, 1e-06
    %v2809 = vadd.f32 %v2793, 1e-06
    %v2810 = vadd.f32 %v2794, 1e-06
    %v2811 = vadd.f32 %v2795, 1e-06
    %v2812 = vadd.f32 %v2796, 1e-06
    %v2813 = vadd.f32 %v2797, 1e-06
    %v2814 = vadd.f32 %v2798, 1e-06
    %v2815 = vadd.f32 %v2799, 1e-06
    %v2816 = vrsqrt.pop %v2800
    %v2817 = vrsqrt.pop %v2801
    %v2818 = vrsqrt.pop %v2802
    %v2819 = vrsqrt.pop %v2803
    %v2820 = vrsqrt.pop %v2804
    %v2821 = vrsqrt.pop %v2805
    %v2822 = vrsqrt.pop %v2806
    %v2823 = vrsqrt.pop %v2807
    %v2824 = vrsqrt.pop %v2808
    %v2825 = vrsqrt.pop %v2809
    %v2826 = vrsqrt.pop %v2810
    %v2827 = vrsqrt.pop %v2811
    %v2828 = vrsqrt.pop %v2812
    %v2829 = vrsqrt.pop %v2813
    %v2830 = vrsqrt.pop %v2814
    %v2831 = vrsqrt.pop %v2815
    %v2832 = vmul.f32 %v2720, %v2816
    %v2833 = vmul.f32 %v2721, %v2817
    %v2834 = vmul.f32 %v2722, %v2818
    %v2835 = vmul.f32 %v2723, %v2819
    %v2836 = vmul.f32 %v2724, %v2820
    %v2837 = vmul.f32 %v2725, %v2821
    %v2838 = vmul.f32 %v2726, %v2822
    %v2839 = vmul.f32 %v2727, %v2823
    %v2840 = vmul.f32 %v2728, %v2824
    %v2841 = vmul.f32 %v2729, %v2825
    %v2842 = vmul.f32 %v2730, %v2826
    %v2843 = vmul.f32 %v2731, %v2827
    %v2844 = vmul.f32 %v2732, %v2828
    %v2845 = vmul.f32 %v2733, %v2829
    %v2846 = vmul.f32 %v2734, %v2830
    %v2847 = vmul.f32 %v2735, %v2831
    %v2848 = vpack.c.bf16 %v2833, %v2832
    %v2849 = vpack.c.bf16 %v2835, %v2834
    %v2850 = vpack.c.bf16 %v2837, %v2836
    %v2851 = vpack.c.bf16 %v2839, %v2838
    %v2852 = vpack.c.bf16 %v2841, %v2840
    %v2853 = vpack.c.bf16 %v2843, %v2842
    %v2854 = vpack.c.bf16 %v2845, %v2844
    %v2855 = vpack.c.bf16 %v2847, %v2846
    %v2856 = vld [vmem:[#allocation14] sm:$0xff]
    %v2857 = vld [vmem:[#allocation14 + $0x8] sm:$0xff]
    %v2858 = vld [vmem:[#allocation14 + $0x10] sm:$0xff]
    %v2859 = vld [vmem:[#allocation14 + $0x18] sm:$0xff]
    %v2860 = vld [vmem:[#allocation14 + $0x20] sm:$0xff]
    %v2861 = vld [vmem:[#allocation14 + $0x28] sm:$0xff]
    %v2862 = vld [vmem:[#allocation14 + $0x30] sm:$0xff]
    %v2863 = vld [vmem:[#allocation14 + $0x38] sm:$0xff]
    %v2864 = vld [vmem:[#allocation14 + $0x40] sm:$0xff]
    %v2865 = vld [vmem:[#allocation14 + $0x48] sm:$0xff]
    %v2866 = vld [vmem:[#allocation14 + $0x50] sm:$0xff]
    %v2867 = vld [vmem:[#allocation14 + $0x58] sm:$0xff]
    %v2868 = vld [vmem:[#allocation14 + $0x60] sm:$0xff]
    %v2869 = vld [vmem:[#allocation14 + $0x68] sm:$0xff]
    %v2870 = vld [vmem:[#allocation14 + $0x70] sm:$0xff]
    %v2871 = vld [vmem:[#allocation14 + $0x78] sm:$0xff]
    %v2888 = vunpack.c.l.b16 %v2856
    %v2889 = vunpack.c.h.b16 %v2856
    %v2890 = vunpack.c.l.b16 %v2857
    %v2891 = vunpack.c.h.b16 %v2857
    %v2892 = vunpack.c.l.b16 %v2858
    %v2893 = vunpack.c.h.b16 %v2858
    %v2894 = vunpack.c.l.b16 %v2859
    %v2895 = vunpack.c.h.b16 %v2859
    %v2896 = vunpack.c.l.b16 %v2860
    %v2897 = vunpack.c.h.b16 %v2860
    %v2898 = vunpack.c.l.b16 %v2861
    %v2899 = vunpack.c.h.b16 %v2861
    %v2900 = vunpack.c.l.b16 %v2862
    %v2901 = vunpack.c.h.b16 %v2862
    %v2902 = vunpack.c.l.b16 %v2863
    %v2903 = vunpack.c.h.b16 %v2863
    %v2904 = vunpack.c.l.b16 %v2864
    %v2905 = vunpack.c.h.b16 %v2864
    %v2906 = vunpack.c.l.b16 %v2865
    %v2907 = vunpack.c.h.b16 %v2865
    %v2908 = vunpack.c.l.b16 %v2866
    %v2909 = vunpack.c.h.b16 %v2866
    %v2910 = vunpack.c.l.b16 %v2867
    %v2911 = vunpack.c.h.b16 %v2867
    %v2912 = vunpack.c.l.b16 %v2868
    %v2913 = vunpack.c.h.b16 %v2868
    %v2914 = vunpack.c.l.b16 %v2869
    %v2915 = vunpack.c.h.b16 %v2869
    %v2916 = vunpack.c.l.b16 %v2870
    %v2917 = vunpack.c.h.b16 %v2870
    %v2918 = vunpack.c.l.b16 %v2871
    %v2919 = vunpack.c.h.b16 %v2871
    %v2920 = vpack.c.b16 %v2890, %v2888
    %v2921 = vpack.c.b16 %v2891, %v2889
    %v2922 = vpack.c.b16 %v2894, %v2892
    %v2923 = vpack.c.b16 %v2895, %v2893
    %v2924 = vpack.c.b16 %v2898, %v2896
    %v2925 = vpack.c.b16 %v2899, %v2897
    %v2926 = vpack.c.b16 %v2902, %v2900
    %v2927 = vpack.c.b16 %v2903, %v2901
    %v2928 = vpack.c.b16 %v2906, %v2904
    %v2929 = vpack.c.b16 %v2907, %v2905
    %v2930 = vpack.c.b16 %v2910, %v2908
    %v2931 = vpack.c.b16 %v2911, %v2909
    %v2932 = vpack.c.b16 %v2914, %v2912
    %v2933 = vpack.c.b16 %v2915, %v2913
    %v2934 = vpack.c.b16 %v2918, %v2916
    %v2935 = vpack.c.b16 %v2919, %v2917
    %2952 = vmatprep.subr.bf16.mxu0 %v2935
    %2953 = vmatpush1.bf16.msra.mxu0 %v2934
    %2954 = vmatprep.subr.bf16.mxu0 %v2933
    %2955 = vmatpush1.bf16.msra.mxu0 %v2932
    %2956 = vmatprep.subr.bf16.mxu0 %v2931
    %2957 = vmatpush1.bf16.msra.mxu0 %v2930
    %2958 = vmatprep.subr.bf16.mxu0 %v2929
    %2959 = vmatpush1.bf16.msra.mxu0 %v2928
    %2960 = vmatprep.subr.bf16.mxu0 %v2927
    %2961 = vmatpush1.bf16.msra.mxu0 %v2926
    %2962 = vmatprep.subr.bf16.mxu0 %v2925
    %2963 = vmatpush1.bf16.msra.mxu0 %v2924
    %2964 = vmatprep.subr.bf16.mxu0 %v2923
    %2965 = vmatpush1.bf16.msra.mxu0 %v2922
    %2966 = vmatprep.subr.bf16.mxu0 %v2921
    %2967 = vmatpush1.bf16.msra.mxu0 %v2920
    %2968 = vmatprep.subr.bf16.mxu0 0
    %2969 = vmatpush2.bf16.msra.mxu0 0
    %2970 = vmatprep.subr.bf16.mxu0 0
    %2971 = vmatpush2.bf16.msra.mxu0 0
    %2972 = vmatprep.subr.bf16.mxu0 0
    %2973 = vmatpush2.bf16.msra.mxu0 0
    %2974 = vmatprep.subr.bf16.mxu0 0
    %2975 = vmatpush2.bf16.msra.mxu0 0
    %2976 = vmatprep.subr.bf16.mxu0 0
    %2977 = vmatpush2.bf16.msra.mxu0 0
    %2978 = vmatprep.subr.bf16.mxu0 0
    %2979 = vmatpush2.bf16.msra.mxu0 0
    %2980 = vmatprep.subr.bf16.mxu0 0
    %2981 = vmatpush2.bf16.msra.mxu0 0
    %2982 = vmatprep.subr.bf16.mxu0 0
    %2983 = vmatpush2.bf16.msra.mxu0 0
    %2984 = vmatprep.mubr.bf16.mxu0 0
    %2985 = vmatmul.mubr.bf16.gmra.mxu0 %v2848
    %v2986 = vpop.f32.mrf.mxu0
    %v2987 = vadd.f32 0.0, %v2986
    %v2988 = vpop.f32.mrf.mxu0
    %v2989 = vadd.f32 0.0, %v2988
    %v2990 = vpop.f32.mrf.mxu0
    %v2991 = vadd.f32 0.0, %v2990
    %v2992 = vpop.f32.mrf.mxu0
    %v2993 = vadd.f32 0.0, %v2992
    %2994 = vmatprep.mubr.bf16.mxu0 0
    %2995 = vmatmul.mubr.bf16.gmra.mxu0 %v2849
    %v2996 = vpop.f32.mrf.mxu0
    %v2997 = vadd.f32 0.0, %v2996
    %v2998 = vpop.f32.mrf.mxu0
    %v2999 = vadd.f32 0.0, %v2998
    %v3000 = vpop.f32.mrf.mxu0
    %v3001 = vadd.f32 0.0, %v3000
    %v3002 = vpop.f32.mrf.mxu0
    %v3003 = vadd.f32 0.0, %v3002
    %3004 = vmatprep.mubr.bf16.mxu0 0
    %3005 = vmatmul.mubr.bf16.gmra.mxu0 %v2850
    %v3006 = vpop.f32.mrf.mxu0
    %v3007 = vadd.f32 0.0, %v3006
    %v3008 = vpop.f32.mrf.mxu0
    %v3009 = vadd.f32 0.0, %v3008
    %v3010 = vpop.f32.mrf.mxu0
    %v3011 = vadd.f32 0.0, %v3010
    %v3012 = vpop.f32.mrf.mxu0
    %v3013 = vadd.f32 0.0, %v3012
    %3014 = vmatprep.mubr.bf16.mxu0 0
    %3015 = vmatmul.mubr.bf16.gmra.mxu0 %v2851
    %v3016 = vpop.f32.mrf.mxu0
    %v3017 = vadd.f32 0.0, %v3016
    %v3018 = vpop.f32.mrf.mxu0
    %v3019 = vadd.f32 0.0, %v3018
    %v3020 = vpop.f32.mrf.mxu0
    %v3021 = vadd.f32 0.0, %v3020
    %v3022 = vpop.f32.mrf.mxu0
    %v3023 = vadd.f32 0.0, %v3022
    %3024 = vmatprep.mubr.bf16.mxu0 0
    %3025 = vmatmul.mubr.bf16.gmra.mxu0 %v2852
    %v3026 = vpop.f32.mrf.mxu0
    %v3027 = vadd.f32 0.0, %v3026
    %v3028 = vpop.f32.mrf.mxu0
    %v3029 = vadd.f32 0.0, %v3028
    %v3030 = vpop.f32.mrf.mxu0
    %v3031 = vadd.f32 0.0, %v3030
    %v3032 = vpop.f32.mrf.mxu0
    %v3033 = vadd.f32 0.0, %v3032
    %3034 = vmatprep.mubr.bf16.mxu0 0
    %3035 = vmatmul.mubr.bf16.gmra.mxu0 %v2853
    %v3036 = vpop.f32.mrf.mxu0
    %v3037 = vadd.f32 0.0, %v3036
    %v3038 = vpop.f32.mrf.mxu0
    %v3039 = vadd.f32 0.0, %v3038
    %v3040 = vpop.f32.mrf.mxu0
    %v3041 = vadd.f32 0.0, %v3040
    %v3042 = vpop.f32.mrf.mxu0
    %v3043 = vadd.f32 0.0, %v3042
    %3044 = vmatprep.mubr.bf16.mxu0 0
    %3045 = vmatmul.mubr.bf16.gmra.mxu0 %v2854
    %v3046 = vpop.f32.mrf.mxu0
    %v3047 = vadd.f32 0.0, %v3046
    %v3048 = vpop.f32.mrf.mxu0
    %v3049 = vadd.f32 0.0, %v3048
    %v3050 = vpop.f32.mrf.mxu0
    %v3051 = vadd.f32 0.0, %v3050
    %v3052 = vpop.f32.mrf.mxu0
    %v3053 = vadd.f32 0.0, %v3052
    %3054 = vmatprep.mubr.bf16.mxu0 0
    %3055 = vmatmul.mubr.bf16.gmra.mxu0 %v2855
    %v3056 = vpop.f32.mrf.mxu0
    %v3057 = vadd.f32 0.0, %v3056
    %v3058 = vpop.f32.mrf.mxu0
    %v3059 = vadd.f32 0.0, %v3058
    %v3060 = vpop.f32.mrf.mxu0
    %v3061 = vadd.f32 0.0, %v3060
    %v3062 = vpop.f32.mrf.mxu0
    %v3063 = vadd.f32 0.0, %v3062
    %3064 = vdwg.mxu0
    %v3065 = vmul.f32 %v2987, %v2987
    %v3066 = vmul.f32 %v2989, %v2989
    %v3067 = vmul.f32 %v2991, %v2991
    %v3068 = vmul.f32 %v2993, %v2993
    %v3069 = vmul.f32 %v2997, %v2997
    %v3070 = vmul.f32 %v2999, %v2999
    %v3071 = vmul.f32 %v3001, %v3001
    %v3072 = vmul.f32 %v3003, %v3003
    %v3073 = vmul.f32 %v3007, %v3007
    %v3074 = vmul.f32 %v3009, %v3009
    %v3075 = vmul.f32 %v3011, %v3011
    %v3076 = vmul.f32 %v3013, %v3013
    %v3077 = vmul.f32 %v3017, %v3017
    %v3078 = vmul.f32 %v3019, %v3019
    %v3079 = vmul.f32 %v3021, %v3021
    %v3080 = vmul.f32 %v3023, %v3023
    %v3081 = vmul.f32 %v3027, %v3027
    %v3082 = vmul.f32 %v3029, %v3029
    %v3083 = vmul.f32 %v3031, %v3031
    %v3084 = vmul.f32 %v3033, %v3033
    %v3085 = vmul.f32 %v3037, %v3037
    %v3086 = vmul.f32 %v3039, %v3039
    %v3087 = vmul.f32 %v3041, %v3041
    %v3088 = vmul.f32 %v3043, %v3043
    %v3089 = vmul.f32 %v3047, %v3047
    %v3090 = vmul.f32 %v3049, %v3049
    %v3091 = vmul.f32 %v3051, %v3051
    %v3092 = vmul.f32 %v3053, %v3053
    %v3093 = vmul.f32 %v3057, %v3057
    %v3094 = vmul.f32 %v3059, %v3059
    %v3095 = vmul.f32 %v3061, %v3061
    %v3096 = vmul.f32 %v3063, %v3063
    %v3097 = vmul.f32 %v2987, %v3065
    %v3098 = vmul.f32 %v2989, %v3066
    %v3099 = vmul.f32 %v2991, %v3067
    %v3100 = vmul.f32 %v2993, %v3068
    %v3101 = vmul.f32 %v2997, %v3069
    %v3102 = vmul.f32 %v2999, %v3070
    %v3103 = vmul.f32 %v3001, %v3071
    %v3104 = vmul.f32 %v3003, %v3072
    %v3105 = vmul.f32 %v3007, %v3073
    %v3106 = vmul.f32 %v3009, %v3074
    %v3107 = vmul.f32 %v3011, %v3075
    %v3108 = vmul.f32 %v3013, %v3076
    %v3109 = vmul.f32 %v3017, %v3077
    %v3110 = vmul.f32 %v3019, %v3078
    %v3111 = vmul.f32 %v3021, %v3079
    %v3112 = vmul.f32 %v3023, %v3080
    %v3113 = vmul.f32 %v3027, %v3081
    %v3114 = vmul.f32 %v3029, %v3082
    %v3115 = vmul.f32 %v3031, %v3083
    %v3116 = vmul.f32 %v3033, %v3084
    %v3117 = vmul.f32 %v3037, %v3085
    %v3118 = vmul.f32 %v3039, %v3086
    %v3119 = vmul.f32 %v3041, %v3087
    %v3120 = vmul.f32 %v3043, %v3088
    %v3121 = vmul.f32 %v3047, %v3089
    %v3122 = vmul.f32 %v3049, %v3090
    %v3123 = vmul.f32 %v3051, %v3091
    %v3124 = vmul.f32 %v3053, %v3092
    %v3125 = vmul.f32 %v3057, %v3093
    %v3126 = vmul.f32 %v3059, %v3094
    %v3127 = vmul.f32 %v3061, %v3095
    %v3128 = vmul.f32 %v3063, %v3096
    %v3129 = vmul.f32 %v3097, 0.044715
    %v3130 = vmul.f32 %v3098, 0.044715
    %v3131 = vmul.f32 %v3099, 0.044715
    %v3132 = vmul.f32 %v3100, 0.044715
    %v3133 = vmul.f32 %v3101, 0.044715
    %v3134 = vmul.f32 %v3102, 0.044715
    %v3135 = vmul.f32 %v3103, 0.044715
    %v3136 = vmul.f32 %v3104, 0.044715
    %v3137 = vmul.f32 %v3105, 0.044715
    %v3138 = vmul.f32 %v3106, 0.044715
    %v3139 = vmul.f32 %v3107, 0.044715
    %v3140 = vmul.f32 %v3108, 0.044715
    %v3141 = vmul.f32 %v3109, 0.044715
    %v3142 = vmul.f32 %v3110, 0.044715
    %v3143 = vmul.f32 %v3111, 0.044715
    %v3144 = vmul.f32 %v3112, 0.044715
    %v3145 = vmul.f32 %v3113, 0.044715
    %v3146 = vmul.f32 %v3114, 0.044715
    %v3147 = vmul.f32 %v3115, 0.044715
    %v3148 = vmul.f32 %v3116, 0.044715
    %v3149 = vmul.f32 %v3117, 0.044715
    %v3150 = vmul.f32 %v3118, 0.044715
    %v3151 = vmul.f32 %v3119, 0.044715
    %v3152 = vmul.f32 %v3120, 0.044715
    %v3153 = vmul.f32 %v3121, 0.044715
    %v3154 = vmul.f32 %v3122, 0.044715
    %v3155 = vmul.f32 %v3123, 0.044715
    %v3156 = vmul.f32 %v3124, 0.044715
    %v3157 = vmul.f32 %v3125, 0.044715
    %v3158 = vmul.f32 %v3126, 0.044715
    %v3159 = vmul.f32 %v3127, 0.044715
    %v3160 = vmul.f32 %v3128, 0.044715
    %v3161 = vadd.f32 %v2987, %v3129
    %v3162 = vadd.f32 %v2989, %v3130
    %v3163 = vadd.f32 %v2991, %v3131
    %v3164 = vadd.f32 %v2993, %v3132
    %v3165 = vadd.f32 %v2997, %v3133
    %v3166 = vadd.f32 %v2999, %v3134
    %v3167 = vadd.f32 %v3001, %v3135
    %v3168 = vadd.f32 %v3003, %v3136
    %v3169 = vadd.f32 %v3007, %v3137
    %v3170 = vadd.f32 %v3009, %v3138
    %v3171 = vadd.f32 %v3011, %v3139
    %v3172 = vadd.f32 %v3013, %v3140
    %v3173 = vadd.f32 %v3017, %v3141
    %v3174 = vadd.f32 %v3019, %v3142
    %v3175 = vadd.f32 %v3021, %v3143
    %v3176 = vadd.f32 %v3023, %v3144
    %v3177 = vadd.f32 %v3027, %v3145
    %v3178 = vadd.f32 %v3029, %v3146
    %v3179 = vadd.f32 %v3031, %v3147
    %v3180 = vadd.f32 %v3033, %v3148
    %v3181 = vadd.f32 %v3037, %v3149
    %v3182 = vadd.f32 %v3039, %v3150
    %v3183 = vadd.f32 %v3041, %v3151
    %v3184 = vadd.f32 %v3043, %v3152
    %v3185 = vadd.f32 %v3047, %v3153
    %v3186 = vadd.f32 %v3049, %v3154
    %v3187 = vadd.f32 %v3051, %v3155
    %v3188 = vadd.f32 %v3053, %v3156
    %v3189 = vadd.f32 %v3057, %v3157
    %v3190 = vadd.f32 %v3059, %v3158
    %v3191 = vadd.f32 %v3061, %v3159
    %v3192 = vadd.f32 %v3063, %v3160
    %v3193 = vmul.f32 %v3161, 0.7978846
    %v3194 = vmul.f32 %v3162, 0.7978846
    %v3195 = vmul.f32 %v3163, 0.7978846
    %v3196 = vmul.f32 %v3164, 0.7978846
    %v3197 = vmul.f32 %v3165, 0.7978846
    %v3198 = vmul.f32 %v3166, 0.7978846
    %v3199 = vmul.f32 %v3167, 0.7978846
    %v3200 = vmul.f32 %v3168, 0.7978846
    %v3201 = vmul.f32 %v3169, 0.7978846
    %v3202 = vmul.f32 %v3170, 0.7978846
    %v3203 = vmul.f32 %v3171, 0.7978846
    %v3204 = vmul.f32 %v3172, 0.7978846
    %v3205 = vmul.f32 %v3173, 0.7978846
    %v3206 = vmul.f32 %v3174, 0.7978846
    %v3207 = vmul.f32 %v3175, 0.7978846
    %v3208 = vmul.f32 %v3176, 0.7978846
    %v3209 = vmul.f32 %v3177, 0.7978846
    %v3210 = vmul.f32 %v3178, 0.7978846
    %v3211 = vmul.f32 %v3179, 0.7978846
    %v3212 = vmul.f32 %v3180, 0.7978846
    %v3213 = vmul.f32 %v3181, 0.7978846
    %v3214 = vmul.f32 %v3182, 0.7978846
    %v3215 = vmul.f32 %v3183, 0.7978846
    %v3216 = vmul.f32 %v3184, 0.7978846
    %v3217 = vmul.f32 %v3185, 0.7978846
    %v3218 = vmul.f32 %v3186, 0.7978846
    %v3219 = vmul.f32 %v3187, 0.7978846
    %v3220 = vmul.f32 %v3188, 0.7978846
    %v3221 = vmul.f32 %v3189, 0.7978846
    %v3222 = vmul.f32 %v3190, 0.7978846
    %v3223 = vmul.f32 %v3191, 0.7978846
    %v3224 = vmul.f32 %v3192, 0.7978846
    %v3225 = vtanh.pop %v3193
    %v3226 = vtanh.pop %v3194
    %v3227 = vtanh.pop %v3195
    %v3228 = vtanh.pop %v3196
    %v3229 = vtanh.pop %v3197
    %v3230 = vtanh.pop %v3198
    %v3231 = vtanh.pop %v3199
    %v3232 = vtanh.pop %v3200
    %v3233 = vtanh.pop %v3201
    %v3234 = vtanh.pop %v3202
    %v3235 = vtanh.pop %v3203
    %v3236 = vtanh.pop %v3204
    %v3237 = vtanh.pop %v3205
    %v3238 = vtanh.pop %v3206
    %v3239 = vtanh.pop %v3207
    %v3240 = vtanh.pop %v3208
    %v3241 = vtanh.pop %v3209
    %v3242 = vtanh.pop %v3210
    %v3243 = vtanh.pop %v3211
    %v3244 = vtanh.pop %v3212
    %v3245 = vtanh.pop %v3213
    %v3246 = vtanh.pop %v3214
    %v3247 = vtanh.pop %v3215
    %v3248 = vtanh.pop %v3216
    %v3249 = vtanh.pop %v3217
    %v3250 = vtanh.pop %v3218
    %v3251 = vtanh.pop %v3219
    %v3252 = vtanh.pop %v3220
    %v3253 = vtanh.pop %v3221
    %v3254 = vtanh.pop %v3222
    %v3255 = vtanh.pop %v3223
    %v3256 = vtanh.pop %v3224
    %v3257 = vadd.f32 %v3225, 1.0
    %v3258 = vadd.f32 %v3226, 1.0
    %v3259 = vadd.f32 %v3227, 1.0
    %v3260 = vadd.f32 %v3228, 1.0
    %v3261 = vadd.f32 %v3229, 1.0
    %v3262 = vadd.f32 %v3230, 1.0
    %v3263 = vadd.f32 %v3231, 1.0
    %v3264 = vadd.f32 %v3232, 1.0
    %v3265 = vadd.f32 %v3233, 1.0
    %v3266 = vadd.f32 %v3234, 1.0
    %v3267 = vadd.f32 %v3235, 1.0
    %v3268 = vadd.f32 %v3236, 1.0
    %v3269 = vadd.f32 %v3237, 1.0
    %v3270 = vadd.f32 %v3238, 1.0
    %v3271 = vadd.f32 %v3239, 1.0
    %v3272 = vadd.f32 %v3240, 1.0
    %v3273 = vadd.f32 %v3241, 1.0
    %v3274 = vadd.f32 %v3242, 1.0
    %v3275 = vadd.f32 %v3243, 1.0
    %v3276 = vadd.f32 %v3244, 1.0
    %v3277 = vadd.f32 %v3245, 1.0
    %v3278 = vadd.f32 %v3246, 1.0
    %v3279 = vadd.f32 %v3247, 1.0
    %v3280 = vadd.f32 %v3248, 1.0
    %v3281 = vadd.f32 %v3249, 1.0
    %v3282 = vadd.f32 %v3250, 1.0
    %v3283 = vadd.f32 %v3251, 1.0
    %v3284 = vadd.f32 %v3252, 1.0
    %v3285 = vadd.f32 %v3253, 1.0
    %v3286 = vadd.f32 %v3254, 1.0
    %v3287 = vadd.f32 %v3255, 1.0
    %v3288 = vadd.f32 %v3256, 1.0
    %v3289 = vmul.f32 %v3257, 0.5
    %v3290 = vmul.f32 %v3258, 0.5
    %v3291 = vmul.f32 %v3259, 0.5
    %v3292 = vmul.f32 %v3260, 0.5
    %v3293 = vmul.f32 %v3261, 0.5
    %v3294 = vmul.f32 %v3262, 0.5
    %v3295 = vmul.f32 %v3263, 0.5
    %v3296 = vmul.f32 %v3264, 0.5
    %v3297 = vmul.f32 %v3265, 0.5
    %v3298 = vmul.f32 %v3266, 0.5
    %v3299 = vmul.f32 %v3267, 0.5
    %v3300 = vmul.f32 %v3268, 0.5
    %v3301 = vmul.f32 %v3269, 0.5
    %v3302 = vmul.f32 %v3270, 0.5
    %v3303 = vmul.f32 %v3271, 0.5
    %v3304 = vmul.f32 %v3272, 0.5
    %v3305 = vmul.f32 %v3273, 0.5
    %v3306 = vmul.f32 %v3274, 0.5
    %v3307 = vmul.f32 %v3275, 0.5
    %v3308 = vmul.f32 %v3276, 0.5
    %v3309 = vmul.f32 %v3277, 0.5
    %v3310 = vmul.f32 %v3278, 0.5
    %v3311 = vmul.f32 %v3279, 0.5
    %v3312 = vmul.f32 %v3280, 0.5
    %v3313 = vmul.f32 %v3281, 0.5
    %v3314 = vmul.f32 %v3282, 0.5
    %v3315 = vmul.f32 %v3283, 0.5
    %v3316 = vmul.f32 %v3284, 0.5
    %v3317 = vmul.f32 %v3285, 0.5
    %v3318 = vmul.f32 %v3286, 0.5
    %v3319 = vmul.f32 %v3287, 0.5
    %v3320 = vmul.f32 %v3288, 0.5
    %v3321 = vmul.f32 %v2987, %v3289
    %v3322 = vmul.f32 %v2989, %v3290
    %v3323 = vmul.f32 %v2991, %v3291
    %v3324 = vmul.f32 %v2993, %v3292
    %v3325 = vmul.f32 %v2997, %v3293
    %v3326 = vmul.f32 %v2999, %v3294
    %v3327 = vmul.f32 %v3001, %v3295
    %v3328 = vmul.f32 %v3003, %v3296
    %v3329 = vmul.f32 %v3007, %v3297
    %v3330 = vmul.f32 %v3009, %v3298
    %v3331 = vmul.f32 %v3011, %v3299
    %v3332 = vmul.f32 %v3013, %v3300
    %v3333 = vmul.f32 %v3017, %v3301
    %v3334 = vmul.f32 %v3019, %v3302
    %v3335 = vmul.f32 %v3021, %v3303
    %v3336 = vmul.f32 %v3023, %v3304
    %v3337 = vmul.f32 %v3027, %v3305
    %v3338 = vmul.f32 %v3029, %v3306
    %v3339 = vmul.f32 %v3031, %v3307
    %v3340 = vmul.f32 %v3033, %v3308
    %v3341 = vmul.f32 %v3037, %v3309
    %v3342 = vmul.f32 %v3039, %v3310
    %v3343 = vmul.f32 %v3041, %v3311
    %v3344 = vmul.f32 %v3043, %v3312
    %v3345 = vmul.f32 %v3047, %v3313
    %v3346 = vmul.f32 %v3049, %v3314
    %v3347 = vmul.f32 %v3051, %v3315
    %v3348 = vmul.f32 %v3053, %v3316
    %v3349 = vmul.f32 %v3057, %v3317
    %v3350 = vmul.f32 %v3059, %v3318
    %v3351 = vmul.f32 %v3061, %v3319
    %v3352 = vmul.f32 %v3063, %v3320
    %v3353 = vpack.c.bf16 %v3323, %v3321
    %v3354 = vpack.c.bf16 %v3324, %v3322
    %v3355 = vpack.c.bf16 %v3327, %v3325
    %v3356 = vpack.c.bf16 %v3328, %v3326
    %v3357 = vpack.c.bf16 %v3331, %v3329
    %v3358 = vpack.c.bf16 %v3332, %v3330
    %v3359 = vpack.c.bf16 %v3335, %v3333
    %v3360 = vpack.c.bf16 %v3336, %v3334
    %v3361 = vpack.c.bf16 %v3339, %v3337
    %v3362 = vpack.c.bf16 %v3340, %v3338
    %v3363 = vpack.c.bf16 %v3343, %v3341
    %v3364 = vpack.c.bf16 %v3344, %v3342
    %v3365 = vpack.c.bf16 %v3347, %v3345
    %v3366 = vpack.c.bf16 %v3348, %v3346
    %v3367 = vpack.c.bf16 %v3351, %v3349
    %v3368 = vpack.c.bf16 %v3352, %v3350
    %v3369 = vld [vmem:[#allocation16] sm:$0xf]
    %v3370 = vld [vmem:[#allocation16 + $0x4] sm:$0xf]
    %v3371 = vld [vmem:[#allocation16 + $0x8] sm:$0xf]
    %v3372 = vld [vmem:[#allocation16 + $0xc] sm:$0xf]
    %v3373 = vld [vmem:[#allocation16 + $0x10] sm:$0xf]
    %v3374 = vld [vmem:[#allocation16 + $0x14] sm:$0xf]
    %v3375 = vld [vmem:[#allocation16 + $0x18] sm:$0xf]
    %v3376 = vld [vmem:[#allocation16 + $0x1c] sm:$0xf]
    %v3377 = vld [vmem:[#allocation16 + $0x20] sm:$0xf]
    %v3378 = vld [vmem:[#allocation16 + $0x24] sm:$0xf]
    %v3379 = vld [vmem:[#allocation16 + $0x28] sm:$0xf]
    %v3380 = vld [vmem:[#allocation16 + $0x2c] sm:$0xf]
    %v3381 = vld [vmem:[#allocation16 + $0x30] sm:$0xf]
    %v3382 = vld [vmem:[#allocation16 + $0x34] sm:$0xf]
    %v3383 = vld [vmem:[#allocation16 + $0x38] sm:$0xf]
    %v3384 = vld [vmem:[#allocation16 + $0x3c] sm:$0xf]
    %v3385 = vld [vmem:[#allocation16 + $0x40] sm:$0xf]
    %v3386 = vld [vmem:[#allocation16 + $0x44] sm:$0xf]
    %v3387 = vld [vmem:[#allocation16 + $0x48] sm:$0xf]
    %v3388 = vld [vmem:[#allocation16 + $0x4c] sm:$0xf]
    %v3389 = vld [vmem:[#allocation16 + $0x50] sm:$0xf]
    %v3390 = vld [vmem:[#allocation16 + $0x54] sm:$0xf]
    %v3391 = vld [vmem:[#allocation16 + $0x58] sm:$0xf]
    %v3392 = vld [vmem:[#allocation16 + $0x5c] sm:$0xf]
    %v3393 = vld [vmem:[#allocation16 + $0x60] sm:$0xf]
    %v3394 = vld [vmem:[#allocation16 + $0x64] sm:$0xf]
    %v3395 = vld [vmem:[#allocation16 + $0x68] sm:$0xf]
    %v3396 = vld [vmem:[#allocation16 + $0x6c] sm:$0xf]
    %v3397 = vld [vmem:[#allocation16 + $0x70] sm:$0xf]
    %v3398 = vld [vmem:[#allocation16 + $0x74] sm:$0xf]
    %v3399 = vld [vmem:[#allocation16 + $0x78] sm:$0xf]
    %v3400 = vld [vmem:[#allocation16 + $0x7c] sm:$0xf]
    %v3433 = vunpack.c.l.b16 %v3369
    %v3434 = vunpack.c.l.b16 %v3370
    %v3435 = vunpack.c.l.b16 %v3371
    %v3436 = vunpack.c.l.b16 %v3372
    %v3437 = vunpack.c.l.b16 %v3373
    %v3438 = vunpack.c.l.b16 %v3374
    %v3439 = vunpack.c.l.b16 %v3375
    %v3440 = vunpack.c.l.b16 %v3376
    %v3441 = vunpack.c.l.b16 %v3377
    %v3442 = vunpack.c.l.b16 %v3378
    %v3443 = vunpack.c.l.b16 %v3379
    %v3444 = vunpack.c.l.b16 %v3380
    %v3445 = vunpack.c.l.b16 %v3381
    %v3446 = vunpack.c.l.b16 %v3382
    %v3447 = vunpack.c.l.b16 %v3383
    %v3448 = vunpack.c.l.b16 %v3384
    %v3449 = vunpack.c.l.b16 %v3385
    %v3450 = vunpack.c.l.b16 %v3386
    %v3451 = vunpack.c.l.b16 %v3387
    %v3452 = vunpack.c.l.b16 %v3388
    %v3453 = vunpack.c.l.b16 %v3389
    %v3454 = vunpack.c.l.b16 %v3390
    %v3455 = vunpack.c.l.b16 %v3391
    %v3456 = vunpack.c.l.b16 %v3392
    %v3457 = vunpack.c.l.b16 %v3393
    %v3458 = vunpack.c.l.b16 %v3394
    %v3459 = vunpack.c.l.b16 %v3395
    %v3460 = vunpack.c.l.b16 %v3396
    %v3461 = vunpack.c.l.b16 %v3397
    %v3462 = vunpack.c.l.b16 %v3398
    %v3463 = vunpack.c.l.b16 %v3399
    %v3464 = vunpack.c.l.b16 %v3400
    %v3465 = vpack.c.b16 %v3434, %v3433
    %v3466 = vpack.c.b16 %v3436, %v3435
    %v3467 = vpack.c.b16 %v3438, %v3437
    %v3468 = vpack.c.b16 %v3440, %v3439
    %v3469 = vpack.c.b16 %v3442, %v3441
    %v3470 = vpack.c.b16 %v3444, %v3443
    %v3471 = vpack.c.b16 %v3446, %v3445
    %v3472 = vpack.c.b16 %v3448, %v3447
    %v3473 = vpack.c.b16 %v3450, %v3449
    %v3474 = vpack.c.b16 %v3452, %v3451
    %v3475 = vpack.c.b16 %v3454, %v3453
    %v3476 = vpack.c.b16 %v3456, %v3455
    %v3477 = vpack.c.b16 %v3458, %v3457
    %v3478 = vpack.c.b16 %v3460, %v3459
    %v3479 = vpack.c.b16 %v3462, %v3461
    %v3480 = vpack.c.b16 %v3464, %v3463
    %3497 = vmatprep.subr.bf16.mxu0 0
    %3498 = vmatpush1.bf16.msra.mxu0 %v3472
    %3499 = vmatprep.subr.bf16.mxu0 0
    %3500 = vmatpush1.bf16.msra.mxu0 %v3471
    %3501 = vmatprep.subr.bf16.mxu0 0
    %3502 = vmatpush1.bf16.msra.mxu0 %v3470
    %3503 = vmatprep.subr.bf16.mxu0 0
    %3504 = vmatpush1.bf16.msra.mxu0 %v3469
    %3505 = vmatprep.subr.bf16.mxu0 0
    %3506 = vmatpush1.bf16.msra.mxu0 %v3468
    %3507 = vmatprep.subr.bf16.mxu0 0
    %3508 = vmatpush1.bf16.msra.mxu0 %v3467
    %3509 = vmatprep.subr.bf16.mxu0 0
    %3510 = vmatpush1.bf16.msra.mxu0 %v3466
    %3511 = vmatprep.subr.bf16.mxu0 0
    %3512 = vmatpush1.bf16.msra.mxu0 %v3465
    %3513 = vmatprep.subr.bf16.mxu0 0
    %3514 = vmatpush2.bf16.msra.mxu0 %v3480
    %3515 = vmatprep.subr.bf16.mxu0 0
    %3516 = vmatpush2.bf16.msra.mxu0 %v3479
    %3517 = vmatprep.subr.bf16.mxu0 0
    %3518 = vmatpush2.bf16.msra.mxu0 %v3478
    %3519 = vmatprep.subr.bf16.mxu0 0
    %3520 = vmatpush2.bf16.msra.mxu0 %v3477
    %3521 = vmatprep.subr.bf16.mxu0 0
    %3522 = vmatpush2.bf16.msra.mxu0 %v3476
    %3523 = vmatprep.subr.bf16.mxu0 0
    %3524 = vmatpush2.bf16.msra.mxu0 %v3475
    %3525 = vmatprep.subr.bf16.mxu0 0
    %3526 = vmatpush2.bf16.msra.mxu0 %v3474
    %3527 = vmatprep.subr.bf16.mxu0 0
    %3528 = vmatpush2.bf16.msra.mxu0 %v3473
    %3529 = vmatprep.mubr.bf16.mxu0 %v3354
    %3530 = vmatmul.mubr.bf16.gmra.mxu0 %v3353
    %v3531 = vpop.f32.mrf.mxu0
    %v3532 = vadd.f32 0.0, %v3531
    %v3533 = vpop.f32.mrf.mxu0
    %v3534 = vpop.f32.mrf.mxu0
    %v3535 = vadd.f32 0.0, %v3534
    %v3536 = vpop.f32.mrf.mxu0
    %3537 = vmatprep.mubr.bf16.mxu0 %v3356
    %3538 = vmatmul.mubr.bf16.gmra.mxu0 %v3355
    %v3539 = vpop.f32.mrf.mxu0
    %v3540 = vadd.f32 0.0, %v3539
    %v3541 = vpop.f32.mrf.mxu0
    %v3542 = vpop.f32.mrf.mxu0
    %v3543 = vadd.f32 0.0, %v3542
    %v3544 = vpop.f32.mrf.mxu0
    %3545 = vmatprep.mubr.bf16.mxu0 %v3358
    %3546 = vmatmul.mubr.bf16.gmra.mxu0 %v3357
    %v3547 = vpop.f32.mrf.mxu0
    %v3548 = vadd.f32 0.0, %v3547
    %v3549 = vpop.f32.mrf.mxu0
    %v3550 = vpop.f32.mrf.mxu0
    %v3551 = vadd.f32 0.0, %v3550
    %v3552 = vpop.f32.mrf.mxu0
    %3553 = vmatprep.mubr.bf16.mxu0 %v3360
    %3554 = vmatmul.mubr.bf16.gmra.mxu0 %v3359
    %v3555 = vpop.f32.mrf.mxu0
    %v3556 = vadd.f32 0.0, %v3555
    %v3557 = vpop.f32.mrf.mxu0
    %v3558 = vpop.f32.mrf.mxu0
    %v3559 = vadd.f32 0.0, %v3558
    %v3560 = vpop.f32.mrf.mxu0
    %3561 = vmatprep.mubr.bf16.mxu0 %v3362
    %3562 = vmatmul.mubr.bf16.gmra.mxu0 %v3361
    %v3563 = vpop.f32.mrf.mxu0
    %v3564 = vadd.f32 0.0, %v3563
    %v3565 = vpop.f32.mrf.mxu0
    %v3566 = vpop.f32.mrf.mxu0
    %v3567 = vadd.f32 0.0, %v3566
    %v3568 = vpop.f32.mrf.mxu0
    %3569 = vmatprep.mubr.bf16.mxu0 %v3364
    %3570 = vmatmul.mubr.bf16.gmra.mxu0 %v3363
    %v3571 = vpop.f32.mrf.mxu0
    %v3572 = vadd.f32 0.0, %v3571
    %v3573 = vpop.f32.mrf.mxu0
    %v3574 = vpop.f32.mrf.mxu0
    %v3575 = vadd.f32 0.0, %v3574
    %v3576 = vpop.f32.mrf.mxu0
    %3577 = vmatprep.mubr.bf16.mxu0 %v3366
    %3578 = vmatmul.mubr.bf16.gmra.mxu0 %v3365
    %v3579 = vpop.f32.mrf.mxu0
    %v3580 = vadd.f32 0.0, %v3579
    %v3581 = vpop.f32.mrf.mxu0
    %v3582 = vpop.f32.mrf.mxu0
    %v3583 = vadd.f32 0.0, %v3582
    %v3584 = vpop.f32.mrf.mxu0
    %3585 = vmatprep.mubr.bf16.mxu0 %v3368
    %3586 = vmatmul.mubr.bf16.gmra.mxu0 %v3367
    %v3587 = vpop.f32.mrf.mxu0
    %v3588 = vadd.f32 0.0, %v3587
    %v3589 = vpop.f32.mrf.mxu0
    %v3590 = vpop.f32.mrf.mxu0
    %v3591 = vadd.f32 0.0, %v3590
    %v3592 = vpop.f32.mrf.mxu0
    %3593 = vdwg.mxu0
    %v3594 = vadd.f32 %v2656, %v3532
    %v3595 = vadd.f32 %v2657, %v3535
    %v3596 = vadd.f32 %v2658, %v3540
    %v3597 = vadd.f32 %v2659, %v3543
    %v3598 = vadd.f32 %v2660, %v3548
    %v3599 = vadd.f32 %v2661, %v3551
    %v3600 = vadd.f32 %v2662, %v3556
    %v3601 = vadd.f32 %v2663, %v3559
    %v3602 = vadd.f32 %v2664, %v3564
    %v3603 = vadd.f32 %v2665, %v3567
    %v3604 = vadd.f32 %v2666, %v3572
    %v3605 = vadd.f32 %v2667, %v3575
    %v3606 = vadd.f32 %v2668, %v3580
    %v3607 = vadd.f32 %v2669, %v3583
    %v3608 = vadd.f32 %v2670, %v3588
    %v3609 = vadd.f32 %v2671, %v3591
    %3610 = vst [vmem:[#allocation17] sm:$0xff] %v3594
    %3611 = vst [vmem:[#allocation17 + $0x8] sm:$0xff] %v3595
    %3612 = vst [vmem:[#allocation17 + $0x10] sm:$0xff] %v3596
    %3613 = vst [vmem:[#allocation17 + $0x18] sm:$0xff] %v3597
    %3614 = vst [vmem:[#allocation17 + $0x20] sm:$0xff] %v3598
    %3615 = vst [vmem:[#allocation17 + $0x28] sm:$0xff] %v3599
    %3616 = vst [vmem:[#allocation17 + $0x30] sm:$0xff] %v3600
    %3617 = vst [vmem:[#allocation17 + $0x38] sm:$0xff] %v3601
    %3618 = vst [vmem:[#allocation17 + $0x40] sm:$0xff] %v3602
    %3619 = vst [vmem:[#allocation17 + $0x48] sm:$0xff] %v3603
    %3620 = vst [vmem:[#allocation17 + $0x50] sm:$0xff] %v3604
    %3621 = vst [vmem:[#allocation17 + $0x58] sm:$0xff] %v3605
    %3622 = vst [vmem:[#allocation17 + $0x60] sm:$0xff] %v3606
    %3623 = vst [vmem:[#allocation17 + $0x68] sm:$0xff] %v3607
    %3624 = vst [vmem:[#allocation17 + $0x70] sm:$0xff] %v3608
    %3625 = vst [vmem:[#allocation17 + $0x78] sm:$0xff] %v3609
    // Predicated region
    $region78: #{tpu_custom_call.1} parent=1 // pred_check
      %p3626 = pneg %p159
    $region79: #{tpu_custom_call.1} parent=1 // pred_check_branch
      %3628 = sbr.rel (%p3626) target = $region81
    $region80: #{tpu_custom_call.1} parent=1 // pred_region
      %v3629 = vld [vmem:[#allocation2] sm:$0xff]
      %v3630 = vld [vmem:[#allocation2 + $0x8] sm:$0xff]
      %v3631 = vld [vmem:[#allocation2 + $0x10] sm:$0xff]
      %v3632 = vld [vmem:[#allocation2 + $0x18] sm:$0xff]
      %v3633 = vld [vmem:[#allocation2 + $0x20] sm:$0xff]
      %v3634 = vld [vmem:[#allocation2 + $0x28] sm:$0xff]
      %v3635 = vld [vmem:[#allocation2 + $0x30] sm:$0xff]
      %v3636 = vld [vmem:[#allocation2 + $0x38] sm:$0xff]
      %v3637 = vld [vmem:[#allocation2 + $0x40] sm:$0xff]
      %v3638 = vld [vmem:[#allocation2 + $0x48] sm:$0xff]
      %v3639 = vld [vmem:[#allocation2 + $0x50] sm:$0xff]
      %v3640 = vld [vmem:[#allocation2 + $0x58] sm:$0xff]
      %v3641 = vld [vmem:[#allocation2 + $0x60] sm:$0xff]
      %v3642 = vld [vmem:[#allocation2 + $0x68] sm:$0xff]
      %v3643 = vld [vmem:[#allocation2 + $0x70] sm:$0xff]
      %v3644 = vld [vmem:[#allocation2 + $0x78] sm:$0xff]
      %v3645 = vsub.f32 %v3594, %v3629
      %v3646 = vsub.f32 %v3595, %v3630
      %v3647 = vsub.f32 %v3596, %v3631
      %v3648 = vsub.f32 %v3597, %v3632
      %v3649 = vsub.f32 %v3598, %v3633
      %v3650 = vsub.f32 %v3599, %v3634
      %v3651 = vsub.f32 %v3600, %v3635
      %v3652 = vsub.f32 %v3601, %v3636
      %v3653 = vsub.f32 %v3602, %v3637
      %v3654 = vsub.f32 %v3603, %v3638
      %v3655 = vsub.f32 %v3604, %v3639
      %v3656 = vsub.f32 %v3605, %v3640
      %v3657 = vsub.f32 %v3606, %v3641
      %v3658 = vsub.f32 %v3607, %v3642
      %v3659 = vsub.f32 %v3608, %v3643
      %v3660 = vsub.f32 %v3609, %v3644
      %3661 = vst [vmem:[#allocation18] sm:$0xff] %v3645
      %3662 = vst [vmem:[#allocation18 + $0x8] sm:$0xff] %v3646
      %3663 = vst [vmem:[#allocation18 + $0x10] sm:$0xff] %v3647
      %3664 = vst [vmem:[#allocation18 + $0x18] sm:$0xff] %v3648
      %3665 = vst [vmem:[#allocation18 + $0x20] sm:$0xff] %v3649
      %3666 = vst [vmem:[#allocation18 + $0x28] sm:$0xff] %v3650
      %3667 = vst [vmem:[#allocation18 + $0x30] sm:$0xff] %v3651
      %3668 = vst [vmem:[#allocation18 + $0x38] sm:$0xff] %v3652
      %3669 = vst [vmem:[#allocation18 + $0x40] sm:$0xff] %v3653
      %3670 = vst [vmem:[#allocation18 + $0x48] sm:$0xff] %v3654
      %3671 = vst [vmem:[#allocation18 + $0x50] sm:$0xff] %v3655
      %3672 = vst [vmem:[#allocation18 + $0x58] sm:$0xff] %v3656
      %3673 = vst [vmem:[#allocation18 + $0x60] sm:$0xff] %v3657
      %3674 = vst [vmem:[#allocation18 + $0x68] sm:$0xff] %v3658
      %3675 = vst [vmem:[#allocation18 + $0x70] sm:$0xff] %v3659
      %3676 = vst [vmem:[#allocation18 + $0x78] sm:$0xff] %v3660
    $region81: #{tpu_custom_call.1} parent=1 // pred_fallthru
      _
    // Predicated region
    $region82: #{tpu_custom_call.1} parent=1 // pred_check
      _
    $region83: #{tpu_custom_call.1} parent=1 // pred_check_branch
      %3678 = sbr.rel (0) target = $region85
    $region84: #{tpu_custom_call.1} parent=1 // pred_region
      %s3680 = ssub.s32 2048, 2048
      %3681 = vsyncadd [#allocation4], %s3680
      %s3682 = sshll.u32 [#allocation17], 4
      %s3683 = int_to_ptr.vmem [resolvable:$true] %s3682
      %3688 = dma.vmem_to_hbm [thread:$0]  %s3683, 2048, %s9, [#allocation4], 128, 128, 8
    $region85: #{tpu_custom_call.1} parent=1 // pred_fallthru
      _
    // Predicated region
    $region86: #{tpu_custom_call.1} parent=1 // pred_check
      _
    $region87: #{tpu_custom_call.1} parent=1 // pred_check_branch
      %3690 = sbr.rel (0) target = $region89
    $region88: #{tpu_custom_call.1} parent=1 // pred_region
      %s3692 = ssub.s32 2048, 2048
      %3693 = vsyncadd [#allocation19], %s3692
      %s3694 = sshll.u32 [#allocation18], 4
      %s3695 = int_to_ptr.vmem [resolvable:$true] %s3694
      %3700 = dma.vmem_to_hbm [thread:$0]  %s3695, 2048, %s10, [#allocation19], 128, 128, 8
    $region89: #{tpu_custom_call.1} parent=1 // pred_fallthru
      _
    // Predicated region
    $region90: #{tpu_custom_call.1} parent=1 // pred_check
      _
    $region91: #{tpu_custom_call.1} parent=1 // pred_check_branch
      %3702 = sbr.rel (0) target = $region93
    $region92: #{tpu_custom_call.1} parent=1 // pred_region
      %3703 = dma.done [#allocation4], 2048
    $region93: #{tpu_custom_call.1} parent=1 // pred_fallthru
      _
    // Predicated region
    $region94: #{tpu_custom_call.1} parent=1 // pred_check
      _
    $region95: #{tpu_custom_call.1} parent=1 // pred_check_branch
      %3705 = sbr.rel (0) target = $region97
    $region96: #{tpu_custom_call.1} parent=1 // pred_region
      %3706 = dma.done [#allocation19], 2048
    $region97: #{tpu_custom_call.1} parent=1 // pred_fallthru
      _
    %3707 = vsyncpa [#allocation3], 1
    %3708 = vsyncpa [#allocation6], 1
    %3709 = vsyncpa [#allocation9], 1
    %3710 = vsyncpa [#allocation12], 1
    %3711 = vsyncpa [#allocation15], 1
    %3712 = vsyncpa [#allocation4], 1
    %3713 = vsyncpa [#allocation19], 1

</llo_original>
